<compile_context>
chip_gen: v7x
topology: tpu7x:2x2x1
jax: 0.10.0
libtpu: 0.0.40
codegen_flags: <defaults>
</compile_context>

<pallas_src>
import jax
import jax.numpy as jnp
from jax.experimental import pallas as pl
from jax.experimental.pallas import tpu as pltpu

Z_DIM = 16
IN_DIM = 28 * 28            # 784
H1, H2 = 300, 100           # logical hidden widths (PyTorch module)
H1P, H2P = 384, 128         # lane-padded hidden widths (multiples of 128)
HEAD = 2 * Z_DIM            # fused mu/logvar head width
SMALL_OUT = 128             # lane-dense width of the fused (ave|log_dev|z) output
MAX_BATCH_TILE = 1024       # ~30 MiB total VMEM at TB=1024 -> safe on v5e/v6e/v7x


def _round_up(x, m):
    return (x + m - 1) // m * m


def _pad_to(a, shape):
    pads = [(0, t - s) for s, t in zip(a.shape, shape)]
    return jnp.pad(a, pads)


# --------------------------------------------------------------------------
# Kernel
# --------------------------------------------------------------------------
def _vae_kernel(
    x_ref, eps_ref,
    ew1_ref, eb1_ref, ew2_ref, eb2_ref,
    whead_ref, bhead_ref,
    dw1_ref, db1_ref, dw2_ref, db2_ref, dw3_ref, db3_ref,
    xout_ref, small_ref,
):
    z_dim = eps_ref.shape[-1]
    bf16 = jnp.bfloat16
    f32 = jnp.float32

    # ---- Encoder ----
    x = x_ref[...].astype(bf16)
    h = jnp.dot(x, ew1_ref[...], preferred_element_type=f32) + eb1_ref[...]
    h = jnp.maximum(h, 0.0)
    h = jnp.dot(h.astype(bf16), ew2_ref[...], preferred_element_type=f32) + eb2_ref[...]
    h = jnp.maximum(h, 0.0)

    # Fused mu / logvar head: one [H2P, 2*z_dim] matmul, split inside the kernel.
    head = jnp.dot(h.astype(bf16), whead_ref[...],
                   preferred_element_type=f32) + bhead_ref[...]
    ave = head[:, :z_dim]
    log_dev = head[:, z_dim:2 * z_dim]

    # Reparameterization: z = ave + exp(log_dev / 2) * eps
    z = ave + jnp.exp(log_dev * 0.5) * eps_ref[...]

    # ---- Decoder ----
    d = jnp.dot(z.astype(bf16), dw1_ref[...], preferred_element_type=f32) + db1_ref[...]
    d = jnp.maximum(d, 0.0)
    d = jnp.dot(d.astype(bf16), dw2_ref[...], preferred_element_type=f32) + db2_ref[...]
    d = jnp.maximum(d, 0.0)
    logits = jnp.dot(d.astype(bf16), dw3_ref[...],
                     preferred_element_type=f32) + db3_ref[...]
    # sigmoid = 1 / (1 + exp(-x)); exp on EUP, reciprocal on EUP (approx) ->
    # stays off the VPU divide path.
    x_rec = pl.reciprocal(1.0 + jnp.exp(-logits), approx=True)

    xout_ref[...] = x_rec
    # Single lane-dense small output block: [ave | log_dev | z | zero-pad].
    pad = jnp.zeros((z.shape[0], small_ref.shape[-1] - 3 * z_dim), f32)
    small_ref[...] = jnp.concatenate([ave, log_dev, z, pad], axis=-1)


# --------------------------------------------------------------------------
# Parameter init (PyTorch nn.Linear default init, transposed layout)
# --------------------------------------------------------------------------
def _linear_params(key, in_dim, out_dim):
    kw, kb = jax.random.split(key)
    bound = 1.0 / jnp.sqrt(jnp.float32(in_dim))
    w = jax.random.uniform(kw, (in_dim, out_dim), jnp.float32, -bound, bound)
    b = jax.random.uniform(kb, (1, out_dim), jnp.float32, -bound, bound)
    return w, b


def init_vae_params(key, z_dim=Z_DIM):
    keys = jax.random.split(key, 7)
    ew1, eb1 = _linear_params(keys[0], IN_DIM, H1)
    ew2, eb2 = _linear_params(keys[1], H1, H2)
    wav, bav = _linear_params(keys[2], H2, z_dim)
    wdv, bdv = _linear_params(keys[3], H2, z_dim)
    dw1, db1 = _linear_params(keys[4], z_dim, H2)
    dw2, db2 = _linear_params(keys[5], H2, H1)
    dw3, db3 = _linear_params(keys[6], H1, IN_DIM)
    return (ew1, eb1, ew2, eb2, wav, bav, wdv, bdv,
            dw1, db1, dw2, db2, dw3, db3)


# --------------------------------------------------------------------------
# Tile / VMEM sizing
# --------------------------------------------------------------------------
def _choose_batch_tile(B):
    """Pick a batch tile minimizing padding waste, keeping >=2 grid steps
    when possible so both v7x TensorCores are used."""
    if B <= 128:
        return _round_up(max(B, 1), 16)   # bf16-friendly sublane fill
    best_tb, best_waste = None, None
    for tb in (128, 256, 512, MAX_BATCH_TILE):
        waste = _round_up(B, tb) - B
        if (best_waste is None or waste < best_waste
                or (waste == best_waste and tb > best_tb)):
            best_tb, best_waste = tb, waste
    while best_tb > 128 and _round_up(B, best_tb) // best_tb < 2:
        best_tb //= 2
    return best_tb


_W_ELEMS_PADDED = (IN_DIM * H1P + H1P * H2P + H2P * HEAD +
                   Z_DIM * H2P + H2P * H1P + H1P * IN_DIM)


def _vmem_limit_bytes(tb):
    io = 2 * 4 * tb * (IN_DIM + Z_DIM + IN_DIM + SMALL_OUT)          # dbl-buffered f32 I/O
    acts = 4 * tb * (H1P + H2P + HEAD + 3 * Z_DIM + H2P + H1P + IN_DIM)  # f32 intermediates
    wts = 2 * 2 * _W_ELEMS_PADDED                                     # bf16, dbl-buffered
    total = int(1.25 * (io + acts + wts))
    return min(max(total, 32 << 20), 64 << 20)


# --------------------------------------------------------------------------
# Wrapper
# --------------------------------------------------------------------------
@jax.jit
def vae_forward(x, eps, params):
    """x: [B, 784] f32, eps: [B, z_dim] f32 (pre-sampled standard normal)."""
    B = x.shape[0]
    z_dim = eps.shape[1]

    (ew1, eb1, ew2, eb2, wav, bav, wdv, bdv,
     dw1, db1, dw2, db2, dw3, db3) = params

    bf16 = jnp.bfloat16
    # Zero-pad hidden dims to lane multiples; padded lanes stay exactly 0
    # through bias-add + ReLU and meet zero weight rows downstream, so the
    # math is unchanged.  Weight matrices in bf16, biases in f32.
    ew1p = _pad_to(ew1, (IN_DIM, H1P)).astype(bf16)
    eb1p = _pad_to(eb1, (1, H1P))
    ew2p = _pad_to(ew2, (H1P, H2P)).astype(bf16)
    eb2p = _pad_to(eb2, (1, H2P))
    wheadp = _pad_to(jnp.concatenate([wav, wdv], axis=1), (H2P, HEAD)).astype(bf16)
    bheadp = jnp.concatenate([bav, bdv], axis=1)
    dw1p = _pad_to(dw1, (z_dim, H2P)).astype(bf16)
    db1p = _pad_to(db1, (1, H2P))
    dw2p = _pad_to(dw2, (H2P, H1P)).astype(bf16)
    db2p = _pad_to(db2, (1, H1P))
    dw3p = _pad_to(dw3, (H1P, IN_DIM)).astype(bf16)
    db3p = db3

    # --- batch tiling ---
    tb = _choose_batch_tile(B)
    B_pad = _round_up(B, tb)
    if B_pad != B:
        x = jnp.pad(x, ((0, B_pad - B), (0, 0)))
        eps = jnp.pad(eps, ((0, B_pad - B), (0, 0)))
    grid = (B_pad // tb,)

    def data_spec(dim):
        return pl.BlockSpec((tb, dim), lambda i: (i, 0))

    def resident_spec(arr):
        # Full-array block, constant block index -> DMA'd once, VMEM-resident.
        return pl.BlockSpec(arr.shape, lambda i: (0, 0))

    weights = (ew1p, eb1p, ew2p, eb2p, wheadp, bheadp,
               dw1p, db1p, dw2p, db2p, dw3p, db3p)

    in_specs = [data_spec(IN_DIM), data_spec(z_dim)] + [
        resident_spec(a) for a in weights
    ]
    out_specs = [data_spec(IN_DIM), data_spec(SMALL_OUT)]
    out_shapes = (
        jax.ShapeDtypeStruct((B_pad, IN_DIM), jnp.float32),
        jax.ShapeDtypeStruct((B_pad, SMALL_OUT), jnp.float32),
    )

    # Advisory cost estimate for XLA's scheduler.
    cost = pl.CostEstimate(
        flops=2 * B_pad * _W_ELEMS_PADDED,
        transcendentals=B_pad * (z_dim + IN_DIM),
        bytes_accessed=2 * _W_ELEMS_PADDED
        + 4 * B_pad * (IN_DIM + z_dim + IN_DIM + SMALL_OUT),
    )

    x_rec, small = pl.pallas_call(
        _vae_kernel,
        out_shape=out_shapes,
        grid=grid,
        in_specs=in_specs,
        out_specs=out_specs,
        compiler_params=pltpu.CompilerParams(
            dimension_semantics=("parallel",),
            vmem_limit_bytes=_vmem_limit_bytes(tb),
        ),
        cost_estimate=cost,
    )(x, eps, *weights)

    ave = small[:B, :z_dim]
    log_dev = small[:B, z_dim:2 * z_dim]
    z = small[:B, 2 * z_dim:3 * z_dim]
    return x_rec[:B], z, ave, log_dev


# --------------------------------------------------------------------------
# Pure-JAX reference (same bf16-quantized weights as the kernel)
# --------------------------------------------------------------------------
def vae_forward_ref(x, eps, params):
    (ew1, eb1, ew2, eb2, wav, bav, wdv, bdv,
     dw1, db1, dw2, db2, dw3, db3) = params
    q = lambda w: w.astype(jnp.bfloat16).astype(jnp.float32)
    h = jax.nn.relu(x @ q(ew1) + eb1)
    h = jax.nn.relu(h @ q(ew2) + eb2)
    ave = h @ q(wav) + bav
    log_dev = h @ q(wdv) + bdv
    z = ave + jnp.exp(log_dev / 2.0) * eps
    d = jax.nn.relu(z @ q(dw1) + db1)
    d = jax.nn.relu(d @ q(dw2) + db2)
    x_rec = jax.nn.sigmoid(d @ q(dw3) + db3)
    return x_rec, z, ave, log_dev


if __name__ == "__main__":
    key = jax.random.PRNGKey(0)
    k_param, k_x, k_eps = jax.random.split(key, 3)

    params = init_vae_params(k_param, Z_DIM)

    B = 8
    x = jax.random.uniform(k_x, (B, IN_DIM), jnp.float32)     # MNIST-like flattened input
    eps = jax.random.normal(k_eps, (B, Z_DIM), jnp.float32)   # torch.randn_like(ave)
    # TODO(synk): torch.randn_like inside Encoder.forward is replaced by a
    # pre-sampled `eps` input (Pallas kernels take RNG noise explicitly).

    out = vae_forward(x, eps, params)
    out = jax.block_until_ready(out)

    # Sanity-check against a pure-JAX reference (bf16 matmuls + approx
    # reciprocal in the kernel -> loose tolerance).
    ref = vae_forward_ref(x, eps, params)
    for a, b in zip(out, ref):
        assert a.shape == b.shape, (a.shape, b.shape)
        err = jnp.max(jnp.abs(a - b))
        assert err < 5e-2, err

    print("KERNEL_OK")
</pallas_src>

<mosaic_0001>
module attributes {stable_mosaic.version = 11 : i64} {
  func.func @_vae_kernel(%arg0: i32, %arg1: memref<16x784xf32, #tpu.memory_space<vmem>>, %arg2: memref<16x16xf32, #tpu.memory_space<vmem>>, %arg3: memref<784x384xbf16, #tpu.memory_space<vmem>>, %arg4: memref<1x384xf32, #tpu.memory_space<vmem>>, %arg5: memref<384x128xbf16, #tpu.memory_space<vmem>>, %arg6: memref<1x128xf32, #tpu.memory_space<vmem>>, %arg7: memref<128x32xbf16, #tpu.memory_space<vmem>>, %arg8: memref<1x32xf32, #tpu.memory_space<vmem>>, %arg9: memref<16x128xbf16, #tpu.memory_space<vmem>>, %arg10: memref<1x128xf32, #tpu.memory_space<vmem>>, %arg11: memref<128x384xbf16, #tpu.memory_space<vmem>>, %arg12: memref<1x384xf32, #tpu.memory_space<vmem>>, %arg13: memref<384x784xbf16, #tpu.memory_space<vmem>>, %arg14: memref<1x784xf32, #tpu.memory_space<vmem>>, %arg15: memref<16x784xf32, #tpu.memory_space<vmem>>, %arg16: memref<16x128xf32, #tpu.memory_space<vmem>>) attributes {dimension_semantics = [#tpu.dimension_semantics<parallel>], iteration_bounds = array<i64: 1>, scalar_prefetch = 0 : i64, scratch_operands = 0 : i64, tpu.core_type = #tpu.core_type<tc>, window_params = [{transform_indices = @transform_0, window_bounds = array<i64: 16, 784>}, {transform_indices = @transform_1, window_bounds = array<i64: 16, 16>}, {pipeline_mode = #tpu.pipeline_mode<synchronous>, transform_indices = @transform_2, window_bounds = array<i64: 784, 384>}, {pipeline_mode = #tpu.pipeline_mode<synchronous>, transform_indices = @transform_3, window_bounds = array<i64: 1, 384>}, {pipeline_mode = #tpu.pipeline_mode<synchronous>, transform_indices = @transform_4, window_bounds = array<i64: 384, 128>}, {pipeline_mode = #tpu.pipeline_mode<synchronous>, transform_indices = @transform_5, window_bounds = array<i64: 1, 128>}, {pipeline_mode = #tpu.pipeline_mode<synchronous>, transform_indices = @transform_6, window_bounds = array<i64: 128, 32>}, {pipeline_mode = #tpu.pipeline_mode<synchronous>, transform_indices = @transform_7, window_bounds = array<i64: 1, 32>}, {pipeline_mode = #tpu.pipeline_mode<synchronous>, transform_indices = @transform_8, window_bounds = array<i64: 16, 128>}, {pipeline_mode = #tpu.pipeline_mode<synchronous>, transform_indices = @transform_9, window_bounds = array<i64: 1, 128>}, {pipeline_mode = #tpu.pipeline_mode<synchronous>, transform_indices = @transform_10, window_bounds = array<i64: 128, 384>}, {pipeline_mode = #tpu.pipeline_mode<synchronous>, transform_indices = @transform_11, window_bounds = array<i64: 1, 384>}, {pipeline_mode = #tpu.pipeline_mode<synchronous>, transform_indices = @transform_12, window_bounds = array<i64: 384, 784>}, {pipeline_mode = #tpu.pipeline_mode<synchronous>, transform_indices = @transform_13, window_bounds = array<i64: 1, 784>}, {transform_indices = @transform_14, window_bounds = array<i64: 16, 784>}, {transform_indices = @transform_15, window_bounds = array<i64: 16, 128>}]} {
    %c0 = arith.constant 0 : index
    %c0_0 = arith.constant 0 : index
    %0 = vector.load %arg1[%c0, %c0_0] : memref<16x784xf32, #tpu.memory_space<vmem>>, vector<16x784xf32>
    %1 = arith.truncf %0 : vector<16x784xf32> to vector<16x784xbf16>
    %c0_1 = arith.constant 0 : index
    %c0_2 = arith.constant 0 : index
    %2 = vector.load %arg3[%c0_1, %c0_2] : memref<784x384xbf16, #tpu.memory_space<vmem>>, vector<784x384xbf16>
    %cst = arith.constant dense<0.000000e+00> : vector<16x384xf32>
    %3 = tpu.matmul %1, %2, %cst {dimension_numbers = #tpu.dot_dimension_numbers<[1], [0], [0], [1], [0, 0, 1, 1], [], []>} : vector<16x784xbf16>, vector<784x384xbf16>, vector<16x384xf32> -> vector<16x384xf32>
    %c0_3 = arith.constant 0 : index
    %c0_4 = arith.constant 0 : index
    %4 = vector.load %arg4[%c0_3, %c0_4] : memref<1x384xf32, #tpu.memory_space<vmem>>, vector<1x384xf32>
    %5 = vector.broadcast %4 : vector<1x384xf32> to vector<16x384xf32>
    %6 = arith.addf %3, %5 : vector<16x384xf32>
    %cst_5 = arith.constant 0.000000e+00 : f32
    %7 = vector.broadcast %cst_5 : f32 to vector<16x384xf32>
    %8 = arith.maximumf %6, %7 : vector<16x384xf32>
    %9 = arith.truncf %8 : vector<16x384xf32> to vector<16x384xbf16>
    %c0_6 = arith.constant 0 : index
    %c0_7 = arith.constant 0 : index
    %10 = vector.load %arg5[%c0_6, %c0_7] : memref<384x128xbf16, #tpu.memory_space<vmem>>, vector<384x128xbf16>
    %cst_8 = arith.constant dense<0.000000e+00> : vector<16x128xf32>
    %11 = tpu.matmul %9, %10, %cst_8 {dimension_numbers = #tpu.dot_dimension_numbers<[1], [0], [0], [1], [0, 0, 1, 1], [], []>} : vector<16x384xbf16>, vector<384x128xbf16>, vector<16x128xf32> -> vector<16x128xf32>
    %c0_9 = arith.constant 0 : index
    %c0_10 = arith.constant 0 : index
    %12 = vector.load %arg6[%c0_9, %c0_10] : memref<1x128xf32, #tpu.memory_space<vmem>>, vector<1x128xf32>
    %13 = vector.broadcast %12 : vector<1x128xf32> to vector<16x128xf32>
    %14 = arith.addf %11, %13 : vector<16x128xf32>
    %cst_11 = arith.constant 0.000000e+00 : f32
    %15 = vector.broadcast %cst_11 : f32 to vector<16x128xf32>
    %16 = arith.maximumf %14, %15 : vector<16x128xf32>
    %17 = arith.truncf %16 : vector<16x128xf32> to vector<16x128xbf16>
    %c0_12 = arith.constant 0 : index
    %c0_13 = arith.constant 0 : index
    %18 = vector.load %arg7[%c0_12, %c0_13] : memref<128x32xbf16, #tpu.memory_space<vmem>>, vector<128x32xbf16>
    %cst_14 = arith.constant dense<0.000000e+00> : vector<16x32xf32>
    %19 = tpu.matmul %17, %18, %cst_14 {dimension_numbers = #tpu.dot_dimension_numbers<[1], [0], [0], [1], [0, 0, 1, 1], [], []>} : vector<16x128xbf16>, vector<128x32xbf16>, vector<16x32xf32> -> vector<16x32xf32>
    %c0_15 = arith.constant 0 : index
    %c0_16 = arith.constant 0 : index
    %20 = vector.load %arg8[%c0_15, %c0_16] : memref<1x32xf32, #tpu.memory_space<vmem>>, vector<1x32xf32>
    %21 = vector.broadcast %20 : vector<1x32xf32> to vector<16x32xf32>
    %22 = arith.addf %19, %21 : vector<16x32xf32>
    %23 = vector.extract_strided_slice %22 {offsets = [0, 0], sizes = [16, 16], strides = [1, 1]} : vector<16x32xf32> to vector<16x16xf32>
    %24 = vector.extract_strided_slice %22 {offsets = [0, 16], sizes = [16, 16], strides = [1, 1]} : vector<16x32xf32> to vector<16x16xf32>
    %cst_17 = arith.constant 5.000000e-01 : f32
    %25 = vector.broadcast %cst_17 : f32 to vector<16x16xf32>
    %26 = arith.mulf %24, %25 : vector<16x16xf32>
    %27 = math.exp %26 : vector<16x16xf32>
    %c0_18 = arith.constant 0 : index
    %c0_19 = arith.constant 0 : index
    %28 = vector.load %arg2[%c0_18, %c0_19] : memref<16x16xf32, #tpu.memory_space<vmem>>, vector<16x16xf32>
    %29 = arith.mulf %27, %28 : vector<16x16xf32>
    %30 = arith.addf %23, %29 : vector<16x16xf32>
    %31 = arith.truncf %30 : vector<16x16xf32> to vector<16x16xbf16>
    %c0_20 = arith.constant 0 : index
    %c0_21 = arith.constant 0 : index
    %32 = vector.load %arg9[%c0_20, %c0_21] : memref<16x128xbf16, #tpu.memory_space<vmem>>, vector<16x128xbf16>
    %cst_22 = arith.constant dense<0.000000e+00> : vector<16x128xf32>
    %33 = tpu.matmul %31, %32, %cst_22 {dimension_numbers = #tpu.dot_dimension_numbers<[1], [0], [0], [1], [0, 0, 1, 1], [], []>} : vector<16x16xbf16>, vector<16x128xbf16>, vector<16x128xf32> -> vector<16x128xf32>
    %c0_23 = arith.constant 0 : index
    %c0_24 = arith.constant 0 : index
    %34 = vector.load %arg10[%c0_23, %c0_24] : memref<1x128xf32, #tpu.memory_space<vmem>>, vector<1x128xf32>
    %35 = vector.broadcast %34 : vector<1x128xf32> to vector<16x128xf32>
    %36 = arith.addf %33, %35 : vector<16x128xf32>
    %cst_25 = arith.constant 0.000000e+00 : f32
    %37 = vector.broadcast %cst_25 : f32 to vector<16x128xf32>
    %38 = arith.maximumf %36, %37 : vector<16x128xf32>
    %39 = arith.truncf %38 : vector<16x128xf32> to vector<16x128xbf16>
    %c0_26 = arith.constant 0 : index
    %c0_27 = arith.constant 0 : index
    %40 = vector.load %arg11[%c0_26, %c0_27] : memref<128x384xbf16, #tpu.memory_space<vmem>>, vector<128x384xbf16>
    %cst_28 = arith.constant dense<0.000000e+00> : vector<16x384xf32>
    %41 = tpu.matmul %39, %40, %cst_28 {dimension_numbers = #tpu.dot_dimension_numbers<[1], [0], [0], [1], [0, 0, 1, 1], [], []>} : vector<16x128xbf16>, vector<128x384xbf16>, vector<16x384xf32> -> vector<16x384xf32>
    %c0_29 = arith.constant 0 : index
    %c0_30 = arith.constant 0 : index
    %42 = vector.load %arg12[%c0_29, %c0_30] : memref<1x384xf32, #tpu.memory_space<vmem>>, vector<1x384xf32>
    %43 = vector.broadcast %42 : vector<1x384xf32> to vector<16x384xf32>
    %44 = arith.addf %41, %43 : vector<16x384xf32>
    %cst_31 = arith.constant 0.000000e+00 : f32
    %45 = vector.broadcast %cst_31 : f32 to vector<16x384xf32>
    %46 = arith.maximumf %44, %45 : vector<16x384xf32>
    %47 = arith.truncf %46 : vector<16x384xf32> to vector<16x384xbf16>
    %c0_32 = arith.constant 0 : index
    %c0_33 = arith.constant 0 : index
    %48 = vector.load %arg13[%c0_32, %c0_33] : memref<384x784xbf16, #tpu.memory_space<vmem>>, vector<384x784xbf16>
    %cst_34 = arith.constant dense<0.000000e+00> : vector<16x784xf32>
    %49 = tpu.matmul %47, %48, %cst_34 {dimension_numbers = #tpu.dot_dimension_numbers<[1], [0], [0], [1], [0, 0, 1, 1], [], []>} : vector<16x384xbf16>, vector<384x784xbf16>, vector<16x784xf32> -> vector<16x784xf32>
    %c0_35 = arith.constant 0 : index
    %c0_36 = arith.constant 0 : index
    %50 = vector.load %arg14[%c0_35, %c0_36] : memref<1x784xf32, #tpu.memory_space<vmem>>, vector<1x784xf32>
    %51 = vector.broadcast %50 : vector<1x784xf32> to vector<16x784xf32>
    %52 = arith.addf %49, %51 : vector<16x784xf32>
    %cst_37 = arith.constant 0.000000e+00 : f32
    %53 = vector.broadcast %cst_37 : f32 to vector<16x784xf32>
    %54 = arith.subf %53, %52 : vector<16x784xf32>
    %55 = math.exp %54 : vector<16x784xf32>
    %cst_38 = arith.constant 1.000000e+00 : f32
    %56 = vector.broadcast %cst_38 : f32 to vector<16x784xf32>
    %57 = arith.addf %56, %55 : vector<16x784xf32>
    %58 = tpu.reciprocal %57 {approx = true} : vector<16x784xf32> -> vector<16x784xf32>
    %c0_39 = arith.constant 0 : index
    %c0_40 = arith.constant 0 : index
    %59 = vector.load %arg15[%c0_39, %c0_40] : memref<16x784xf32, #tpu.memory_space<vmem>>, vector<16x784xf32>
    tpu.vector_store %arg15[%c0_39, %c0_40], %58 {strides = array<i32>} : memref<16x784xf32, #tpu.memory_space<vmem>>, vector<16x784xf32>,
    %cst_41 = arith.constant 0.000000e+00 : f32
    %60 = vector.broadcast %cst_41 : f32 to vector<16x80xf32>
    %61 = tpu.concatenate %23, %24, %30, %60 in 1 : vector<16x16xf32>, vector<16x16xf32>, vector<16x16xf32>, vector<16x80xf32> -> vector<16x128xf32>
    %c0_42 = arith.constant 0 : index
    %c0_43 = arith.constant 0 : index
    %62 = vector.load %arg16[%c0_42, %c0_43] : memref<16x128xf32, #tpu.memory_space<vmem>>, vector<16x128xf32>
    tpu.vector_store %arg16[%c0_42, %c0_43], %61 {strides = array<i32>} : memref<16x128xf32, #tpu.memory_space<vmem>>, vector<16x128xf32>,
    return
  }
  func.func @transform_0(%arg0: i32) -> (i32, i32) {
    %c0_i32 = arith.constant 0 : i32
    %c0_i32_0 = arith.constant 0 : i32
    return %arg0, %c0_i32 : i32, i32
  }
  func.func @transform_1(%arg0: i32) -> (i32, i32) {
    %c0_i32 = arith.constant 0 : i32
    %c0_i32_0 = arith.constant 0 : i32
    return %arg0, %c0_i32 : i32, i32
  }
  func.func @transform_2(%arg0: i32) -> (i32, i32) {
    %c0_i32 = arith.constant 0 : i32
    %c0_i32_0 = arith.constant 0 : i32
    %c0_i32_1 = arith.constant 0 : i32
    return %c0_i32, %c0_i32_0 : i32, i32
  }
  func.func @transform_3(%arg0: i32) -> (i32, i32) {
    %c0_i32 = arith.constant 0 : i32
    %c0_i32_0 = arith.constant 0 : i32
    %c0_i32_1 = arith.constant 0 : i32
    return %c0_i32, %c0_i32_0 : i32, i32
  }
  func.func @transform_4(%arg0: i32) -> (i32, i32) {
    %c0_i32 = arith.constant 0 : i32
    %c0_i32_0 = arith.constant 0 : i32
    %c0_i32_1 = arith.constant 0 : i32
    return %c0_i32, %c0_i32_0 : i32, i32
  }
  func.func @transform_5(%arg0: i32) -> (i32, i32) {
    %c0_i32 = arith.constant 0 : i32
    %c0_i32_0 = arith.constant 0 : i32
    %c0_i32_1 = arith.constant 0 : i32
    return %c0_i32, %c0_i32_0 : i32, i32
  }
  func.func @transform_6(%arg0: i32) -> (i32, i32) {
    %c0_i32 = arith.constant 0 : i32
    %c0_i32_0 = arith.constant 0 : i32
    %c0_i32_1 = arith.constant 0 : i32
    return %c0_i32, %c0_i32_0 : i32, i32
  }
  func.func @transform_7(%arg0: i32) -> (i32, i32) {
    %c0_i32 = arith.constant 0 : i32
    %c0_i32_0 = arith.constant 0 : i32
    %c0_i32_1 = arith.constant 0 : i32
    return %c0_i32, %c0_i32_0 : i32, i32
  }
  func.func @transform_8(%arg0: i32) -> (i32, i32) {
    %c0_i32 = arith.constant 0 : i32
    %c0_i32_0 = arith.constant 0 : i32
    %c0_i32_1 = arith.constant 0 : i32
    return %c0_i32, %c0_i32_0 : i32, i32
  }
  func.func @transform_9(%arg0: i32) -> (i32, i32) {
    %c0_i32 = arith.constant 0 : i32
    %c0_i32_0 = arith.constant 0 : i32
    %c0_i32_1 = arith.constant 0 : i32
    return %c0_i32, %c0_i32_0 : i32, i32
  }
  func.func @transform_10(%arg0: i32) -> (i32, i32) {
    %c0_i32 = arith.constant 0 : i32
    %c0_i32_0 = arith.constant 0 : i32
    %c0_i32_1 = arith.constant 0 : i32
    return %c0_i32, %c0_i32_0 : i32, i32
  }
  func.func @transform_11(%arg0: i32) -> (i32, i32) {
    %c0_i32 = arith.constant 0 : i32
    %c0_i32_0 = arith.constant 0 : i32
    %c0_i32_1 = arith.constant 0 : i32
    return %c0_i32, %c0_i32_0 : i32, i32
  }
  func.func @transform_12(%arg0: i32) -> (i32, i32) {
    %c0_i32 = arith.constant 0 : i32
    %c0_i32_0 = arith.constant 0 : i32
    %c0_i32_1 = arith.constant 0 : i32
    return %c0_i32, %c0_i32_0 : i32, i32
  }
  func.func @transform_13(%arg0: i32) -> (i32, i32) {
    %c0_i32 = arith.constant 0 : i32
    %c0_i32_0 = arith.constant 0 : i32
    %c0_i32_1 = arith.constant 0 : i32
    return %c0_i32, %c0_i32_0 : i32, i32
  }
  func.func @transform_14(%arg0: i32) -> (i32, i32) {
    %c0_i32 = arith.constant 0 : i32
    %c0_i32_0 = arith.constant 0 : i32
    return %arg0, %c0_i32 : i32, i32
  }
  func.func @transform_15(%arg0: i32) -> (i32, i32) {
    %c0_i32 = arith.constant 0 : i32
    %c0_i32_0 = arith.constant 0 : i32
    return %arg0, %c0_i32 : i32, i32
  }
}

</mosaic_0001>

<llo_original>
// kernel: vae_forward.1
$region0: #{vae_forward.1}
  #allocation0 [shape = 'u32[]', space=smem, size = 0x4, offset = 0x4, fixed_abs, tag = 'smem constant byte address 0x4 - core index']
  #allocation1 [shape = 'u32[144,128]{1,0:T(1,128)}', space=vmem, size = 0x12000, scoped, tag = 'internal scratch']
  %s0 = inlined_call_operand.vmem [shape: f32[16,784], index: 0, kind: input, shape index: {}]
  %s1 = inlined_call_operand.vmem [shape: f32[16,16], index: 1, kind: input, shape index: {}]
  %s2 = inlined_call_operand.vmem [shape: bf16[784,384], index: 2, kind: input, shape index: {}]
  %s3 = inlined_call_operand.vmem [shape: f32[1,384], index: 3, kind: input, shape index: {}]
  %s4 = inlined_call_operand.vmem [shape: bf16[384,128], index: 4, kind: input, shape index: {}]
  %s5 = inlined_call_operand.vmem [shape: f32[1,128], index: 5, kind: input, shape index: {}]
  %s6 = inlined_call_operand.vmem [shape: bf16[128,32], index: 6, kind: input, shape index: {}]
  %s7 = inlined_call_operand.vmem [shape: f32[1,32], index: 7, kind: input, shape index: {}]
  %s8 = inlined_call_operand.vmem [shape: bf16[16,128], index: 8, kind: input, shape index: {}]
  %s9 = inlined_call_operand.vmem [shape: f32[1,128], index: 9, kind: input, shape index: {}]
  %s10 = inlined_call_operand.vmem [shape: bf16[128,384], index: 10, kind: input, shape index: {}]
  %s11 = inlined_call_operand.vmem [shape: f32[1,384], index: 11, kind: input, shape index: {}]
  %s12 = inlined_call_operand.vmem [shape: bf16[384,784], index: 12, kind: input, shape index: {}]
  %s13 = inlined_call_operand.vmem [shape: f32[1,784], index: 13, kind: input, shape index: {}]
  %s14 = inlined_call_operand.vmem [shape: f32[16,784], index: 14, kind: output, shape index: {0}]
  %s15 = inlined_call_operand.vmem [shape: f32[16,128], index: 15, kind: output, shape index: {1}]
  %16 = xla_tuple %s14, %s15
  %s17 = sld [smem:[#allocation0]]
  $region74: #{vae_forward.1} parent=0
    _
  %s19 = ssub.s32 1, %s17
  %s20 = scalar_select 0, %s19, %s17
  // Predicated region
  $region2: #{vae_forward.1} parent=0 // pred_check
    _
  $region3: #{vae_forward.1} parent=0 // pred_check_branch
    %22 = sbr.rel (0) target = $region5
  $region4: #{vae_forward.1} parent=0 // pred_region
    _
  $region5: #{vae_forward.1} parent=0 // pred_fallthru
    _
  // Predicated region
  $region6: #{vae_forward.1} parent=0 // pred_check
    _
  $region7: #{vae_forward.1} parent=0 // pred_check_branch
    %24 = sbr.rel (0) target = $region9
  $region8: #{vae_forward.1} parent=0 // pred_region
    _
  $region9: #{vae_forward.1} parent=0 // pred_fallthru
    _
  // Predicated region
  $region10: #{vae_forward.1} parent=0 // pred_check
    _
  $region11: #{vae_forward.1} parent=0 // pred_check_branch
    %26 = sbr.rel (0) target = $region13
  $region12: #{vae_forward.1} parent=0 // pred_region
    _
  $region13: #{vae_forward.1} parent=0 // pred_fallthru
    _
  // Predicated region
  $region14: #{vae_forward.1} parent=0 // pred_check
    _
  $region15: #{vae_forward.1} parent=0 // pred_check_branch
    %28 = sbr.rel (0) target = $region17
  $region16: #{vae_forward.1} parent=0 // pred_region
    _
  $region17: #{vae_forward.1} parent=0 // pred_fallthru
    _
  // Predicated region
  $region18: #{vae_forward.1} parent=0 // pred_check
    _
  $region19: #{vae_forward.1} parent=0 // pred_check_branch
    %30 = sbr.rel (0) target = $region21
  $region20: #{vae_forward.1} parent=0 // pred_region
    _
  $region21: #{vae_forward.1} parent=0 // pred_fallthru
    _
  // Predicated region
  $region22: #{vae_forward.1} parent=0 // pred_check
    _
  $region23: #{vae_forward.1} parent=0 // pred_check_branch
    %32 = sbr.rel (0) target = $region25
  $region24: #{vae_forward.1} parent=0 // pred_region
    _
  $region25: #{vae_forward.1} parent=0 // pred_fallthru
    _
  // Predicated region
  $region26: #{vae_forward.1} parent=0 // pred_check
    _
  $region27: #{vae_forward.1} parent=0 // pred_check_branch
    %34 = sbr.rel (0) target = $region29
  $region28: #{vae_forward.1} parent=0 // pred_region
    _
  $region29: #{vae_forward.1} parent=0 // pred_fallthru
    _
  // Predicated region
  $region30: #{vae_forward.1} parent=0 // pred_check
    _
  $region31: #{vae_forward.1} parent=0 // pred_check_branch
    %36 = sbr.rel (0) target = $region33
  $region32: #{vae_forward.1} parent=0 // pred_region
    _
  $region33: #{vae_forward.1} parent=0 // pred_fallthru
    _
  // Predicated region
  $region34: #{vae_forward.1} parent=0 // pred_check
    _
  $region35: #{vae_forward.1} parent=0 // pred_check_branch
    %38 = sbr.rel (0) target = $region37
  $region36: #{vae_forward.1} parent=0 // pred_region
    _
  $region37: #{vae_forward.1} parent=0 // pred_fallthru
    _
  // Predicated region
  $region38: #{vae_forward.1} parent=0 // pred_check
    _
  $region39: #{vae_forward.1} parent=0 // pred_check_branch
    %40 = sbr.rel (0) target = $region41
  $region40: #{vae_forward.1} parent=0 // pred_region
    _
  $region41: #{vae_forward.1} parent=0 // pred_fallthru
    _
  // Predicated region
  $region42: #{vae_forward.1} parent=0 // pred_check
    _
  $region43: #{vae_forward.1} parent=0 // pred_check_branch
    %42 = sbr.rel (0) target = $region45
  $region44: #{vae_forward.1} parent=0 // pred_region
    _
  $region45: #{vae_forward.1} parent=0 // pred_fallthru
    _
  // Predicated region
  $region46: #{vae_forward.1} parent=0 // pred_check
    _
  $region47: #{vae_forward.1} parent=0 // pred_check_branch
    %44 = sbr.rel (0) target = $region49
  $region48: #{vae_forward.1} parent=0 // pred_region
    _
  $region49: #{vae_forward.1} parent=0 // pred_fallthru
    _
  // Predicated region
  $region50: #{vae_forward.1} parent=0 // pred_check
    _
  $region51: #{vae_forward.1} parent=0 // pred_check_branch
    %46 = sbr.rel (0) target = $region53
  $region52: #{vae_forward.1} parent=0 // pred_region
    _
  $region53: #{vae_forward.1} parent=0 // pred_fallthru
    _
  // Predicated region
  $region54: #{vae_forward.1} parent=0 // pred_check
    _
  $region55: #{vae_forward.1} parent=0 // pred_check_branch
    %48 = sbr.rel (0) target = $region57
  $region56: #{vae_forward.1} parent=0 // pred_region
    _
  $region57: #{vae_forward.1} parent=0 // pred_fallthru
    _
  %v50 = vld [vmem:[%s0] sm:$0xff]
  %v51 = vld [vmem:[%s0 + $0x8] sm:$0xff]
  %v52 = vld [vmem:[%s0 + $0x10] sm:$0xff]
  %v53 = vld [vmem:[%s0 + $0x18] sm:$0xff]
  %v54 = vld [vmem:[%s0 + $0x20] sm:$0xff]
  %v55 = vld [vmem:[%s0 + $0x28] sm:$0xff]
  %v56 = vld [vmem:[%s0 + $0x30] sm:$0xff]
  %v57 = vld [vmem:[%s0 + $0x38] sm:$0xff]
  %v58 = vld [vmem:[%s0 + $0x40] sm:$0xff]
  %v59 = vld [vmem:[%s0 + $0x48] sm:$0xff]
  %v60 = vld [vmem:[%s0 + $0x50] sm:$0xff]
  %v61 = vld [vmem:[%s0 + $0x58] sm:$0xff]
  %v62 = vld [vmem:[%s0 + $0x60] sm:$0xff]
  %v63 = vld [vmem:[%s0 + $0x68] sm:$0xff]
  %v64 = vpack.c.bf16 %v57, %v50
  %v65 = vpack.c.bf16 %v58, %v51
  %v66 = vpack.c.bf16 %v59, %v52
  %v67 = vpack.c.bf16 %v60, %v53
  %v68 = vpack.c.bf16 %v61, %v54
  %v69 = vpack.c.bf16 %v62, %v55
  %v70 = vpack.c.bf16 %v63, %v56
  %v71 = vld [vmem:[%s2] sm:$0xff]
  %v72 = vld [vmem:[%s2 + $0x8] sm:$0xf]
  %v73 = vld [vmem:[%s2 + $0xc] sm:$0xff]
  %v74 = vld [vmem:[%s2 + $0x14] sm:$0xf]
  %v75 = vld [vmem:[%s2 + $0x18] sm:$0xff]
  %v76 = vld [vmem:[%s2 + $0x20] sm:$0xf]
  %v77 = vld [vmem:[%s2 + $0x24] sm:$0xff]
  %v78 = vld [vmem:[%s2 + $0x2c] sm:$0xf]
  %v79 = vld [vmem:[%s2 + $0x30] sm:$0xff]
  %v80 = vld [vmem:[%s2 + $0x38] sm:$0xf]
  %v81 = vld [vmem:[%s2 + $0x3c] sm:$0xff]
  %v82 = vld [vmem:[%s2 + $0x44] sm:$0xf]
  %v83 = vld [vmem:[%s2 + $0x48] sm:$0xff]
  %v84 = vld [vmem:[%s2 + $0x50] sm:$0xf]
  %v85 = vld [vmem:[%s2 + $0x54] sm:$0xff]
  %v86 = vld [vmem:[%s2 + $0x5c] sm:$0xf]
  %v87 = vld [vmem:[%s2 + $0x60] sm:$0xff]
  %v88 = vld [vmem:[%s2 + $0x68] sm:$0xf]
  %v89 = vld [vmem:[%s2 + $0x6c] sm:$0xff]
  %v90 = vld [vmem:[%s2 + $0x74] sm:$0xf]
  %v91 = vld [vmem:[%s2 + $0x78] sm:$0xff]
  %v92 = vld [vmem:[%s2 + $0x80] sm:$0xf]
  %v93 = vld [vmem:[%s2 + $0x84] sm:$0xff]
  %v94 = vld [vmem:[%s2 + $0x8c] sm:$0xf]
  %v95 = vld [vmem:[%s2 + $0x90] sm:$0xff]
  %v96 = vld [vmem:[%s2 + $0x98] sm:$0xf]
  %v97 = vld [vmem:[%s2 + $0x9c] sm:$0xff]
  %v98 = vld [vmem:[%s2 + $0xa4] sm:$0xf]
  %v99 = vld [vmem:[%s2 + $0xa8] sm:$0xff]
  %v100 = vld [vmem:[%s2 + $0xb0] sm:$0xf]
  %v101 = vld [vmem:[%s2 + $0xb4] sm:$0xff]
  %v102 = vld [vmem:[%s2 + $0xbc] sm:$0xf]
  %v103 = vld [vmem:[%s2 + $0xc0] sm:$0xff]
  %v104 = vld [vmem:[%s2 + $0xc8] sm:$0xf]
  %v105 = vld [vmem:[%s2 + $0xcc] sm:$0xff]
  %v106 = vld [vmem:[%s2 + $0xd4] sm:$0xf]
  %v107 = vld [vmem:[%s2 + $0xd8] sm:$0xff]
  %v108 = vld [vmem:[%s2 + $0xe0] sm:$0xf]
  %v109 = vld [vmem:[%s2 + $0xe4] sm:$0xff]
  %v110 = vld [vmem:[%s2 + $0xec] sm:$0xf]
  %v111 = vld [vmem:[%s2 + $0xf0] sm:$0xff]
  %v112 = vld [vmem:[%s2 + $0xf8] sm:$0xf]
  %v113 = vld [vmem:[%s2 + $0xfc] sm:$0xff]
  %v114 = vld [vmem:[%s2 + $0x104] sm:$0xf]
  %v115 = vld [vmem:[%s2 + $0x108] sm:$0xff]
  %v116 = vld [vmem:[%s2 + $0x110] sm:$0xf]
  %v117 = vld [vmem:[%s2 + $0x114] sm:$0xff]
  %v118 = vld [vmem:[%s2 + $0x11c] sm:$0xf]
  %v119 = vld [vmem:[%s2 + $0x120] sm:$0xff]
  %v120 = vld [vmem:[%s2 + $0x128] sm:$0xf]
  %v121 = vld [vmem:[%s2 + $0x12c] sm:$0xff]
  %v122 = vld [vmem:[%s2 + $0x134] sm:$0xf]
  %v123 = vld [vmem:[%s2 + $0x138] sm:$0xff]
  %v124 = vld [vmem:[%s2 + $0x140] sm:$0xf]
  %v125 = vld [vmem:[%s2 + $0x144] sm:$0xff]
  %v126 = vld [vmem:[%s2 + $0x14c] sm:$0xf]
  %v127 = vld [vmem:[%s2 + $0x150] sm:$0xff]
  %v128 = vld [vmem:[%s2 + $0x158] sm:$0xf]
  %v129 = vld [vmem:[%s2 + $0x15c] sm:$0xff]
  %v130 = vld [vmem:[%s2 + $0x164] sm:$0xf]
  %v131 = vld [vmem:[%s2 + $0x168] sm:$0xff]
  %v132 = vld [vmem:[%s2 + $0x170] sm:$0xf]
  %v133 = vld [vmem:[%s2 + $0x174] sm:$0xff]
  %v134 = vld [vmem:[%s2 + $0x17c] sm:$0xf]
  %v135 = vld [vmem:[%s2 + $0x180] sm:$0xff]
  %v136 = vld [vmem:[%s2 + $0x188] sm:$0xf]
  %v137 = vld [vmem:[%s2 + $0x18c] sm:$0xff]
  %v138 = vld [vmem:[%s2 + $0x194] sm:$0xf]
  %v139 = vld [vmem:[%s2 + $0x198] sm:$0xff]
  %v140 = vld [vmem:[%s2 + $0x1a0] sm:$0xf]
  %v141 = vld [vmem:[%s2 + $0x1a4] sm:$0xff]
  %v142 = vld [vmem:[%s2 + $0x1ac] sm:$0xf]
  %v143 = vld [vmem:[%s2 + $0x1b0] sm:$0xff]
  %v144 = vld [vmem:[%s2 + $0x1b8] sm:$0xf]
  %v145 = vld [vmem:[%s2 + $0x1bc] sm:$0xff]
  %v146 = vld [vmem:[%s2 + $0x1c4] sm:$0xf]
  %v147 = vld [vmem:[%s2 + $0x1c8] sm:$0xff]
  %v148 = vld [vmem:[%s2 + $0x1d0] sm:$0xf]
  %v149 = vld [vmem:[%s2 + $0x1d4] sm:$0xff]
  %v150 = vld [vmem:[%s2 + $0x1dc] sm:$0xf]
  %v151 = vld [vmem:[%s2 + $0x1e0] sm:$0xff]
  %v152 = vld [vmem:[%s2 + $0x1e8] sm:$0xf]
  %v153 = vld [vmem:[%s2 + $0x1ec] sm:$0xff]
  %v154 = vld [vmem:[%s2 + $0x1f4] sm:$0xf]
  %v155 = vld [vmem:[%s2 + $0x1f8] sm:$0xff]
  %v156 = vld [vmem:[%s2 + $0x200] sm:$0xf]
  %v157 = vld [vmem:[%s2 + $0x204] sm:$0xff]
  %v158 = vld [vmem:[%s2 + $0x20c] sm:$0xf]
  %v159 = vld [vmem:[%s2 + $0x210] sm:$0xff]
  %v160 = vld [vmem:[%s2 + $0x218] sm:$0xf]
  %v161 = vld [vmem:[%s2 + $0x21c] sm:$0xff]
  %v162 = vld [vmem:[%s2 + $0x224] sm:$0xf]
  %v163 = vld [vmem:[%s2 + $0x228] sm:$0xff]
  %v164 = vld [vmem:[%s2 + $0x230] sm:$0xf]
  %v165 = vld [vmem:[%s2 + $0x234] sm:$0xff]
  %v166 = vld [vmem:[%s2 + $0x23c] sm:$0xf]
  %v167 = vld [vmem:[%s2 + $0x240] sm:$0xff]
  %v168 = vld [vmem:[%s2 + $0x248] sm:$0xf]
  %v169 = vld [vmem:[%s2 + $0x24c] sm:$0xff]
  %v170 = vld [vmem:[%s2 + $0x254] sm:$0xf]
  %v171 = vld [vmem:[%s2 + $0x258] sm:$0xff]
  %v172 = vld [vmem:[%s2 + $0x260] sm:$0xf]
  %v173 = vld [vmem:[%s2 + $0x264] sm:$0xff]
  %v174 = vld [vmem:[%s2 + $0x26c] sm:$0xf]
  %v175 = vld [vmem:[%s2 + $0x270] sm:$0xff]
  %v176 = vld [vmem:[%s2 + $0x278] sm:$0xf]
  %v177 = vld [vmem:[%s2 + $0x27c] sm:$0xff]
  %v178 = vld [vmem:[%s2 + $0x284] sm:$0xf]
  %v179 = vld [vmem:[%s2 + $0x288] sm:$0xff]
  %v180 = vld [vmem:[%s2 + $0x290] sm:$0xf]
  %v181 = vld [vmem:[%s2 + $0x294] sm:$0xff]
  %v182 = vld [vmem:[%s2 + $0x29c] sm:$0xf]
  %v183 = vld [vmem:[%s2 + $0x2a0] sm:$0xff]
  %v184 = vld [vmem:[%s2 + $0x2a8] sm:$0xf]
  %v185 = vld [vmem:[%s2 + $0x2ac] sm:$0xff]
  %v186 = vld [vmem:[%s2 + $0x2b4] sm:$0xf]
  %v187 = vld [vmem:[%s2 + $0x2b8] sm:$0xff]
  %v188 = vld [vmem:[%s2 + $0x2c0] sm:$0xf]
  %v189 = vld [vmem:[%s2 + $0x2c4] sm:$0xff]
  %v190 = vld [vmem:[%s2 + $0x2cc] sm:$0xf]
  %v191 = vld [vmem:[%s2 + $0x2d0] sm:$0xff]
  %v192 = vld [vmem:[%s2 + $0x2d8] sm:$0xf]
  %v193 = vld [vmem:[%s2 + $0x2dc] sm:$0xff]
  %v194 = vld [vmem:[%s2 + $0x2e4] sm:$0xf]
  %v195 = vld [vmem:[%s2 + $0x2e8] sm:$0xff]
  %v196 = vld [vmem:[%s2 + $0x2f0] sm:$0xf]
  %v197 = vld [vmem:[%s2 + $0x2f4] sm:$0xff]
  %v198 = vld [vmem:[%s2 + $0x2fc] sm:$0xf]
  %v199 = vld [vmem:[%s2 + $0x300] sm:$0xff]
  %v200 = vld [vmem:[%s2 + $0x308] sm:$0xf]
  %v201 = vld [vmem:[%s2 + $0x30c] sm:$0xff]
  %v202 = vld [vmem:[%s2 + $0x314] sm:$0xf]
  %v203 = vld [vmem:[%s2 + $0x318] sm:$0xff]
  %v204 = vld [vmem:[%s2 + $0x320] sm:$0xf]
  %v205 = vld [vmem:[%s2 + $0x324] sm:$0xff]
  %v206 = vld [vmem:[%s2 + $0x32c] sm:$0xf]
  %v207 = vld [vmem:[%s2 + $0x330] sm:$0xff]
  %v208 = vld [vmem:[%s2 + $0x338] sm:$0xf]
  %v209 = vld [vmem:[%s2 + $0x33c] sm:$0xff]
  %v210 = vld [vmem:[%s2 + $0x344] sm:$0xf]
  %v211 = vld [vmem:[%s2 + $0x348] sm:$0xff]
  %v212 = vld [vmem:[%s2 + $0x350] sm:$0xf]
  %v213 = vld [vmem:[%s2 + $0x354] sm:$0xff]
  %v214 = vld [vmem:[%s2 + $0x35c] sm:$0xf]
  %v215 = vld [vmem:[%s2 + $0x360] sm:$0xff]
  %v216 = vld [vmem:[%s2 + $0x368] sm:$0xf]
  %v217 = vld [vmem:[%s2 + $0x36c] sm:$0xff]
  %v218 = vld [vmem:[%s2 + $0x374] sm:$0xf]
  %v219 = vld [vmem:[%s2 + $0x378] sm:$0xff]
  %v220 = vld [vmem:[%s2 + $0x380] sm:$0xf]
  %v221 = vld [vmem:[%s2 + $0x384] sm:$0xff]
  %v222 = vld [vmem:[%s2 + $0x38c] sm:$0xf]
  %v223 = vld [vmem:[%s2 + $0x390] sm:$0xff]
  %v224 = vld [vmem:[%s2 + $0x398] sm:$0xf]
  %v225 = vld [vmem:[%s2 + $0x39c] sm:$0xff]
  %v226 = vld [vmem:[%s2 + $0x3a4] sm:$0xf]
  %v227 = vld [vmem:[%s2 + $0x3a8] sm:$0xff]
  %v228 = vld [vmem:[%s2 + $0x3b0] sm:$0xf]
  %v229 = vld [vmem:[%s2 + $0x3b4] sm:$0xff]
  %v230 = vld [vmem:[%s2 + $0x3bc] sm:$0xf]
  %v231 = vld [vmem:[%s2 + $0x3c0] sm:$0xff]
  %v232 = vld [vmem:[%s2 + $0x3c8] sm:$0xf]
  %v233 = vld [vmem:[%s2 + $0x3cc] sm:$0xff]
  %v234 = vld [vmem:[%s2 + $0x3d4] sm:$0xf]
  %v235 = vld [vmem:[%s2 + $0x3d8] sm:$0xff]
  %v236 = vld [vmem:[%s2 + $0x3e0] sm:$0xf]
  %v237 = vld [vmem:[%s2 + $0x3e4] sm:$0xff]
  %v238 = vld [vmem:[%s2 + $0x3ec] sm:$0xf]
  %v239 = vld [vmem:[%s2 + $0x3f0] sm:$0xff]
  %v240 = vld [vmem:[%s2 + $0x3f8] sm:$0xf]
  %v241 = vld [vmem:[%s2 + $0x3fc] sm:$0xff]
  %v242 = vld [vmem:[%s2 + $0x404] sm:$0xf]
  %v243 = vld [vmem:[%s2 + $0x408] sm:$0xff]
  %v244 = vld [vmem:[%s2 + $0x410] sm:$0xf]
  %v245 = vld [vmem:[%s2 + $0x414] sm:$0xff]
  %v246 = vld [vmem:[%s2 + $0x41c] sm:$0xf]
  %v247 = vld [vmem:[%s2 + $0x420] sm:$0xff]
  %v248 = vld [vmem:[%s2 + $0x428] sm:$0xf]
  %v249 = vld [vmem:[%s2 + $0x42c] sm:$0xff]
  %v250 = vld [vmem:[%s2 + $0x434] sm:$0xf]
  %v251 = vld [vmem:[%s2 + $0x438] sm:$0xff]
  %v252 = vld [vmem:[%s2 + $0x440] sm:$0xf]
  %v253 = vld [vmem:[%s2 + $0x444] sm:$0xff]
  %v254 = vld [vmem:[%s2 + $0x44c] sm:$0xf]
  %v255 = vld [vmem:[%s2 + $0x450] sm:$0xff]
  %v256 = vld [vmem:[%s2 + $0x458] sm:$0xf]
  %v257 = vld [vmem:[%s2 + $0x45c] sm:$0xff]
  %v258 = vld [vmem:[%s2 + $0x464] sm:$0xf]
  %v259 = vld [vmem:[%s2 + $0x468] sm:$0xff]
  %v260 = vld [vmem:[%s2 + $0x470] sm:$0xf]
  %v261 = vld [vmem:[%s2 + $0x474] sm:$0xff]
  %v262 = vld [vmem:[%s2 + $0x47c] sm:$0xf]
  %v263 = vld [vmem:[%s2 + $0x480] sm:$0xff]
  %v264 = vld [vmem:[%s2 + $0x488] sm:$0xf]
  %v265 = vld [vmem:[%s2 + $0x48c] sm:$0xff]
  %v266 = vld [vmem:[%s2 + $0x494] sm:$0xf]
  %v267 = vld [vmem:[%s3] sm:$0x7]
  %v269 = vlaneseq
  %v270 = vshrl.u32 %v269, 7
  %v271 = vsub.s32 0, %v270
  %v272 = vrot.slane %v267, %v271
  %v273 = vlaneseq
  %v274 = vshrl.u32 %v273, 7
  %v275 = vsub.s32 1, %v274
  %v276 = vrot.slane %v267, %v275
  %v277 = vlaneseq
  %v278 = vshrl.u32 %v277, 7
  %v279 = vsub.s32 2, %v278
  %v280 = vrot.slane %v267, %v279
  %v480 = vunpack.c.l.b16 %v71
  %v481 = vunpack.c.h.b16 %v71
  %v482 = vunpack.c.l.b16 %v72
  %v483 = vunpack.c.l.b16 %v73
  %v484 = vunpack.c.h.b16 %v73
  %v485 = vunpack.c.l.b16 %v74
  %v486 = vunpack.c.l.b16 %v75
  %v487 = vunpack.c.h.b16 %v75
  %v488 = vunpack.c.l.b16 %v76
  %v489 = vunpack.c.l.b16 %v77
  %v490 = vunpack.c.h.b16 %v77
  %v491 = vunpack.c.l.b16 %v78
  %v492 = vunpack.c.l.b16 %v79
  %v493 = vunpack.c.h.b16 %v79
  %v494 = vunpack.c.l.b16 %v80
  %v495 = vunpack.c.l.b16 %v81
  %v496 = vunpack.c.h.b16 %v81
  %v497 = vunpack.c.l.b16 %v82
  %v498 = vunpack.c.l.b16 %v83
  %v499 = vunpack.c.h.b16 %v83
  %v500 = vunpack.c.l.b16 %v84
  %v501 = vunpack.c.l.b16 %v85
  %v502 = vunpack.c.h.b16 %v85
  %v503 = vunpack.c.l.b16 %v86
  %v504 = vunpack.c.l.b16 %v87
  %v505 = vunpack.c.h.b16 %v87
  %v506 = vunpack.c.l.b16 %v88
  %v507 = vunpack.c.l.b16 %v89
  %v508 = vunpack.c.h.b16 %v89
  %v509 = vunpack.c.l.b16 %v90
  %v510 = vunpack.c.l.b16 %v91
  %v511 = vunpack.c.h.b16 %v91
  %v512 = vunpack.c.l.b16 %v92
  %v513 = vunpack.c.l.b16 %v93
  %v514 = vunpack.c.h.b16 %v93
  %v515 = vunpack.c.l.b16 %v94
  %v516 = vunpack.c.l.b16 %v95
  %v517 = vunpack.c.h.b16 %v95
  %v518 = vunpack.c.l.b16 %v96
  %v519 = vunpack.c.l.b16 %v97
  %v520 = vunpack.c.h.b16 %v97
  %v521 = vunpack.c.l.b16 %v98
  %v522 = vunpack.c.l.b16 %v99
  %v523 = vunpack.c.h.b16 %v99
  %v524 = vunpack.c.l.b16 %v100
  %v525 = vunpack.c.l.b16 %v101
  %v526 = vunpack.c.h.b16 %v101
  %v527 = vunpack.c.l.b16 %v102
  %v528 = vunpack.c.l.b16 %v103
  %v529 = vunpack.c.h.b16 %v103
  %v530 = vunpack.c.l.b16 %v104
  %v531 = vunpack.c.l.b16 %v105
  %v532 = vunpack.c.h.b16 %v105
  %v533 = vunpack.c.l.b16 %v106
  %v534 = vunpack.c.l.b16 %v107
  %v535 = vunpack.c.h.b16 %v107
  %v536 = vunpack.c.l.b16 %v108
  %v537 = vunpack.c.l.b16 %v109
  %v538 = vunpack.c.h.b16 %v109
  %v539 = vunpack.c.l.b16 %v110
  %v540 = vunpack.c.l.b16 %v111
  %v541 = vunpack.c.h.b16 %v111
  %v542 = vunpack.c.l.b16 %v112
  %v543 = vunpack.c.l.b16 %v113
  %v544 = vunpack.c.h.b16 %v113
  %v545 = vunpack.c.l.b16 %v114
  %v546 = vunpack.c.l.b16 %v115
  %v547 = vunpack.c.h.b16 %v115
  %v548 = vunpack.c.l.b16 %v116
  %v549 = vunpack.c.l.b16 %v117
  %v550 = vunpack.c.h.b16 %v117
  %v551 = vunpack.c.l.b16 %v118
  %v552 = vunpack.c.l.b16 %v119
  %v553 = vunpack.c.h.b16 %v119
  %v554 = vunpack.c.l.b16 %v120
  %v555 = vunpack.c.l.b16 %v121
  %v556 = vunpack.c.h.b16 %v121
  %v557 = vunpack.c.l.b16 %v122
  %v558 = vunpack.c.l.b16 %v123
  %v559 = vunpack.c.h.b16 %v123
  %v560 = vunpack.c.l.b16 %v124
  %v561 = vunpack.c.l.b16 %v125
  %v562 = vunpack.c.h.b16 %v125
  %v563 = vunpack.c.l.b16 %v126
  %v564 = vunpack.c.l.b16 %v127
  %v565 = vunpack.c.h.b16 %v127
  %v566 = vunpack.c.l.b16 %v128
  %v567 = vunpack.c.l.b16 %v129
  %v568 = vunpack.c.h.b16 %v129
  %v569 = vunpack.c.l.b16 %v130
  %v570 = vunpack.c.l.b16 %v131
  %v571 = vunpack.c.h.b16 %v131
  %v572 = vunpack.c.l.b16 %v132
  %v573 = vunpack.c.l.b16 %v133
  %v574 = vunpack.c.h.b16 %v133
  %v575 = vunpack.c.l.b16 %v134
  %v576 = vunpack.c.l.b16 %v135
  %v577 = vunpack.c.h.b16 %v135
  %v578 = vunpack.c.l.b16 %v136
  %v579 = vunpack.c.l.b16 %v137
  %v580 = vunpack.c.h.b16 %v137
  %v581 = vunpack.c.l.b16 %v138
  %v582 = vunpack.c.l.b16 %v139
  %v583 = vunpack.c.h.b16 %v139
  %v584 = vunpack.c.l.b16 %v140
  %v585 = vunpack.c.l.b16 %v141
  %v586 = vunpack.c.h.b16 %v141
  %v587 = vunpack.c.l.b16 %v142
  %v588 = vunpack.c.l.b16 %v143
  %v589 = vunpack.c.h.b16 %v143
  %v590 = vunpack.c.l.b16 %v144
  %v591 = vunpack.c.l.b16 %v145
  %v592 = vunpack.c.h.b16 %v145
  %v593 = vunpack.c.l.b16 %v146
  %v594 = vunpack.c.l.b16 %v147
  %v595 = vunpack.c.h.b16 %v147
  %v596 = vunpack.c.l.b16 %v148
  %v597 = vunpack.c.l.b16 %v149
  %v598 = vunpack.c.h.b16 %v149
  %v599 = vunpack.c.l.b16 %v150
  %v600 = vunpack.c.l.b16 %v151
  %v601 = vunpack.c.h.b16 %v151
  %v602 = vunpack.c.l.b16 %v152
  %v603 = vunpack.c.l.b16 %v153
  %v604 = vunpack.c.h.b16 %v153
  %v605 = vunpack.c.l.b16 %v154
  %v606 = vunpack.c.l.b16 %v155
  %v607 = vunpack.c.h.b16 %v155
  %v608 = vunpack.c.l.b16 %v156
  %v609 = vunpack.c.l.b16 %v157
  %v610 = vunpack.c.h.b16 %v157
  %v611 = vunpack.c.l.b16 %v158
  %v612 = vunpack.c.l.b16 %v159
  %v613 = vunpack.c.h.b16 %v159
  %v614 = vunpack.c.l.b16 %v160
  %v615 = vunpack.c.l.b16 %v161
  %v616 = vunpack.c.h.b16 %v161
  %v617 = vunpack.c.l.b16 %v162
  %v618 = vunpack.c.l.b16 %v163
  %v619 = vunpack.c.h.b16 %v163
  %v620 = vunpack.c.l.b16 %v164
  %v621 = vunpack.c.l.b16 %v165
  %v622 = vunpack.c.h.b16 %v165
  %v623 = vunpack.c.l.b16 %v166
  %v624 = vunpack.c.l.b16 %v167
  %v625 = vunpack.c.h.b16 %v167
  %v626 = vunpack.c.l.b16 %v168
  %v627 = vunpack.c.l.b16 %v169
  %v628 = vunpack.c.h.b16 %v169
  %v629 = vunpack.c.l.b16 %v170
  %v630 = vunpack.c.l.b16 %v171
  %v631 = vunpack.c.h.b16 %v171
  %v632 = vunpack.c.l.b16 %v172
  %v633 = vunpack.c.l.b16 %v173
  %v634 = vunpack.c.h.b16 %v173
  %v635 = vunpack.c.l.b16 %v174
  %v636 = vunpack.c.l.b16 %v175
  %v637 = vunpack.c.h.b16 %v175
  %v638 = vunpack.c.l.b16 %v176
  %v639 = vunpack.c.l.b16 %v177
  %v640 = vunpack.c.h.b16 %v177
  %v641 = vunpack.c.l.b16 %v178
  %v642 = vunpack.c.l.b16 %v179
  %v643 = vunpack.c.h.b16 %v179
  %v644 = vunpack.c.l.b16 %v180
  %v645 = vunpack.c.l.b16 %v181
  %v646 = vunpack.c.h.b16 %v181
  %v647 = vunpack.c.l.b16 %v182
  %v648 = vunpack.c.l.b16 %v183
  %v649 = vunpack.c.h.b16 %v183
  %v650 = vunpack.c.l.b16 %v184
  %v651 = vunpack.c.l.b16 %v185
  %v652 = vunpack.c.h.b16 %v185
  %v653 = vunpack.c.l.b16 %v186
  %v654 = vunpack.c.l.b16 %v187
  %v655 = vunpack.c.h.b16 %v187
  %v656 = vunpack.c.l.b16 %v188
  %v657 = vunpack.c.l.b16 %v189
  %v658 = vunpack.c.h.b16 %v189
  %v659 = vunpack.c.l.b16 %v190
  %v660 = vunpack.c.l.b16 %v191
  %v661 = vunpack.c.h.b16 %v191
  %v662 = vunpack.c.l.b16 %v192
  %v663 = vunpack.c.l.b16 %v193
  %v664 = vunpack.c.h.b16 %v193
  %v665 = vunpack.c.l.b16 %v194
  %v666 = vunpack.c.l.b16 %v195
  %v667 = vunpack.c.h.b16 %v195
  %v668 = vunpack.c.l.b16 %v196
  %v669 = vunpack.c.l.b16 %v197
  %v670 = vunpack.c.h.b16 %v197
  %v671 = vunpack.c.l.b16 %v198
  %v672 = vunpack.c.l.b16 %v199
  %v673 = vunpack.c.h.b16 %v199
  %v674 = vunpack.c.l.b16 %v200
  %v675 = vunpack.c.l.b16 %v201
  %v676 = vunpack.c.h.b16 %v201
  %v677 = vunpack.c.l.b16 %v202
  %v678 = vunpack.c.l.b16 %v203
  %v679 = vunpack.c.h.b16 %v203
  %v680 = vunpack.c.l.b16 %v204
  %v681 = vunpack.c.l.b16 %v205
  %v682 = vunpack.c.h.b16 %v205
  %v683 = vunpack.c.l.b16 %v206
  %v684 = vunpack.c.l.b16 %v207
  %v685 = vunpack.c.h.b16 %v207
  %v686 = vunpack.c.l.b16 %v208
  %v687 = vunpack.c.l.b16 %v209
  %v688 = vunpack.c.h.b16 %v209
  %v689 = vunpack.c.l.b16 %v210
  %v690 = vunpack.c.l.b16 %v211
  %v691 = vunpack.c.h.b16 %v211
  %v692 = vunpack.c.l.b16 %v212
  %v693 = vunpack.c.l.b16 %v213
  %v694 = vunpack.c.h.b16 %v213
  %v695 = vunpack.c.l.b16 %v214
  %v696 = vunpack.c.l.b16 %v215
  %v697 = vunpack.c.h.b16 %v215
  %v698 = vunpack.c.l.b16 %v216
  %v699 = vunpack.c.l.b16 %v217
  %v700 = vunpack.c.h.b16 %v217
  %v701 = vunpack.c.l.b16 %v218
  %v702 = vunpack.c.l.b16 %v219
  %v703 = vunpack.c.h.b16 %v219
  %v704 = vunpack.c.l.b16 %v220
  %v705 = vunpack.c.l.b16 %v221
  %v706 = vunpack.c.h.b16 %v221
  %v707 = vunpack.c.l.b16 %v222
  %v708 = vunpack.c.l.b16 %v223
  %v709 = vunpack.c.h.b16 %v223
  %v710 = vunpack.c.l.b16 %v224
  %v711 = vunpack.c.l.b16 %v225
  %v712 = vunpack.c.h.b16 %v225
  %v713 = vunpack.c.l.b16 %v226
  %v714 = vunpack.c.l.b16 %v227
  %v715 = vunpack.c.h.b16 %v227
  %v716 = vunpack.c.l.b16 %v228
  %v717 = vunpack.c.l.b16 %v229
  %v718 = vunpack.c.h.b16 %v229
  %v719 = vunpack.c.l.b16 %v230
  %v720 = vunpack.c.l.b16 %v231
  %v721 = vunpack.c.h.b16 %v231
  %v722 = vunpack.c.l.b16 %v232
  %v723 = vunpack.c.l.b16 %v233
  %v724 = vunpack.c.h.b16 %v233
  %v725 = vunpack.c.l.b16 %v234
  %v726 = vunpack.c.l.b16 %v235
  %v727 = vunpack.c.h.b16 %v235
  %v728 = vunpack.c.l.b16 %v236
  %v729 = vunpack.c.l.b16 %v237
  %v730 = vunpack.c.h.b16 %v237
  %v731 = vunpack.c.l.b16 %v238
  %v732 = vunpack.c.l.b16 %v239
  %v733 = vunpack.c.h.b16 %v239
  %v734 = vunpack.c.l.b16 %v240
  %v735 = vunpack.c.l.b16 %v241
  %v736 = vunpack.c.h.b16 %v241
  %v737 = vunpack.c.l.b16 %v242
  %v738 = vunpack.c.l.b16 %v243
  %v739 = vunpack.c.h.b16 %v243
  %v740 = vunpack.c.l.b16 %v244
  %v741 = vunpack.c.l.b16 %v245
  %v742 = vunpack.c.h.b16 %v245
  %v743 = vunpack.c.l.b16 %v246
  %v744 = vunpack.c.l.b16 %v247
  %v745 = vunpack.c.h.b16 %v247
  %v746 = vunpack.c.l.b16 %v248
  %v747 = vunpack.c.l.b16 %v249
  %v748 = vunpack.c.h.b16 %v249
  %v749 = vunpack.c.l.b16 %v250
  %v750 = vunpack.c.l.b16 %v251
  %v751 = vunpack.c.h.b16 %v251
  %v752 = vunpack.c.l.b16 %v252
  %v753 = vunpack.c.l.b16 %v253
  %v754 = vunpack.c.h.b16 %v253
  %v755 = vunpack.c.l.b16 %v254
  %v756 = vunpack.c.l.b16 %v255
  %v757 = vunpack.c.h.b16 %v255
  %v758 = vunpack.c.l.b16 %v256
  %v759 = vunpack.c.l.b16 %v257
  %v760 = vunpack.c.h.b16 %v257
  %v761 = vunpack.c.l.b16 %v258
  %v762 = vunpack.c.l.b16 %v259
  %v763 = vunpack.c.h.b16 %v259
  %v764 = vunpack.c.l.b16 %v260
  %v765 = vunpack.c.l.b16 %v261
  %v766 = vunpack.c.h.b16 %v261
  %v767 = vunpack.c.l.b16 %v262
  %v768 = vunpack.c.l.b16 %v263
  %v769 = vunpack.c.h.b16 %v263
  %v770 = vunpack.c.l.b16 %v264
  %v771 = vunpack.c.l.b16 %v265
  %v772 = vunpack.c.h.b16 %v265
  %v773 = vunpack.c.l.b16 %v266
  %v774 = vpack.c.b16 %v483, %v480
  %v775 = vpack.c.b16 %v484, %v481
  %v776 = vpack.c.b16 %v485, %v482
  %v777 = vpack.c.b16 %v489, %v486
  %v778 = vpack.c.b16 %v490, %v487
  %v779 = vpack.c.b16 %v491, %v488
  %v780 = vpack.c.b16 %v495, %v492
  %v781 = vpack.c.b16 %v496, %v493
  %v782 = vpack.c.b16 %v497, %v494
  %v783 = vpack.c.b16 %v501, %v498
  %v784 = vpack.c.b16 %v502, %v499
  %v785 = vpack.c.b16 %v503, %v500
  %v786 = vpack.c.b16 %v507, %v504
  %v787 = vpack.c.b16 %v508, %v505
  %v788 = vpack.c.b16 %v509, %v506
  %v789 = vpack.c.b16 %v513, %v510
  %v790 = vpack.c.b16 %v514, %v511
  %v791 = vpack.c.b16 %v515, %v512
  %v792 = vpack.c.b16 %v519, %v516
  %v793 = vpack.c.b16 %v520, %v517
  %v794 = vpack.c.b16 %v521, %v518
  %v795 = vpack.c.b16 %v525, %v522
  %v796 = vpack.c.b16 %v526, %v523
  %v797 = vpack.c.b16 %v527, %v524
  %v798 = vpack.c.b16 %v531, %v528
  %v799 = vpack.c.b16 %v532, %v529
  %v800 = vpack.c.b16 %v533, %v530
  %v801 = vpack.c.b16 %v537, %v534
  %v802 = vpack.c.b16 %v538, %v535
  %v803 = vpack.c.b16 %v539, %v536
  %v804 = vpack.c.b16 %v543, %v540
  %v805 = vpack.c.b16 %v544, %v541
  %v806 = vpack.c.b16 %v545, %v542
  %v807 = vpack.c.b16 %v549, %v546
  %v808 = vpack.c.b16 %v550, %v547
  %v809 = vpack.c.b16 %v551, %v548
  %v810 = vpack.c.b16 %v555, %v552
  %v811 = vpack.c.b16 %v556, %v553
  %v812 = vpack.c.b16 %v557, %v554
  %v813 = vpack.c.b16 %v561, %v558
  %v814 = vpack.c.b16 %v562, %v559
  %v815 = vpack.c.b16 %v563, %v560
  %v816 = vpack.c.b16 %v567, %v564
  %v817 = vpack.c.b16 %v568, %v565
  %v818 = vpack.c.b16 %v569, %v566
  %v819 = vpack.c.b16 %v573, %v570
  %v820 = vpack.c.b16 %v574, %v571
  %v821 = vpack.c.b16 %v575, %v572
  %v822 = vpack.c.b16 %v579, %v576
  %v823 = vpack.c.b16 %v580, %v577
  %v824 = vpack.c.b16 %v581, %v578
  %v825 = vpack.c.b16 %v585, %v582
  %v826 = vpack.c.b16 %v586, %v583
  %v827 = vpack.c.b16 %v587, %v584
  %v828 = vpack.c.b16 %v591, %v588
  %v829 = vpack.c.b16 %v592, %v589
  %v830 = vpack.c.b16 %v593, %v590
  %v831 = vpack.c.b16 %v597, %v594
  %v832 = vpack.c.b16 %v598, %v595
  %v833 = vpack.c.b16 %v599, %v596
  %v834 = vpack.c.b16 %v603, %v600
  %v835 = vpack.c.b16 %v604, %v601
  %v836 = vpack.c.b16 %v605, %v602
  %v837 = vpack.c.b16 %v609, %v606
  %v838 = vpack.c.b16 %v610, %v607
  %v839 = vpack.c.b16 %v611, %v608
  %v840 = vpack.c.b16 %v615, %v612
  %v841 = vpack.c.b16 %v616, %v613
  %v842 = vpack.c.b16 %v617, %v614
  %v843 = vpack.c.b16 %v621, %v618
  %v844 = vpack.c.b16 %v622, %v619
  %v845 = vpack.c.b16 %v623, %v620
  %v846 = vpack.c.b16 %v627, %v624
  %v847 = vpack.c.b16 %v628, %v625
  %v848 = vpack.c.b16 %v629, %v626
  %v849 = vpack.c.b16 %v633, %v630
  %v850 = vpack.c.b16 %v634, %v631
  %v851 = vpack.c.b16 %v635, %v632
  %v852 = vpack.c.b16 %v639, %v636
  %v853 = vpack.c.b16 %v640, %v637
  %v854 = vpack.c.b16 %v641, %v638
  %v855 = vpack.c.b16 %v645, %v642
  %v856 = vpack.c.b16 %v646, %v643
  %v857 = vpack.c.b16 %v647, %v644
  %v858 = vpack.c.b16 %v651, %v648
  %v859 = vpack.c.b16 %v652, %v649
  %v860 = vpack.c.b16 %v653, %v650
  %v861 = vpack.c.b16 %v657, %v654
  %v862 = vpack.c.b16 %v658, %v655
  %v863 = vpack.c.b16 %v659, %v656
  %v864 = vpack.c.b16 %v663, %v660
  %v865 = vpack.c.b16 %v664, %v661
  %v866 = vpack.c.b16 %v665, %v662
  %v867 = vpack.c.b16 %v669, %v666
  %v868 = vpack.c.b16 %v670, %v667
  %v869 = vpack.c.b16 %v671, %v668
  %v870 = vpack.c.b16 %v675, %v672
  %v871 = vpack.c.b16 %v676, %v673
  %v872 = vpack.c.b16 %v677, %v674
  %v873 = vpack.c.b16 %v681, %v678
  %v874 = vpack.c.b16 %v682, %v679
  %v875 = vpack.c.b16 %v683, %v680
  %v876 = vpack.c.b16 %v687, %v684
  %v877 = vpack.c.b16 %v688, %v685
  %v878 = vpack.c.b16 %v689, %v686
  %v879 = vpack.c.b16 %v693, %v690
  %v880 = vpack.c.b16 %v694, %v691
  %v881 = vpack.c.b16 %v695, %v692
  %v882 = vpack.c.b16 %v699, %v696
  %v883 = vpack.c.b16 %v700, %v697
  %v884 = vpack.c.b16 %v701, %v698
  %v885 = vpack.c.b16 %v705, %v702
  %v886 = vpack.c.b16 %v706, %v703
  %v887 = vpack.c.b16 %v707, %v704
  %v888 = vpack.c.b16 %v711, %v708
  %v889 = vpack.c.b16 %v712, %v709
  %v890 = vpack.c.b16 %v713, %v710
  %v891 = vpack.c.b16 %v717, %v714
  %v892 = vpack.c.b16 %v718, %v715
  %v893 = vpack.c.b16 %v719, %v716
  %v894 = vpack.c.b16 %v723, %v720
  %v895 = vpack.c.b16 %v724, %v721
  %v896 = vpack.c.b16 %v725, %v722
  %v897 = vpack.c.b16 %v729, %v726
  %v898 = vpack.c.b16 %v730, %v727
  %v899 = vpack.c.b16 %v731, %v728
  %v900 = vpack.c.b16 %v735, %v732
  %v901 = vpack.c.b16 %v736, %v733
  %v902 = vpack.c.b16 %v737, %v734
  %v903 = vpack.c.b16 %v741, %v738
  %v904 = vpack.c.b16 %v742, %v739
  %v905 = vpack.c.b16 %v743, %v740
  %v906 = vpack.c.b16 %v747, %v744
  %v907 = vpack.c.b16 %v748, %v745
  %v908 = vpack.c.b16 %v749, %v746
  %v909 = vpack.c.b16 %v753, %v750
  %v910 = vpack.c.b16 %v754, %v751
  %v911 = vpack.c.b16 %v755, %v752
  %v912 = vpack.c.b16 %v759, %v756
  %v913 = vpack.c.b16 %v760, %v757
  %v914 = vpack.c.b16 %v761, %v758
  %v915 = vpack.c.b16 %v765, %v762
  %v916 = vpack.c.b16 %v766, %v763
  %v917 = vpack.c.b16 %v767, %v764
  %v918 = vpack.c.b16 %v771, %v768
  %v919 = vpack.c.b16 %v772, %v769
  %v920 = vpack.c.b16 %v773, %v770
  %vm1068 = vcmask 130048
  %v1070 = vsel %vm1068, %v70, 0
  %1072 = vmatprep.subr.bf16.mxu0 %v775
  %1073 = vmatpush1.bf16.msra.mxu0 %v774
  %1074 = vmatprep.subr.bf16.mxu0 %v778
  %1075 = vmatpush1.bf16.msra.mxu0 %v777
  %1076 = vmatprep.subr.bf16.mxu0 %v781
  %1077 = vmatpush1.bf16.msra.mxu0 %v780
  %1078 = vmatprep.subr.bf16.mxu0 %v784
  %1079 = vmatpush1.bf16.msra.mxu0 %v783
  %1080 = vmatprep.subr.bf16.mxu0 %v787
  %1081 = vmatpush1.bf16.msra.mxu0 %v786
  %1082 = vmatprep.subr.bf16.mxu0 %v790
  %1083 = vmatpush1.bf16.msra.mxu0 %v789
  %1084 = vmatprep.subr.bf16.mxu0 %v793
  %1085 = vmatpush1.bf16.msra.mxu0 %v792
  %1086 = vmatprep.subr.bf16.mxu0 %v796
  %1087 = vmatpush1.bf16.msra.mxu0 %v795
  %1088 = vmatprep.subr.bf16.mxu0 %v799
  %1089 = vmatpush1.bf16.msra.mxu0 %v798
  %1090 = vmatprep.subr.bf16.mxu0 %v802
  %1091 = vmatpush1.bf16.msra.mxu0 %v801
  %1092 = vmatprep.subr.bf16.mxu0 %v805
  %1093 = vmatpush1.bf16.msra.mxu0 %v804
  %1094 = vmatprep.subr.bf16.mxu0 %v808
  %1095 = vmatpush1.bf16.msra.mxu0 %v807
  %1096 = vmatprep.subr.bf16.mxu0 %v811
  %1097 = vmatpush1.bf16.msra.mxu0 %v810
  %1098 = vmatprep.subr.bf16.mxu0 %v814
  %1099 = vmatpush1.bf16.msra.mxu0 %v813
  %1100 = vmatprep.subr.bf16.mxu0 %v817
  %1101 = vmatpush1.bf16.msra.mxu0 %v816
  %1102 = vmatprep.subr.bf16.mxu0 %v820
  %1103 = vmatpush1.bf16.msra.mxu0 %v819
  %1104 = vmatprep.mubr.bf16.mxu0 %v65
  %1105 = vmatmul.mubr.bf16.gmra.mrb[0].mxu0 %v64
  %v1106 = vpop.f32.mrb[0].mxu0
  %v1107 = vadd.f32 %v272, %v1106
  %v1108 = vpop.f32.mrb[0].mxu0
  %v1109 = vadd.f32 %v276, %v1108
  %v1110 = vpop.f32.mrb[0].mxu0
  %v1111 = vadd.f32 %v272, %v1110
  %v1112 = vpop.f32.mrb[0].mxu0
  %v1113 = vadd.f32 %v276, %v1112
  %1114 = vdwg.mxu0
  %1115 = vmatprep.subr.bf16.mxu0 %v823
  %1116 = vmatpush1.bf16.msra.mxu0 %v822
  %1117 = vmatprep.subr.bf16.mxu0 %v826
  %1118 = vmatpush1.bf16.msra.mxu0 %v825
  %1119 = vmatprep.subr.bf16.mxu0 %v829
  %1120 = vmatpush1.bf16.msra.mxu0 %v828
  %1121 = vmatprep.subr.bf16.mxu0 %v832
  %1122 = vmatpush1.bf16.msra.mxu0 %v831
  %1123 = vmatprep.subr.bf16.mxu0 %v835
  %1124 = vmatpush1.bf16.msra.mxu0 %v834
  %1125 = vmatprep.subr.bf16.mxu0 %v838
  %1126 = vmatpush1.bf16.msra.mxu0 %v837
  %1127 = vmatprep.subr.bf16.mxu0 %v841
  %1128 = vmatpush1.bf16.msra.mxu0 %v840
  %1129 = vmatprep.subr.bf16.mxu0 %v844
  %1130 = vmatpush1.bf16.msra.mxu0 %v843
  %1131 = vmatprep.subr.bf16.mxu0 %v847
  %1132 = vmatpush1.bf16.msra.mxu0 %v846
  %1133 = vmatprep.subr.bf16.mxu0 %v850
  %1134 = vmatpush1.bf16.msra.mxu0 %v849
  %1135 = vmatprep.subr.bf16.mxu0 %v853
  %1136 = vmatpush1.bf16.msra.mxu0 %v852
  %1137 = vmatprep.subr.bf16.mxu0 %v856
  %1138 = vmatpush1.bf16.msra.mxu0 %v855
  %1139 = vmatprep.subr.bf16.mxu0 %v859
  %1140 = vmatpush1.bf16.msra.mxu0 %v858
  %1141 = vmatprep.subr.bf16.mxu0 %v862
  %1142 = vmatpush1.bf16.msra.mxu0 %v861
  %1143 = vmatprep.subr.bf16.mxu0 %v865
  %1144 = vmatpush1.bf16.msra.mxu0 %v864
  %1145 = vmatprep.subr.bf16.mxu0 %v868
  %1146 = vmatpush1.bf16.msra.mxu0 %v867
  %1147 = vmatprep.mubr.bf16.mxu0 %v67
  %1148 = vmatmul.mubr.bf16.gmra.mrb[0].mxu0 %v66
  %v1149 = vpop.f32.mrb[0].mxu0
  %v1150 = vadd.f32 %v1107, %v1149
  %v1151 = vpop.f32.mrb[0].mxu0
  %v1152 = vadd.f32 %v1109, %v1151
  %v1153 = vpop.f32.mrb[0].mxu0
  %v1154 = vadd.f32 %v1111, %v1153
  %v1155 = vpop.f32.mrb[0].mxu0
  %v1156 = vadd.f32 %v1113, %v1155
  %1157 = vdwg.mxu0
  %1158 = vmatprep.subr.bf16.mxu0 %v871
  %1159 = vmatpush1.bf16.msra.mxu0 %v870
  %1160 = vmatprep.subr.bf16.mxu0 %v874
  %1161 = vmatpush1.bf16.msra.mxu0 %v873
  %1162 = vmatprep.subr.bf16.mxu0 %v877
  %1163 = vmatpush1.bf16.msra.mxu0 %v876
  %1164 = vmatprep.subr.bf16.mxu0 %v880
  %1165 = vmatpush1.bf16.msra.mxu0 %v879
  %1166 = vmatprep.subr.bf16.mxu0 %v883
  %1167 = vmatpush1.bf16.msra.mxu0 %v882
  %1168 = vmatprep.subr.bf16.mxu0 %v886
  %1169 = vmatpush1.bf16.msra.mxu0 %v885
  %1170 = vmatprep.subr.bf16.mxu0 %v889
  %1171 = vmatpush1.bf16.msra.mxu0 %v888
  %1172 = vmatprep.subr.bf16.mxu0 %v892
  %1173 = vmatpush1.bf16.msra.mxu0 %v891
  %1174 = vmatprep.subr.bf16.mxu0 %v895
  %1175 = vmatpush1.bf16.msra.mxu0 %v894
  %1176 = vmatprep.subr.bf16.mxu0 %v898
  %1177 = vmatpush1.bf16.msra.mxu0 %v897
  %1178 = vmatprep.subr.bf16.mxu0 %v901
  %1179 = vmatpush1.bf16.msra.mxu0 %v900
  %1180 = vmatprep.subr.bf16.mxu0 %v904
  %1181 = vmatpush1.bf16.msra.mxu0 %v903
  %1182 = vmatprep.subr.bf16.mxu0 %v907
  %1183 = vmatpush1.bf16.msra.mxu0 %v906
  %1184 = vmatprep.subr.bf16.mxu0 %v910
  %1185 = vmatpush1.bf16.msra.mxu0 %v909
  %1186 = vmatprep.subr.bf16.mxu0 %v913
  %1187 = vmatpush1.bf16.msra.mxu0 %v912
  %1188 = vmatprep.subr.bf16.mxu0 %v916
  %1189 = vmatpush1.bf16.msra.mxu0 %v915
  %1190 = vmatprep.mubr.bf16.mxu0 %v69
  %1191 = vmatmul.mubr.bf16.gmra.mrb[0].mxu0 %v68
  %v1192 = vpop.f32.mrb[0].mxu0
  %v1193 = vadd.f32 %v1150, %v1192
  %v1194 = vpop.f32.mrb[0].mxu0
  %v1195 = vadd.f32 %v1152, %v1194
  %v1196 = vpop.f32.mrb[0].mxu0
  %v1197 = vadd.f32 %v1154, %v1196
  %v1198 = vpop.f32.mrb[0].mxu0
  %v1199 = vadd.f32 %v1156, %v1198
  %1200 = vdwg.mxu0
  %1201 = vmatprep.subr.bf16.mxu0 %v919
  %1202 = vmatpush1.bf16.msra.mxu0 %v918
  %1203 = vmatprep.subr.bf16.mxu0 0
  %1204 = vmatpush1.bf16.msra.mxu0 0
  %1205 = vmatprep.subr.bf16.mxu0 0
  %1206 = vmatpush1.bf16.msra.mxu0 0
  %1207 = vmatprep.subr.bf16.mxu0 0
  %1208 = vmatpush1.bf16.msra.mxu0 0
  %1209 = vmatprep.subr.bf16.mxu0 0
  %1210 = vmatpush1.bf16.msra.mxu0 0
  %1211 = vmatprep.subr.bf16.mxu0 0
  %1212 = vmatpush1.bf16.msra.mxu0 0
  %1213 = vmatprep.subr.bf16.mxu0 0
  %1214 = vmatpush1.bf16.msra.mxu0 0
  %1215 = vmatprep.subr.bf16.mxu0 0
  %1216 = vmatpush1.bf16.msra.mxu0 0
  %1217 = vmatprep.subr.bf16.mxu0 0
  %1218 = vmatpush1.bf16.msra.mxu0 0
  %1219 = vmatprep.subr.bf16.mxu0 0
  %1220 = vmatpush1.bf16.msra.mxu0 0
  %1221 = vmatprep.subr.bf16.mxu0 0
  %1222 = vmatpush1.bf16.msra.mxu0 0
  %1223 = vmatprep.subr.bf16.mxu0 0
  %1224 = vmatpush1.bf16.msra.mxu0 0
  %1225 = vmatprep.subr.bf16.mxu0 0
  %1226 = vmatpush1.bf16.msra.mxu0 0
  %1227 = vmatprep.subr.bf16.mxu0 0
  %1228 = vmatpush1.bf16.msra.mxu0 0
  %1229 = vmatprep.subr.bf16.mxu0 0
  %1230 = vmatpush1.bf16.msra.mxu0 0
  %1231 = vmatprep.subr.bf16.mxu0 0
  %1232 = vmatpush1.bf16.msra.mxu0 0
  %1233 = vmatprep.mubr.bf16.mxu0 0
  %1234 = vmatmul.mubr.bf16.gmra.mrb[0].mxu0 %v1070
  %v1235 = vpop.f32.mrb[0].mxu0
  %v1236 = vadd.f32 %v1193, %v1235
  %v1237 = vpop.f32.mrb[0].mxu0
  %v1238 = vadd.f32 %v1195, %v1237
  %v1239 = vpop.f32.mrb[0].mxu0
  %v1240 = vadd.f32 %v1197, %v1239
  %v1241 = vpop.f32.mrb[0].mxu0
  %v1242 = vadd.f32 %v1199, %v1241
  %1243 = vdwg.mxu0
  %1244 = vmatprep.subr.bf16.mxu0 0
  %1245 = vmatpush1.bf16.msra.mxu0 %v776
  %1246 = vmatprep.subr.bf16.mxu0 0
  %1247 = vmatpush1.bf16.msra.mxu0 %v779
  %1248 = vmatprep.subr.bf16.mxu0 0
  %1249 = vmatpush1.bf16.msra.mxu0 %v782
  %1250 = vmatprep.subr.bf16.mxu0 0
  %1251 = vmatpush1.bf16.msra.mxu0 %v785
  %1252 = vmatprep.subr.bf16.mxu0 0
  %1253 = vmatpush1.bf16.msra.mxu0 %v788
  %1254 = vmatprep.subr.bf16.mxu0 0
  %1255 = vmatpush1.bf16.msra.mxu0 %v791
  %1256 = vmatprep.subr.bf16.mxu0 0
  %1257 = vmatpush1.bf16.msra.mxu0 %v794
  %1258 = vmatprep.subr.bf16.mxu0 0
  %1259 = vmatpush1.bf16.msra.mxu0 %v797
  %1260 = vmatprep.subr.bf16.mxu0 0
  %1261 = vmatpush1.bf16.msra.mxu0 %v800
  %1262 = vmatprep.subr.bf16.mxu0 0
  %1263 = vmatpush1.bf16.msra.mxu0 %v803
  %1264 = vmatprep.subr.bf16.mxu0 0
  %1265 = vmatpush1.bf16.msra.mxu0 %v806
  %1266 = vmatprep.subr.bf16.mxu0 0
  %1267 = vmatpush1.bf16.msra.mxu0 %v809
  %1268 = vmatprep.subr.bf16.mxu0 0
  %1269 = vmatpush1.bf16.msra.mxu0 %v812
  %1270 = vmatprep.subr.bf16.mxu0 0
  %1271 = vmatpush1.bf16.msra.mxu0 %v815
  %1272 = vmatprep.subr.bf16.mxu0 0
  %1273 = vmatpush1.bf16.msra.mxu0 %v818
  %1274 = vmatprep.subr.bf16.mxu0 0
  %1275 = vmatpush1.bf16.msra.mxu0 %v821
  %1276 = vmatprep.mubr.bf16.mxu0 %v65
  %1277 = vmatmul.mubr.bf16.gmra.mrb[0].mxu0 %v64
  %v1278 = vpop.f32.mrb[0].mxu0
  %v1279 = vadd.f32 %v280, %v1278
  %v1280 = vpop.f32.mrb[0].mxu0
  %v1281 = vpop.f32.mrb[0].mxu0
  %v1282 = vadd.f32 %v280, %v1281
  %v1283 = vpop.f32.mrb[0].mxu0
  %1284 = vdwg.mxu0
  %1285 = vmatprep.subr.bf16.mxu0 0
  %1286 = vmatpush1.bf16.msra.mxu0 %v824
  %1287 = vmatprep.subr.bf16.mxu0 0
  %1288 = vmatpush1.bf16.msra.mxu0 %v827
  %1289 = vmatprep.subr.bf16.mxu0 0
  %1290 = vmatpush1.bf16.msra.mxu0 %v830
  %1291 = vmatprep.subr.bf16.mxu0 0
  %1292 = vmatpush1.bf16.msra.mxu0 %v833
  %1293 = vmatprep.subr.bf16.mxu0 0
  %1294 = vmatpush1.bf16.msra.mxu0 %v836
  %1295 = vmatprep.subr.bf16.mxu0 0
  %1296 = vmatpush1.bf16.msra.mxu0 %v839
  %1297 = vmatprep.subr.bf16.mxu0 0
  %1298 = vmatpush1.bf16.msra.mxu0 %v842
  %1299 = vmatprep.subr.bf16.mxu0 0
  %1300 = vmatpush1.bf16.msra.mxu0 %v845
  %1301 = vmatprep.subr.bf16.mxu0 0
  %1302 = vmatpush1.bf16.msra.mxu0 %v848
  %1303 = vmatprep.subr.bf16.mxu0 0
  %1304 = vmatpush1.bf16.msra.mxu0 %v851
  %1305 = vmatprep.subr.bf16.mxu0 0
  %1306 = vmatpush1.bf16.msra.mxu0 %v854
  %1307 = vmatprep.subr.bf16.mxu0 0
  %1308 = vmatpush1.bf16.msra.mxu0 %v857
  %1309 = vmatprep.subr.bf16.mxu0 0
  %1310 = vmatpush1.bf16.msra.mxu0 %v860
  %1311 = vmatprep.subr.bf16.mxu0 0
  %1312 = vmatpush1.bf16.msra.mxu0 %v863
  %1313 = vmatprep.subr.bf16.mxu0 0
  %1314 = vmatpush1.bf16.msra.mxu0 %v866
  %1315 = vmatprep.subr.bf16.mxu0 0
  %1316 = vmatpush1.bf16.msra.mxu0 %v869
  %1317 = vmatprep.mubr.bf16.mxu0 %v67
  %1318 = vmatmul.mubr.bf16.gmra.mrb[0].mxu0 %v66
  %v1319 = vpop.f32.mrb[0].mxu0
  %v1320 = vadd.f32 %v1279, %v1319
  %v1321 = vpop.f32.mrb[0].mxu0
  %v1322 = vpop.f32.mrb[0].mxu0
  %v1323 = vadd.f32 %v1282, %v1322
  %v1324 = vpop.f32.mrb[0].mxu0
  %1325 = vdwg.mxu0
  %1326 = vmatprep.subr.bf16.mxu0 0
  %1327 = vmatpush1.bf16.msra.mxu0 %v872
  %1328 = vmatprep.subr.bf16.mxu0 0
  %1329 = vmatpush1.bf16.msra.mxu0 %v875
  %1330 = vmatprep.subr.bf16.mxu0 0
  %1331 = vmatpush1.bf16.msra.mxu0 %v878
  %1332 = vmatprep.subr.bf16.mxu0 0
  %1333 = vmatpush1.bf16.msra.mxu0 %v881
  %1334 = vmatprep.subr.bf16.mxu0 0
  %1335 = vmatpush1.bf16.msra.mxu0 %v884
  %1336 = vmatprep.subr.bf16.mxu0 0
  %1337 = vmatpush1.bf16.msra.mxu0 %v887
  %1338 = vmatprep.subr.bf16.mxu0 0
  %1339 = vmatpush1.bf16.msra.mxu0 %v890
  %1340 = vmatprep.subr.bf16.mxu0 0
  %1341 = vmatpush1.bf16.msra.mxu0 %v893
  %1342 = vmatprep.subr.bf16.mxu0 0
  %1343 = vmatpush1.bf16.msra.mxu0 %v896
  %1344 = vmatprep.subr.bf16.mxu0 0
  %1345 = vmatpush1.bf16.msra.mxu0 %v899
  %1346 = vmatprep.subr.bf16.mxu0 0
  %1347 = vmatpush1.bf16.msra.mxu0 %v902
  %1348 = vmatprep.subr.bf16.mxu0 0
  %1349 = vmatpush1.bf16.msra.mxu0 %v905
  %1350 = vmatprep.subr.bf16.mxu0 0
  %1351 = vmatpush1.bf16.msra.mxu0 %v908
  %1352 = vmatprep.subr.bf16.mxu0 0
  %1353 = vmatpush1.bf16.msra.mxu0 %v911
  %1354 = vmatprep.subr.bf16.mxu0 0
  %1355 = vmatpush1.bf16.msra.mxu0 %v914
  %1356 = vmatprep.subr.bf16.mxu0 0
  %1357 = vmatpush1.bf16.msra.mxu0 %v917
  %1358 = vmatprep.mubr.bf16.mxu0 %v69
  %1359 = vmatmul.mubr.bf16.gmra.mrb[0].mxu0 %v68
  %v1360 = vpop.f32.mrb[0].mxu0
  %v1361 = vadd.f32 %v1320, %v1360
  %v1362 = vpop.f32.mrb[0].mxu0
  %v1363 = vpop.f32.mrb[0].mxu0
  %v1364 = vadd.f32 %v1323, %v1363
  %v1365 = vpop.f32.mrb[0].mxu0
  %1366 = vdwg.mxu0
  %1367 = vmatprep.subr.bf16.mxu0 0
  %1368 = vmatpush1.bf16.msra.mxu0 %v920
  %1369 = vmatprep.subr.bf16.mxu0 0
  %1370 = vmatpush1.bf16.msra.mxu0 0
  %1371 = vmatprep.subr.bf16.mxu0 0
  %1372 = vmatpush1.bf16.msra.mxu0 0
  %1373 = vmatprep.subr.bf16.mxu0 0
  %1374 = vmatpush1.bf16.msra.mxu0 0
  %1375 = vmatprep.subr.bf16.mxu0 0
  %1376 = vmatpush1.bf16.msra.mxu0 0
  %1377 = vmatprep.subr.bf16.mxu0 0
  %1378 = vmatpush1.bf16.msra.mxu0 0
  %1379 = vmatprep.subr.bf16.mxu0 0
  %1380 = vmatpush1.bf16.msra.mxu0 0
  %1381 = vmatprep.subr.bf16.mxu0 0
  %1382 = vmatpush1.bf16.msra.mxu0 0
  %1383 = vmatprep.subr.bf16.mxu0 0
  %1384 = vmatpush1.bf16.msra.mxu0 0
  %1385 = vmatprep.subr.bf16.mxu0 0
  %1386 = vmatpush1.bf16.msra.mxu0 0
  %1387 = vmatprep.subr.bf16.mxu0 0
  %1388 = vmatpush1.bf16.msra.mxu0 0
  %1389 = vmatprep.subr.bf16.mxu0 0
  %1390 = vmatpush1.bf16.msra.mxu0 0
  %1391 = vmatprep.subr.bf16.mxu0 0
  %1392 = vmatpush1.bf16.msra.mxu0 0
  %1393 = vmatprep.subr.bf16.mxu0 0
  %1394 = vmatpush1.bf16.msra.mxu0 0
  %1395 = vmatprep.subr.bf16.mxu0 0
  %1396 = vmatpush1.bf16.msra.mxu0 0
  %1397 = vmatprep.subr.bf16.mxu0 0
  %1398 = vmatpush1.bf16.msra.mxu0 0
  %1399 = vmatprep.mubr.bf16.mxu0 0
  %1400 = vmatmul.mubr.bf16.gmra.mrb[0].mxu0 %v1070
  %v1401 = vpop.f32.mrb[0].mxu0
  %v1402 = vadd.f32 %v1361, %v1401
  %v1403 = vpop.f32.mrb[0].mxu0
  %v1404 = vpop.f32.mrb[0].mxu0
  %v1405 = vadd.f32 %v1364, %v1404
  %v1406 = vpop.f32.mrb[0].mxu0
  %1407 = vdwg.mxu0
  %v1408 = vmax.f32 %v1236, 0.0
  %v1409 = vmax.f32 %v1238, 0.0
  %v1410 = vmax.f32 %v1402, 0.0
  %v1411 = vmax.f32 %v1240, 0.0
  %v1412 = vmax.f32 %v1242, 0.0
  %v1413 = vmax.f32 %v1405, 0.0
  %v1414 = vpack.c.bf16 %v1411, %v1408
  %v1415 = vpack.c.bf16 %v1412, %v1409
  %v1416 = vpack.c.bf16 %v1413, %v1410
  %v1417 = vld [vmem:[%s4] sm:$0xf]
  %v1418 = vld [vmem:[%s4 + $0x4] sm:$0xf]
  %v1419 = vld [vmem:[%s4 + $0x8] sm:$0xf]
  %v1420 = vld [vmem:[%s4 + $0xc] sm:$0xf]
  %v1421 = vld [vmem:[%s4 + $0x10] sm:$0xf]
  %v1422 = vld [vmem:[%s4 + $0x14] sm:$0xf]
  %v1423 = vld [vmem:[%s4 + $0x18] sm:$0xf]
  %v1424 = vld [vmem:[%s4 + $0x1c] sm:$0xf]
  %v1425 = vld [vmem:[%s4 + $0x20] sm:$0xf]
  %v1426 = vld [vmem:[%s4 + $0x24] sm:$0xf]
  %v1427 = vld [vmem:[%s4 + $0x28] sm:$0xf]
  %v1428 = vld [vmem:[%s4 + $0x2c] sm:$0xf]
  %v1429 = vld [vmem:[%s4 + $0x30] sm:$0xf]
  %v1430 = vld [vmem:[%s4 + $0x34] sm:$0xf]
  %v1431 = vld [vmem:[%s4 + $0x38] sm:$0xf]
  %v1432 = vld [vmem:[%s4 + $0x3c] sm:$0xf]
  %v1433 = vld [vmem:[%s4 + $0x40] sm:$0xf]
  %v1434 = vld [vmem:[%s4 + $0x44] sm:$0xf]
  %v1435 = vld [vmem:[%s4 + $0x48] sm:$0xf]
  %v1436 = vld [vmem:[%s4 + $0x4c] sm:$0xf]
  %v1437 = vld [vmem:[%s4 + $0x50] sm:$0xf]
  %v1438 = vld [vmem:[%s4 + $0x54] sm:$0xf]
  %v1439 = vld [vmem:[%s4 + $0x58] sm:$0xf]
  %v1440 = vld [vmem:[%s4 + $0x5c] sm:$0xf]
  %v1441 = vld [vmem:[%s4 + $0x60] sm:$0xf]
  %v1442 = vld [vmem:[%s4 + $0x64] sm:$0xf]
  %v1443 = vld [vmem:[%s4 + $0x68] sm:$0xf]
  %v1444 = vld [vmem:[%s4 + $0x6c] sm:$0xf]
  %v1445 = vld [vmem:[%s4 + $0x70] sm:$0xf]
  %v1446 = vld [vmem:[%s4 + $0x74] sm:$0xf]
  %v1447 = vld [vmem:[%s4 + $0x78] sm:$0xf]
  %v1448 = vld [vmem:[%s4 + $0x7c] sm:$0xf]
  %v1449 = vld [vmem:[%s4 + $0x80] sm:$0xf]
  %v1450 = vld [vmem:[%s4 + $0x84] sm:$0xf]
  %v1451 = vld [vmem:[%s4 + $0x88] sm:$0xf]
  %v1452 = vld [vmem:[%s4 + $0x8c] sm:$0xf]
  %v1453 = vld [vmem:[%s4 + $0x90] sm:$0xf]
  %v1454 = vld [vmem:[%s4 + $0x94] sm:$0xf]
  %v1455 = vld [vmem:[%s4 + $0x98] sm:$0xf]
  %v1456 = vld [vmem:[%s4 + $0x9c] sm:$0xf]
  %v1457 = vld [vmem:[%s4 + $0xa0] sm:$0xf]
  %v1458 = vld [vmem:[%s4 + $0xa4] sm:$0xf]
  %v1459 = vld [vmem:[%s4 + $0xa8] sm:$0xf]
  %v1460 = vld [vmem:[%s4 + $0xac] sm:$0xf]
  %v1461 = vld [vmem:[%s4 + $0xb0] sm:$0xf]
  %v1462 = vld [vmem:[%s4 + $0xb4] sm:$0xf]
  %v1463 = vld [vmem:[%s4 + $0xb8] sm:$0xf]
  %v1464 = vld [vmem:[%s4 + $0xbc] sm:$0xf]
  %v1465 = vld [vmem:[%s5] sm:$0x1]
  %v1467 = vlaneseq
  %v1468 = vshrl.u32 %v1467, 7
  %v1469 = vsub.s32 0, %v1468
  %v1470 = vrot.slane %v1465, %v1469
  %v1520 = vunpack.c.l.b16 %v1417
  %v1521 = vunpack.c.l.b16 %v1418
  %v1522 = vunpack.c.l.b16 %v1419
  %v1523 = vunpack.c.l.b16 %v1420
  %v1524 = vunpack.c.l.b16 %v1421
  %v1525 = vunpack.c.l.b16 %v1422
  %v1526 = vunpack.c.l.b16 %v1423
  %v1527 = vunpack.c.l.b16 %v1424
  %v1528 = vunpack.c.l.b16 %v1425
  %v1529 = vunpack.c.l.b16 %v1426
  %v1530 = vunpack.c.l.b16 %v1427
  %v1531 = vunpack.c.l.b16 %v1428
  %v1532 = vunpack.c.l.b16 %v1429
  %v1533 = vunpack.c.l.b16 %v1430
  %v1534 = vunpack.c.l.b16 %v1431
  %v1535 = vunpack.c.l.b16 %v1432
  %v1536 = vunpack.c.l.b16 %v1433
  %v1537 = vunpack.c.l.b16 %v1434
  %v1538 = vunpack.c.l.b16 %v1435
  %v1539 = vunpack.c.l.b16 %v1436
  %v1540 = vunpack.c.l.b16 %v1437
  %v1541 = vunpack.c.l.b16 %v1438
  %v1542 = vunpack.c.l.b16 %v1439
  %v1543 = vunpack.c.l.b16 %v1440
  %v1544 = vunpack.c.l.b16 %v1441
  %v1545 = vunpack.c.l.b16 %v1442
  %v1546 = vunpack.c.l.b16 %v1443
  %v1547 = vunpack.c.l.b16 %v1444
  %v1548 = vunpack.c.l.b16 %v1445
  %v1549 = vunpack.c.l.b16 %v1446
  %v1550 = vunpack.c.l.b16 %v1447
  %v1551 = vunpack.c.l.b16 %v1448
  %v1552 = vunpack.c.l.b16 %v1449
  %v1553 = vunpack.c.l.b16 %v1450
  %v1554 = vunpack.c.l.b16 %v1451
  %v1555 = vunpack.c.l.b16 %v1452
  %v1556 = vunpack.c.l.b16 %v1453
  %v1557 = vunpack.c.l.b16 %v1454
  %v1558 = vunpack.c.l.b16 %v1455
  %v1559 = vunpack.c.l.b16 %v1456
  %v1560 = vunpack.c.l.b16 %v1457
  %v1561 = vunpack.c.l.b16 %v1458
  %v1562 = vunpack.c.l.b16 %v1459
  %v1563 = vunpack.c.l.b16 %v1460
  %v1564 = vunpack.c.l.b16 %v1461
  %v1565 = vunpack.c.l.b16 %v1462
  %v1566 = vunpack.c.l.b16 %v1463
  %v1567 = vunpack.c.l.b16 %v1464
  %v1568 = vpack.c.b16 %v1521, %v1520
  %v1569 = vpack.c.b16 %v1523, %v1522
  %v1570 = vpack.c.b16 %v1525, %v1524
  %v1571 = vpack.c.b16 %v1527, %v1526
  %v1572 = vpack.c.b16 %v1529, %v1528
  %v1573 = vpack.c.b16 %v1531, %v1530
  %v1574 = vpack.c.b16 %v1533, %v1532
  %v1575 = vpack.c.b16 %v1535, %v1534
  %v1576 = vpack.c.b16 %v1537, %v1536
  %v1577 = vpack.c.b16 %v1539, %v1538
  %v1578 = vpack.c.b16 %v1541, %v1540
  %v1579 = vpack.c.b16 %v1543, %v1542
  %v1580 = vpack.c.b16 %v1545, %v1544
  %v1581 = vpack.c.b16 %v1547, %v1546
  %v1582 = vpack.c.b16 %v1549, %v1548
  %v1583 = vpack.c.b16 %v1551, %v1550
  %v1584 = vpack.c.b16 %v1553, %v1552
  %v1585 = vpack.c.b16 %v1555, %v1554
  %v1586 = vpack.c.b16 %v1557, %v1556
  %v1587 = vpack.c.b16 %v1559, %v1558
  %v1588 = vpack.c.b16 %v1561, %v1560
  %v1589 = vpack.c.b16 %v1563, %v1562
  %v1590 = vpack.c.b16 %v1565, %v1564
  %v1591 = vpack.c.b16 %v1567, %v1566
  %1616 = vmatprep.subr.bf16.mxu0 0
  %1617 = vmatpush1.bf16.msra.mxu0 %v1568
  %1618 = vmatprep.subr.bf16.mxu0 0
  %1619 = vmatpush1.bf16.msra.mxu0 %v1569
  %1620 = vmatprep.subr.bf16.mxu0 0
  %1621 = vmatpush1.bf16.msra.mxu0 %v1570
  %1622 = vmatprep.subr.bf16.mxu0 0
  %1623 = vmatpush1.bf16.msra.mxu0 %v1571
  %1624 = vmatprep.subr.bf16.mxu0 0
  %1625 = vmatpush1.bf16.msra.mxu0 %v1572
  %1626 = vmatprep.subr.bf16.mxu0 0
  %1627 = vmatpush1.bf16.msra.mxu0 %v1573
  %1628 = vmatprep.subr.bf16.mxu0 0
  %1629 = vmatpush1.bf16.msra.mxu0 %v1574
  %1630 = vmatprep.subr.bf16.mxu0 0
  %1631 = vmatpush1.bf16.msra.mxu0 %v1575
  %1632 = vmatprep.subr.bf16.mxu0 0
  %1633 = vmatpush1.bf16.msra.mxu0 %v1576
  %1634 = vmatprep.subr.bf16.mxu0 0
  %1635 = vmatpush1.bf16.msra.mxu0 %v1577
  %1636 = vmatprep.subr.bf16.mxu0 0
  %1637 = vmatpush1.bf16.msra.mxu0 %v1578
  %1638 = vmatprep.subr.bf16.mxu0 0
  %1639 = vmatpush1.bf16.msra.mxu0 %v1579
  %1640 = vmatprep.subr.bf16.mxu0 0
  %1641 = vmatpush1.bf16.msra.mxu0 %v1580
  %1642 = vmatprep.subr.bf16.mxu0 0
  %1643 = vmatpush1.bf16.msra.mxu0 %v1581
  %1644 = vmatprep.subr.bf16.mxu0 0
  %1645 = vmatpush1.bf16.msra.mxu0 %v1582
  %1646 = vmatprep.subr.bf16.mxu0 0
  %1647 = vmatpush1.bf16.msra.mxu0 %v1583
  %1648 = vmatprep.mubr.bf16.mxu0 %v1415
  %1649 = vmatmul.mubr.bf16.gmra.mrb[0].mxu0 %v1414
  %v1650 = vpop.f32.mrb[0].mxu0
  %v1651 = vadd.f32 %v1470, %v1650
  %v1652 = vpop.f32.mrb[0].mxu0
  %v1653 = vpop.f32.mrb[0].mxu0
  %v1654 = vadd.f32 %v1470, %v1653
  %v1655 = vpop.f32.mrb[0].mxu0
  %1656 = vdwg.mxu0
  %1657 = vmatprep.subr.bf16.mxu0 0
  %1658 = vmatpush1.bf16.msra.mxu0 %v1584
  %1659 = vmatprep.subr.bf16.mxu0 0
  %1660 = vmatpush1.bf16.msra.mxu0 %v1585
  %1661 = vmatprep.subr.bf16.mxu0 0
  %1662 = vmatpush1.bf16.msra.mxu0 %v1586
  %1663 = vmatprep.subr.bf16.mxu0 0
  %1664 = vmatpush1.bf16.msra.mxu0 %v1587
  %1665 = vmatprep.subr.bf16.mxu0 0
  %1666 = vmatpush1.bf16.msra.mxu0 %v1588
  %1667 = vmatprep.subr.bf16.mxu0 0
  %1668 = vmatpush1.bf16.msra.mxu0 %v1589
  %1669 = vmatprep.subr.bf16.mxu0 0
  %1670 = vmatpush1.bf16.msra.mxu0 %v1590
  %1671 = vmatprep.subr.bf16.mxu0 0
  %1672 = vmatpush1.bf16.msra.mxu0 %v1591
  %1673 = vmatprep.subr.bf16.mxu0 0
  %1674 = vmatpush1.bf16.msra.mxu0 0
  %1675 = vmatprep.subr.bf16.mxu0 0
  %1676 = vmatpush1.bf16.msra.mxu0 0
  %1677 = vmatprep.subr.bf16.mxu0 0
  %1678 = vmatpush1.bf16.msra.mxu0 0
  %1679 = vmatprep.subr.bf16.mxu0 0
  %1680 = vmatpush1.bf16.msra.mxu0 0
  %1681 = vmatprep.subr.bf16.mxu0 0
  %1682 = vmatpush1.bf16.msra.mxu0 0
  %1683 = vmatprep.subr.bf16.mxu0 0
  %1684 = vmatpush1.bf16.msra.mxu0 0
  %1685 = vmatprep.subr.bf16.mxu0 0
  %1686 = vmatpush1.bf16.msra.mxu0 0
  %1687 = vmatprep.subr.bf16.mxu0 0
  %1688 = vmatpush1.bf16.msra.mxu0 0
  %1689 = vmatprep.mubr.bf16.mxu0 0
  %1690 = vmatmul.mubr.bf16.gmra.mrb[0].mxu0 %v1416
  %v1691 = vpop.f32.mrb[0].mxu0
  %v1692 = vadd.f32 %v1651, %v1691
  %v1693 = vpop.f32.mrb[0].mxu0
  %v1694 = vpop.f32.mrb[0].mxu0
  %v1695 = vadd.f32 %v1654, %v1694
  %v1696 = vpop.f32.mrb[0].mxu0
  %1697 = vdwg.mxu0
  %v1698 = vmax.f32 %v1692, 0.0
  %v1699 = vmax.f32 %v1695, 0.0
  %v1700 = vpack.c.bf16 %v1699, %v1698
  %v1701 = vld [vmem:[%s6] sm:$0xf]
  %v1702 = vld [vmem:[%s6 + $0x4] sm:$0xf]
  %v1703 = vld [vmem:[%s6 + $0x8] sm:$0xf]
  %v1704 = vld [vmem:[%s6 + $0xc] sm:$0xf]
  %v1705 = vld [vmem:[%s6 + $0x10] sm:$0xf]
  %v1706 = vld [vmem:[%s6 + $0x14] sm:$0xf]
  %v1707 = vld [vmem:[%s6 + $0x18] sm:$0xf]
  %v1708 = vld [vmem:[%s6 + $0x1c] sm:$0xf]
  %v1709 = vld [vmem:[%s6 + $0x20] sm:$0xf]
  %v1710 = vld [vmem:[%s6 + $0x24] sm:$0xf]
  %v1711 = vld [vmem:[%s6 + $0x28] sm:$0xf]
  %v1712 = vld [vmem:[%s6 + $0x2c] sm:$0xf]
  %v1713 = vld [vmem:[%s6 + $0x30] sm:$0xf]
  %v1714 = vld [vmem:[%s6 + $0x34] sm:$0xf]
  %v1715 = vld [vmem:[%s6 + $0x38] sm:$0xf]
  %v1716 = vld [vmem:[%s6 + $0x3c] sm:$0xf]
  %v1717 = vld [vmem:[%s7] sm:$0x1]
  %v1719 = vlaneseq
  %v1720 = vshrl.u32 %v1719, 7
  %v1721 = vsub.s32 0, %v1720
  %v1722 = vrot.slane %v1717, %v1721
  %v1740 = vunpack.c.l.b16 %v1701
  %v1741 = vunpack.c.l.b16 %v1702
  %v1742 = vunpack.c.l.b16 %v1703
  %v1743 = vunpack.c.l.b16 %v1704
  %v1744 = vunpack.c.l.b16 %v1705
  %v1745 = vunpack.c.l.b16 %v1706
  %v1746 = vunpack.c.l.b16 %v1707
  %v1747 = vunpack.c.l.b16 %v1708
  %v1748 = vunpack.c.l.b16 %v1709
  %v1749 = vunpack.c.l.b16 %v1710
  %v1750 = vunpack.c.l.b16 %v1711
  %v1751 = vunpack.c.l.b16 %v1712
  %v1752 = vunpack.c.l.b16 %v1713
  %v1753 = vunpack.c.l.b16 %v1714
  %v1754 = vunpack.c.l.b16 %v1715
  %v1755 = vunpack.c.l.b16 %v1716
  %v1756 = vpack.c.b16 %v1741, %v1740
  %v1757 = vpack.c.b16 %v1743, %v1742
  %v1758 = vpack.c.b16 %v1745, %v1744
  %v1759 = vpack.c.b16 %v1747, %v1746
  %v1760 = vpack.c.b16 %v1749, %v1748
  %v1761 = vpack.c.b16 %v1751, %v1750
  %v1762 = vpack.c.b16 %v1753, %v1752
  %v1763 = vpack.c.b16 %v1755, %v1754
  %1772 = vmatprep.subr.bf16.mxu0 0
  %1773 = vmatpush1.bf16.msra.mxu0 %v1756
  %1774 = vmatprep.subr.bf16.mxu0 0
  %1775 = vmatpush1.bf16.msra.mxu0 %v1757
  %1776 = vmatprep.subr.bf16.mxu0 0
  %1777 = vmatpush1.bf16.msra.mxu0 %v1758
  %1778 = vmatprep.subr.bf16.mxu0 0
  %1779 = vmatpush1.bf16.msra.mxu0 %v1759
  %1780 = vmatprep.subr.bf16.mxu0 0
  %1781 = vmatpush1.bf16.msra.mxu0 %v1760
  %1782 = vmatprep.subr.bf16.mxu0 0
  %1783 = vmatpush1.bf16.msra.mxu0 %v1761
  %1784 = vmatprep.subr.bf16.mxu0 0
  %1785 = vmatpush1.bf16.msra.mxu0 %v1762
  %1786 = vmatprep.subr.bf16.mxu0 0
  %1787 = vmatpush1.bf16.msra.mxu0 %v1763
  %1788 = vmatprep.subr.bf16.mxu0 0
  %1789 = vmatpush1.bf16.msra.mxu0 0
  %1790 = vmatprep.subr.bf16.mxu0 0
  %1791 = vmatpush1.bf16.msra.mxu0 0
  %1792 = vmatprep.subr.bf16.mxu0 0
  %1793 = vmatpush1.bf16.msra.mxu0 0
  %1794 = vmatprep.subr.bf16.mxu0 0
  %1795 = vmatpush1.bf16.msra.mxu0 0
  %1796 = vmatprep.subr.bf16.mxu0 0
  %1797 = vmatpush1.bf16.msra.mxu0 0
  %1798 = vmatprep.subr.bf16.mxu0 0
  %1799 = vmatpush1.bf16.msra.mxu0 0
  %1800 = vmatprep.subr.bf16.mxu0 0
  %1801 = vmatpush1.bf16.msra.mxu0 0
  %1802 = vmatprep.subr.bf16.mxu0 0
  %1803 = vmatpush1.bf16.msra.mxu0 0
  %1804 = vmatprep.mubr.bf16.mxu0 0
  %1805 = vmatmul.mubr.bf16.gmra.mrb[0].mxu0 %v1700
  %v1806 = vpop.f32.mrb[0].mxu0
  %v1807 = vadd.f32 %v1722, %v1806
  %v1808 = vpop.f32.mrb[0].mxu0
  %v1809 = vpop.f32.mrb[0].mxu0
  %v1810 = vadd.f32 %v1722, %v1809
  %v1811 = vpop.f32.mrb[0].mxu0
  %1812 = vdwg.mxu0
  %v1813 = vmul.f32 %v1807, 0.5
  %v1814 = vmul.f32 %v1810, 0.5
  %v1815 = vmul.f32 %v1813, 1.442695
  %v1816 = vpow.pop %v1815
  %v1817 = vmul.f32 %v1814, 1.442695
  %v1818 = vpow.pop %v1817
  %v1819 = vld [vmem:[%s1] sm:$0xff]
  %v1820 = vld [vmem:[%s1 + $0x8] sm:$0xff]
  %1823 = vrot.lane.b32.xlu0 %v1819, 16
  %v1824 = vpop.permute.xlu0 %1823
  %1825 = vrot.lane.b32.xlu0 %v1820, 16
  %v1826 = vpop.permute.xlu0 %1825
  %v1829 = vmul.f32 %v1816, %v1824
  %v1830 = vmul.f32 %v1818, %v1826
  %1833 = vrot.lane.b32.xlu0 %v1829, 112
  %v1834 = vpop.permute.xlu0 %1833
  %1835 = vrot.lane.b32.xlu0 %v1830, 112
  %v1836 = vpop.permute.xlu0 %1835
  %v1839 = vadd.f32 %v1807, %v1834
  %v1840 = vadd.f32 %v1810, %v1836
  %v1841 = vpack.c.bf16 %v1840, %v1839
  %v1842 = vld [vmem:[%s8] sm:$0xf]
  %v1843 = vld [vmem:[%s8 + $0x4] sm:$0xf]
  %v1844 = vld [vmem:[%s9] sm:$0x1]
  %v1846 = vlaneseq
  %v1847 = vshrl.u32 %v1846, 7
  %v1848 = vsub.s32 0, %v1847
  %v1849 = vrot.slane %v1844, %v1848
  %v1853 = vunpack.c.l.b16 %v1842
  %v1854 = vunpack.c.l.b16 %v1843
  %v1855 = vpack.c.b16 %v1854, %v1853
  %v1858 = vsel %vm1068, %v1841, 0
  %1860 = vmatprep.subr.bf16.mxu0 0
  %1861 = vmatpush1.bf16.msra.mxu0 %v1855
  %1862 = vmatprep.subr.bf16.mxu0 0
  %1863 = vmatpush1.bf16.msra.mxu0 0
  %1864 = vmatprep.subr.bf16.mxu0 0
  %1865 = vmatpush1.bf16.msra.mxu0 0
  %1866 = vmatprep.subr.bf16.mxu0 0
  %1867 = vmatpush1.bf16.msra.mxu0 0
  %1868 = vmatprep.subr.bf16.mxu0 0
  %1869 = vmatpush1.bf16.msra.mxu0 0
  %1870 = vmatprep.subr.bf16.mxu0 0
  %1871 = vmatpush1.bf16.msra.mxu0 0
  %1872 = vmatprep.subr.bf16.mxu0 0
  %1873 = vmatpush1.bf16.msra.mxu0 0
  %1874 = vmatprep.subr.bf16.mxu0 0
  %1875 = vmatpush1.bf16.msra.mxu0 0
  %1876 = vmatprep.subr.bf16.mxu0 0
  %1877 = vmatpush1.bf16.msra.mxu0 0
  %1878 = vmatprep.subr.bf16.mxu0 0
  %1879 = vmatpush1.bf16.msra.mxu0 0
  %1880 = vmatprep.subr.bf16.mxu0 0
  %1881 = vmatpush1.bf16.msra.mxu0 0
  %1882 = vmatprep.subr.bf16.mxu0 0
  %1883 = vmatpush1.bf16.msra.mxu0 0
  %1884 = vmatprep.subr.bf16.mxu0 0
  %1885 = vmatpush1.bf16.msra.mxu0 0
  %1886 = vmatprep.subr.bf16.mxu0 0
  %1887 = vmatpush1.bf16.msra.mxu0 0
  %1888 = vmatprep.subr.bf16.mxu0 0
  %1889 = vmatpush1.bf16.msra.mxu0 0
  %1890 = vmatprep.subr.bf16.mxu0 0
  %1891 = vmatpush1.bf16.msra.mxu0 0
  %1892 = vmatprep.mubr.bf16.mxu0 0
  %1893 = vmatmul.mubr.bf16.gmra.mrb[0].mxu0 %v1858
  %v1894 = vpop.f32.mrb[0].mxu0
  %v1895 = vadd.f32 %v1849, %v1894
  %v1896 = vpop.f32.mrb[0].mxu0
  %v1897 = vpop.f32.mrb[0].mxu0
  %v1898 = vadd.f32 %v1849, %v1897
  %v1899 = vpop.f32.mrb[0].mxu0
  %1900 = vdwg.mxu0
  %v1901 = vmax.f32 %v1895, 0.0
  %v1902 = vmax.f32 %v1898, 0.0
  %v1903 = vpack.c.bf16 %v1902, %v1901
  %v1904 = vld [vmem:[%s10] sm:$0xff]
  %v1905 = vld [vmem:[%s10 + $0x8] sm:$0xf]
  %v1906 = vld [vmem:[%s10 + $0xc] sm:$0xff]
  %v1907 = vld [vmem:[%s10 + $0x14] sm:$0xf]
  %v1908 = vld [vmem:[%s10 + $0x18] sm:$0xff]
  %v1909 = vld [vmem:[%s10 + $0x20] sm:$0xf]
  %v1910 = vld [vmem:[%s10 + $0x24] sm:$0xff]
  %v1911 = vld [vmem:[%s10 + $0x2c] sm:$0xf]
  %v1912 = vld [vmem:[%s10 + $0x30] sm:$0xff]
  %v1913 = vld [vmem:[%s10 + $0x38] sm:$0xf]
  %v1914 = vld [vmem:[%s10 + $0x3c] sm:$0xff]
  %v1915 = vld [vmem:[%s10 + $0x44] sm:$0xf]
  %v1916 = vld [vmem:[%s10 + $0x48] sm:$0xff]
  %v1917 = vld [vmem:[%s10 + $0x50] sm:$0xf]
  %v1918 = vld [vmem:[%s10 + $0x54] sm:$0xff]
  %v1919 = vld [vmem:[%s10 + $0x5c] sm:$0xf]
  %v1920 = vld [vmem:[%s10 + $0x60] sm:$0xff]
  %v1921 = vld [vmem:[%s10 + $0x68] sm:$0xf]
  %v1922 = vld [vmem:[%s10 + $0x6c] sm:$0xff]
  %v1923 = vld [vmem:[%s10 + $0x74] sm:$0xf]
  %v1924 = vld [vmem:[%s10 + $0x78] sm:$0xff]
  %v1925 = vld [vmem:[%s10 + $0x80] sm:$0xf]
  %v1926 = vld [vmem:[%s10 + $0x84] sm:$0xff]
  %v1927 = vld [vmem:[%s10 + $0x8c] sm:$0xf]
  %v1928 = vld [vmem:[%s10 + $0x90] sm:$0xff]
  %v1929 = vld [vmem:[%s10 + $0x98] sm:$0xf]
  %v1930 = vld [vmem:[%s10 + $0x9c] sm:$0xff]
  %v1931 = vld [vmem:[%s10 + $0xa4] sm:$0xf]
  %v1932 = vld [vmem:[%s10 + $0xa8] sm:$0xff]
  %v1933 = vld [vmem:[%s10 + $0xb0] sm:$0xf]
  %v1934 = vld [vmem:[%s10 + $0xb4] sm:$0xff]
  %v1935 = vld [vmem:[%s10 + $0xbc] sm:$0xf]
  %v1936 = vld [vmem:[%s11] sm:$0x7]
  %v1938 = vlaneseq
  %v1939 = vshrl.u32 %v1938, 7
  %v1940 = vsub.s32 0, %v1939
  %v1941 = vrot.slane %v1936, %v1940
  %v1942 = vlaneseq
  %v1943 = vshrl.u32 %v1942, 7
  %v1944 = vsub.s32 1, %v1943
  %v1945 = vrot.slane %v1936, %v1944
  %v1946 = vlaneseq
  %v1947 = vshrl.u32 %v1946, 7
  %v1948 = vsub.s32 2, %v1947
  %v1949 = vrot.slane %v1936, %v1948
  %v1985 = vunpack.c.l.b16 %v1904
  %v1986 = vunpack.c.h.b16 %v1904
  %v1987 = vunpack.c.l.b16 %v1905
  %v1988 = vunpack.c.l.b16 %v1906
  %v1989 = vunpack.c.h.b16 %v1906
  %v1990 = vunpack.c.l.b16 %v1907
  %v1991 = vunpack.c.l.b16 %v1908
  %v1992 = vunpack.c.h.b16 %v1908
  %v1993 = vunpack.c.l.b16 %v1909
  %v1994 = vunpack.c.l.b16 %v1910
  %v1995 = vunpack.c.h.b16 %v1910
  %v1996 = vunpack.c.l.b16 %v1911
  %v1997 = vunpack.c.l.b16 %v1912
  %v1998 = vunpack.c.h.b16 %v1912
  %v1999 = vunpack.c.l.b16 %v1913
  %v2000 = vunpack.c.l.b16 %v1914
  %v2001 = vunpack.c.h.b16 %v1914
  %v2002 = vunpack.c.l.b16 %v1915
  %v2003 = vunpack.c.l.b16 %v1916
  %v2004 = vunpack.c.h.b16 %v1916
  %v2005 = vunpack.c.l.b16 %v1917
  %v2006 = vunpack.c.l.b16 %v1918
  %v2007 = vunpack.c.h.b16 %v1918
  %v2008 = vunpack.c.l.b16 %v1919
  %v2009 = vunpack.c.l.b16 %v1920
  %v2010 = vunpack.c.h.b16 %v1920
  %v2011 = vunpack.c.l.b16 %v1921
  %v2012 = vunpack.c.l.b16 %v1922
  %v2013 = vunpack.c.h.b16 %v1922
  %v2014 = vunpack.c.l.b16 %v1923
  %v2015 = vunpack.c.l.b16 %v1924
  %v2016 = vunpack.c.h.b16 %v1924
  %v2017 = vunpack.c.l.b16 %v1925
  %v2018 = vunpack.c.l.b16 %v1926
  %v2019 = vunpack.c.h.b16 %v1926
  %v2020 = vunpack.c.l.b16 %v1927
  %v2021 = vunpack.c.l.b16 %v1928
  %v2022 = vunpack.c.h.b16 %v1928
  %v2023 = vunpack.c.l.b16 %v1929
  %v2024 = vunpack.c.l.b16 %v1930
  %v2025 = vunpack.c.h.b16 %v1930
  %v2026 = vunpack.c.l.b16 %v1931
  %v2027 = vunpack.c.l.b16 %v1932
  %v2028 = vunpack.c.h.b16 %v1932
  %v2029 = vunpack.c.l.b16 %v1933
  %v2030 = vunpack.c.l.b16 %v1934
  %v2031 = vunpack.c.h.b16 %v1934
  %v2032 = vunpack.c.l.b16 %v1935
  %v2033 = vpack.c.b16 %v1988, %v1985
  %v2034 = vpack.c.b16 %v1989, %v1986
  %v2035 = vpack.c.b16 %v1990, %v1987
  %v2036 = vpack.c.b16 %v1994, %v1991
  %v2037 = vpack.c.b16 %v1995, %v1992
  %v2038 = vpack.c.b16 %v1996, %v1993
  %v2039 = vpack.c.b16 %v2000, %v1997
  %v2040 = vpack.c.b16 %v2001, %v1998
  %v2041 = vpack.c.b16 %v2002, %v1999
  %v2042 = vpack.c.b16 %v2006, %v2003
  %v2043 = vpack.c.b16 %v2007, %v2004
  %v2044 = vpack.c.b16 %v2008, %v2005
  %v2045 = vpack.c.b16 %v2012, %v2009
  %v2046 = vpack.c.b16 %v2013, %v2010
  %v2047 = vpack.c.b16 %v2014, %v2011
  %v2048 = vpack.c.b16 %v2018, %v2015
  %v2049 = vpack.c.b16 %v2019, %v2016
  %v2050 = vpack.c.b16 %v2020, %v2017
  %v2051 = vpack.c.b16 %v2024, %v2021
  %v2052 = vpack.c.b16 %v2025, %v2022
  %v2053 = vpack.c.b16 %v2026, %v2023
  %v2054 = vpack.c.b16 %v2030, %v2027
  %v2055 = vpack.c.b16 %v2031, %v2028
  %v2056 = vpack.c.b16 %v2032, %v2029
  %2081 = vmatprep.subr.bf16.mxu0 %v2034
  %2082 = vmatpush1.bf16.msra.mxu0 %v2033
  %2083 = vmatprep.subr.bf16.mxu0 %v2037
  %2084 = vmatpush1.bf16.msra.mxu0 %v2036
  %2085 = vmatprep.subr.bf16.mxu0 %v2040
  %2086 = vmatpush1.bf16.msra.mxu0 %v2039
  %2087 = vmatprep.subr.bf16.mxu0 %v2043
  %2088 = vmatpush1.bf16.msra.mxu0 %v2042
  %2089 = vmatprep.subr.bf16.mxu0 %v2046
  %2090 = vmatpush1.bf16.msra.mxu0 %v2045
  %2091 = vmatprep.subr.bf16.mxu0 %v2049
  %2092 = vmatpush1.bf16.msra.mxu0 %v2048
  %2093 = vmatprep.subr.bf16.mxu0 %v2052
  %2094 = vmatpush1.bf16.msra.mxu0 %v2051
  %2095 = vmatprep.subr.bf16.mxu0 %v2055
  %2096 = vmatpush1.bf16.msra.mxu0 %v2054
  %2097 = vmatprep.subr.bf16.mxu0 0
  %2098 = vmatpush1.bf16.msra.mxu0 0
  %2099 = vmatprep.subr.bf16.mxu0 0
  %2100 = vmatpush1.bf16.msra.mxu0 0
  %2101 = vmatprep.subr.bf16.mxu0 0
  %2102 = vmatpush1.bf16.msra.mxu0 0
  %2103 = vmatprep.subr.bf16.mxu0 0
  %2104 = vmatpush1.bf16.msra.mxu0 0
  %2105 = vmatprep.subr.bf16.mxu0 0
  %2106 = vmatpush1.bf16.msra.mxu0 0
  %2107 = vmatprep.subr.bf16.mxu0 0
  %2108 = vmatpush1.bf16.msra.mxu0 0
  %2109 = vmatprep.subr.bf16.mxu0 0
  %2110 = vmatpush1.bf16.msra.mxu0 0
  %2111 = vmatprep.subr.bf16.mxu0 0
  %2112 = vmatpush1.bf16.msra.mxu0 0
  %2113 = vmatprep.mubr.bf16.mxu0 0
  %2114 = vmatmul.mubr.bf16.gmra.mrb[0].mxu0 %v1903
  %v2115 = vpop.f32.mrb[0].mxu0
  %v2116 = vadd.f32 %v1941, %v2115
  %v2117 = vpop.f32.mrb[0].mxu0
  %v2118 = vadd.f32 %v1945, %v2117
  %v2119 = vpop.f32.mrb[0].mxu0
  %v2120 = vadd.f32 %v1941, %v2119
  %v2121 = vpop.f32.mrb[0].mxu0
  %v2122 = vadd.f32 %v1945, %v2121
  %2123 = vdwg.mxu0
  %2124 = vmatprep.subr.bf16.mxu0 0
  %2125 = vmatpush1.bf16.msra.mxu0 %v2035
  %2126 = vmatprep.subr.bf16.mxu0 0
  %2127 = vmatpush1.bf16.msra.mxu0 %v2038
  %2128 = vmatprep.subr.bf16.mxu0 0
  %2129 = vmatpush1.bf16.msra.mxu0 %v2041
  %2130 = vmatprep.subr.bf16.mxu0 0
  %2131 = vmatpush1.bf16.msra.mxu0 %v2044
  %2132 = vmatprep.subr.bf16.mxu0 0
  %2133 = vmatpush1.bf16.msra.mxu0 %v2047
  %2134 = vmatprep.subr.bf16.mxu0 0
  %2135 = vmatpush1.bf16.msra.mxu0 %v2050
  %2136 = vmatprep.subr.bf16.mxu0 0
  %2137 = vmatpush1.bf16.msra.mxu0 %v2053
  %2138 = vmatprep.subr.bf16.mxu0 0
  %2139 = vmatpush1.bf16.msra.mxu0 %v2056
  %2140 = vmatprep.subr.bf16.mxu0 0
  %2141 = vmatpush1.bf16.msra.mxu0 0
  %2142 = vmatprep.subr.bf16.mxu0 0
  %2143 = vmatpush1.bf16.msra.mxu0 0
  %2144 = vmatprep.subr.bf16.mxu0 0
  %2145 = vmatpush1.bf16.msra.mxu0 0
  %2146 = vmatprep.subr.bf16.mxu0 0
  %2147 = vmatpush1.bf16.msra.mxu0 0
  %2148 = vmatprep.subr.bf16.mxu0 0
  %2149 = vmatpush1.bf16.msra.mxu0 0
  %2150 = vmatprep.subr.bf16.mxu0 0
  %2151 = vmatpush1.bf16.msra.mxu0 0
  %2152 = vmatprep.subr.bf16.mxu0 0
  %2153 = vmatpush1.bf16.msra.mxu0 0
  %2154 = vmatprep.subr.bf16.mxu0 0
  %2155 = vmatpush1.bf16.msra.mxu0 0
  %2156 = vmatprep.mubr.bf16.mxu0 0
  %2157 = vmatmul.mubr.bf16.gmra.mrb[0].mxu0 %v1903
  %v2158 = vpop.f32.mrb[0].mxu0
  %v2159 = vadd.f32 %v1949, %v2158
  %v2160 = vpop.f32.mrb[0].mxu0
  %v2161 = vpop.f32.mrb[0].mxu0
  %v2162 = vadd.f32 %v1949, %v2161
  %v2163 = vpop.f32.mrb[0].mxu0
  %2164 = vdwg.mxu0
  %v2165 = vmax.f32 %v2116, 0.0
  %v2166 = vmax.f32 %v2118, 0.0
  %v2167 = vmax.f32 %v2159, 0.0
  %v2168 = vmax.f32 %v2120, 0.0
  %v2169 = vmax.f32 %v2122, 0.0
  %v2170 = vmax.f32 %v2162, 0.0
  %v2171 = vpack.c.bf16 %v2168, %v2165
  %v2172 = vpack.c.bf16 %v2169, %v2166
  %v2173 = vpack.c.bf16 %v2170, %v2167
  %v2174 = vld [vmem:[%s12] sm:$0xff]
  %v2175 = vld [vmem:[%s12 + $0x8] sm:$0xff]
  %v2176 = vld [vmem:[%s12 + $0x10] sm:$0xff]
  %v2177 = vld [vmem:[%s12 + $0x18] sm:$0xf]
  %v2178 = vld [vmem:[%s12 + $0x1c] sm:$0xff]
  %v2179 = vld [vmem:[%s12 + $0x24] sm:$0xff]
  %v2180 = vld [vmem:[%s12 + $0x2c] sm:$0xff]
  %v2181 = vld [vmem:[%s12 + $0x34] sm:$0xf]
  %v2182 = vld [vmem:[%s12 + $0x38] sm:$0xff]
  %v2183 = vld [vmem:[%s12 + $0x40] sm:$0xff]
  %v2184 = vld [vmem:[%s12 + $0x48] sm:$0xff]
  %v2185 = vld [vmem:[%s12 + $0x50] sm:$0xf]
  %v2186 = vld [vmem:[%s12 + $0x54] sm:$0xff]
  %v2187 = vld [vmem:[%s12 + $0x5c] sm:$0xff]
  %v2188 = vld [vmem:[%s12 + $0x64] sm:$0xff]
  %v2189 = vld [vmem:[%s12 + $0x6c] sm:$0xf]
  %v2190 = vld [vmem:[%s12 + $0x70] sm:$0xff]
  %v2191 = vld [vmem:[%s12 + $0x78] sm:$0xff]
  %v2192 = vld [vmem:[%s12 + $0x80] sm:$0xff]
  %v2193 = vld [vmem:[%s12 + $0x88] sm:$0xf]
  %v2194 = vld [vmem:[%s12 + $0x8c] sm:$0xff]
  %v2195 = vld [vmem:[%s12 + $0x94] sm:$0xff]
  %v2196 = vld [vmem:[%s12 + $0x9c] sm:$0xff]
  %v2197 = vld [vmem:[%s12 + $0xa4] sm:$0xf]
  %v2198 = vld [vmem:[%s12 + $0xa8] sm:$0xff]
  %v2199 = vld [vmem:[%s12 + $0xb0] sm:$0xff]
  %v2200 = vld [vmem:[%s12 + $0xb8] sm:$0xff]
  %v2201 = vld [vmem:[%s12 + $0xc0] sm:$0xf]
  %v2202 = vld [vmem:[%s12 + $0xc4] sm:$0xff]
  %v2203 = vld [vmem:[%s12 + $0xcc] sm:$0xff]
  %v2204 = vld [vmem:[%s12 + $0xd4] sm:$0xff]
  %v2205 = vld [vmem:[%s12 + $0xdc] sm:$0xf]
  %v2206 = vld [vmem:[%s12 + $0xe0] sm:$0xff]
  %v2207 = vld [vmem:[%s12 + $0xe8] sm:$0xff]
  %v2208 = vld [vmem:[%s12 + $0xf0] sm:$0xff]
  %v2209 = vld [vmem:[%s12 + $0xf8] sm:$0xf]
  %v2210 = vld [vmem:[%s12 + $0xfc] sm:$0xff]
  %v2211 = vld [vmem:[%s12 + $0x104] sm:$0xff]
  %v2212 = vld [vmem:[%s12 + $0x10c] sm:$0xff]
  %v2213 = vld [vmem:[%s12 + $0x114] sm:$0xf]
  %v2214 = vld [vmem:[%s12 + $0x118] sm:$0xff]
  %v2215 = vld [vmem:[%s12 + $0x120] sm:$0xff]
  %v2216 = vld [vmem:[%s12 + $0x128] sm:$0xff]
  %v2217 = vld [vmem:[%s12 + $0x130] sm:$0xf]
  %v2218 = vld [vmem:[%s12 + $0x134] sm:$0xff]
  %v2219 = vld [vmem:[%s12 + $0x13c] sm:$0xff]
  %v2220 = vld [vmem:[%s12 + $0x144] sm:$0xff]
  %v2221 = vld [vmem:[%s12 + $0x14c] sm:$0xf]
  %v2222 = vld [vmem:[%s12 + $0x150] sm:$0xff]
  %v2223 = vld [vmem:[%s12 + $0x158] sm:$0xff]
  %v2224 = vld [vmem:[%s12 + $0x160] sm:$0xff]
  %v2225 = vld [vmem:[%s12 + $0x168] sm:$0xf]
  %v2226 = vld [vmem:[%s12 + $0x16c] sm:$0xff]
  %v2227 = vld [vmem:[%s12 + $0x174] sm:$0xff]
  %v2228 = vld [vmem:[%s12 + $0x17c] sm:$0xff]
  %v2229 = vld [vmem:[%s12 + $0x184] sm:$0xf]
  %v2230 = vld [vmem:[%s12 + $0x188] sm:$0xff]
  %v2231 = vld [vmem:[%s12 + $0x190] sm:$0xff]
  %v2232 = vld [vmem:[%s12 + $0x198] sm:$0xff]
  %v2233 = vld [vmem:[%s12 + $0x1a0] sm:$0xf]
  %v2234 = vld [vmem:[%s12 + $0x1a4] sm:$0xff]
  %v2235 = vld [vmem:[%s12 + $0x1ac] sm:$0xff]
  %v2236 = vld [vmem:[%s12 + $0x1b4] sm:$0xff]
  %v2237 = vld [vmem:[%s12 + $0x1bc] sm:$0xf]
  %v2238 = vld [vmem:[%s12 + $0x1c0] sm:$0xff]
  %v2239 = vld [vmem:[%s12 + $0x1c8] sm:$0xff]
  %v2240 = vld [vmem:[%s12 + $0x1d0] sm:$0xff]
  %v2241 = vld [vmem:[%s12 + $0x1d8] sm:$0xf]
  %v2242 = vld [vmem:[%s12 + $0x1dc] sm:$0xff]
  %v2243 = vld [vmem:[%s12 + $0x1e4] sm:$0xff]
  %v2244 = vld [vmem:[%s12 + $0x1ec] sm:$0xff]
  %v2245 = vld [vmem:[%s12 + $0x1f4] sm:$0xf]
  %v2246 = vld [vmem:[%s12 + $0x1f8] sm:$0xff]
  %v2247 = vld [vmem:[%s12 + $0x200] sm:$0xff]
  %v2248 = vld [vmem:[%s12 + $0x208] sm:$0xff]
  %v2249 = vld [vmem:[%s12 + $0x210] sm:$0xf]
  %v2250 = vld [vmem:[%s12 + $0x214] sm:$0xff]
  %v2251 = vld [vmem:[%s12 + $0x21c] sm:$0xff]
  %v2252 = vld [vmem:[%s12 + $0x224] sm:$0xff]
  %v2253 = vld [vmem:[%s12 + $0x22c] sm:$0xf]
  %v2254 = vld [vmem:[%s12 + $0x230] sm:$0xff]
  %v2255 = vld [vmem:[%s12 + $0x238] sm:$0xff]
  %v2256 = vld [vmem:[%s12 + $0x240] sm:$0xff]
  %v2257 = vld [vmem:[%s12 + $0x248] sm:$0xf]
  %v2258 = vld [vmem:[%s12 + $0x24c] sm:$0xff]
  %v2259 = vld [vmem:[%s12 + $0x254] sm:$0xff]
  %v2260 = vld [vmem:[%s12 + $0x25c] sm:$0xff]
  %v2261 = vld [vmem:[%s12 + $0x264] sm:$0xf]
  %v2262 = vld [vmem:[%s12 + $0x268] sm:$0xff]
  %v2263 = vld [vmem:[%s12 + $0x270] sm:$0xff]
  %v2264 = vld [vmem:[%s12 + $0x278] sm:$0xff]
  %v2265 = vld [vmem:[%s12 + $0x280] sm:$0xf]
  %v2266 = vld [vmem:[%s12 + $0x284] sm:$0xff]
  %v2267 = vld [vmem:[%s12 + $0x28c] sm:$0xff]
  %v2268 = vld [vmem:[%s12 + $0x294] sm:$0xff]
  %v2269 = vld [vmem:[%s12 + $0x29c] sm:$0xf]
  %v2270 = vld [vmem:[%s12 + $0x2a0] sm:$0xff]
  %v2271 = vld [vmem:[%s12 + $0x2a8] sm:$0xff]
  %v2272 = vld [vmem:[%s12 + $0x2b0] sm:$0xff]
  %v2273 = vld [vmem:[%s12 + $0x2b8] sm:$0xf]
  %v2274 = vld [vmem:[%s12 + $0x2bc] sm:$0xff]
  %v2275 = vld [vmem:[%s12 + $0x2c4] sm:$0xff]
  %v2276 = vld [vmem:[%s12 + $0x2cc] sm:$0xff]
  %v2277 = vld [vmem:[%s12 + $0x2d4] sm:$0xf]
  %v2278 = vld [vmem:[%s12 + $0x2d8] sm:$0xff]
  %v2279 = vld [vmem:[%s12 + $0x2e0] sm:$0xff]
  %v2280 = vld [vmem:[%s12 + $0x2e8] sm:$0xff]
  %v2281 = vld [vmem:[%s12 + $0x2f0] sm:$0xf]
  %v2282 = vld [vmem:[%s12 + $0x2f4] sm:$0xff]
  %v2283 = vld [vmem:[%s12 + $0x2fc] sm:$0xff]
  %v2284 = vld [vmem:[%s12 + $0x304] sm:$0xff]
  %v2285 = vld [vmem:[%s12 + $0x30c] sm:$0xf]
  %v2286 = vld [vmem:[%s12 + $0x310] sm:$0xff]
  %v2287 = vld [vmem:[%s12 + $0x318] sm:$0xff]
  %v2288 = vld [vmem:[%s12 + $0x320] sm:$0xff]
  %v2289 = vld [vmem:[%s12 + $0x328] sm:$0xf]
  %v2290 = vld [vmem:[%s12 + $0x32c] sm:$0xff]
  %v2291 = vld [vmem:[%s12 + $0x334] sm:$0xff]
  %v2292 = vld [vmem:[%s12 + $0x33c] sm:$0xff]
  %v2293 = vld [vmem:[%s12 + $0x344] sm:$0xf]
  %v2294 = vld [vmem:[%s12 + $0x348] sm:$0xff]
  %v2295 = vld [vmem:[%s12 + $0x350] sm:$0xff]
  %v2296 = vld [vmem:[%s12 + $0x358] sm:$0xff]
  %v2297 = vld [vmem:[%s12 + $0x360] sm:$0xf]
  %v2298 = vld [vmem:[%s12 + $0x364] sm:$0xff]
  %v2299 = vld [vmem:[%s12 + $0x36c] sm:$0xff]
  %v2300 = vld [vmem:[%s12 + $0x374] sm:$0xff]
  %v2301 = vld [vmem:[%s12 + $0x37c] sm:$0xf]
  %v2302 = vld [vmem:[%s12 + $0x380] sm:$0xff]
  %v2303 = vld [vmem:[%s12 + $0x388] sm:$0xff]
  %v2304 = vld [vmem:[%s12 + $0x390] sm:$0xff]
  %v2305 = vld [vmem:[%s12 + $0x398] sm:$0xf]
  %v2306 = vld [vmem:[%s12 + $0x39c] sm:$0xff]
  %v2307 = vld [vmem:[%s12 + $0x3a4] sm:$0xff]
  %v2308 = vld [vmem:[%s12 + $0x3ac] sm:$0xff]
  %v2309 = vld [vmem:[%s12 + $0x3b4] sm:$0xf]
  %v2310 = vld [vmem:[%s12 + $0x3b8] sm:$0xff]
  %v2311 = vld [vmem:[%s12 + $0x3c0] sm:$0xff]
  %v2312 = vld [vmem:[%s12 + $0x3c8] sm:$0xff]
  %v2313 = vld [vmem:[%s12 + $0x3d0] sm:$0xf]
  %v2314 = vld [vmem:[%s12 + $0x3d4] sm:$0xff]
  %v2315 = vld [vmem:[%s12 + $0x3dc] sm:$0xff]
  %v2316 = vld [vmem:[%s12 + $0x3e4] sm:$0xff]
  %v2317 = vld [vmem:[%s12 + $0x3ec] sm:$0xf]
  %v2318 = vld [vmem:[%s12 + $0x3f0] sm:$0xff]
  %v2319 = vld [vmem:[%s12 + $0x3f8] sm:$0xff]
  %v2320 = vld [vmem:[%s12 + $0x400] sm:$0xff]
  %v2321 = vld [vmem:[%s12 + $0x408] sm:$0xf]
  %v2322 = vld [vmem:[%s12 + $0x40c] sm:$0xff]
  %v2323 = vld [vmem:[%s12 + $0x414] sm:$0xff]
  %v2324 = vld [vmem:[%s12 + $0x41c] sm:$0xff]
  %v2325 = vld [vmem:[%s12 + $0x424] sm:$0xf]
  %v2326 = vld [vmem:[%s12 + $0x428] sm:$0xff]
  %v2327 = vld [vmem:[%s12 + $0x430] sm:$0xff]
  %v2328 = vld [vmem:[%s12 + $0x438] sm:$0xff]
  %v2329 = vld [vmem:[%s12 + $0x440] sm:$0xf]
  %v2330 = vld [vmem:[%s12 + $0x444] sm:$0xff]
  %v2331 = vld [vmem:[%s12 + $0x44c] sm:$0xff]
  %v2332 = vld [vmem:[%s12 + $0x454] sm:$0xff]
  %v2333 = vld [vmem:[%s12 + $0x45c] sm:$0xf]
  %v2334 = vld [vmem:[%s12 + $0x460] sm:$0xff]
  %v2335 = vld [vmem:[%s12 + $0x468] sm:$0xff]
  %v2336 = vld [vmem:[%s12 + $0x470] sm:$0xff]
  %v2337 = vld [vmem:[%s12 + $0x478] sm:$0xf]
  %v2338 = vld [vmem:[%s12 + $0x47c] sm:$0xff]
  %v2339 = vld [vmem:[%s12 + $0x484] sm:$0xff]
  %v2340 = vld [vmem:[%s12 + $0x48c] sm:$0xff]
  %v2341 = vld [vmem:[%s12 + $0x494] sm:$0xf]
  %v2342 = vld [vmem:[%s12 + $0x498] sm:$0xff]
  %v2343 = vld [vmem:[%s12 + $0x4a0] sm:$0xff]
  %v2344 = vld [vmem:[%s12 + $0x4a8] sm:$0xff]
  %v2345 = vld [vmem:[%s12 + $0x4b0] sm:$0xf]
  %v2346 = vld [vmem:[%s12 + $0x4b4] sm:$0xff]
  %v2347 = vld [vmem:[%s12 + $0x4bc] sm:$0xff]
  %v2348 = vld [vmem:[%s12 + $0x4c4] sm:$0xff]
  %v2349 = vld [vmem:[%s12 + $0x4cc] sm:$0xf]
  %v2350 = vld [vmem:[%s12 + $0x4d0] sm:$0xff]
  %v2351 = vld [vmem:[%s12 + $0x4d8] sm:$0xff]
  %v2352 = vld [vmem:[%s12 + $0x4e0] sm:$0xff]
  %v2353 = vld [vmem:[%s12 + $0x4e8] sm:$0xf]
  %v2354 = vld [vmem:[%s12 + $0x4ec] sm:$0xff]
  %v2355 = vld [vmem:[%s12 + $0x4f4] sm:$0xff]
  %v2356 = vld [vmem:[%s12 + $0x4fc] sm:$0xff]
  %v2357 = vld [vmem:[%s12 + $0x504] sm:$0xf]
  %v2358 = vld [vmem:[%s12 + $0x508] sm:$0xff]
  %v2359 = vld [vmem:[%s12 + $0x510] sm:$0xff]
  %v2360 = vld [vmem:[%s12 + $0x518] sm:$0xff]
  %v2361 = vld [vmem:[%s12 + $0x520] sm:$0xf]
  %v2362 = vld [vmem:[%s12 + $0x524] sm:$0xff]
  %v2363 = vld [vmem:[%s12 + $0x52c] sm:$0xff]
  %v2364 = vld [vmem:[%s12 + $0x534] sm:$0xff]
  %v2365 = vld [vmem:[%s12 + $0x53c] sm:$0xf]
  %v2366 = vld [vmem:[%s13] sm:$0x7f]
  %v2368 = vlaneseq
  %v2369 = vshrl.u32 %v2368, 7
  %v2370 = vsub.s32 0, %v2369
  %v2371 = vrot.slane %v2366, %v2370
  %v2372 = vlaneseq
  %v2373 = vshrl.u32 %v2372, 7
  %v2374 = vsub.s32 1, %v2373
  %v2375 = vrot.slane %v2366, %v2374
  %v2376 = vlaneseq
  %v2377 = vshrl.u32 %v2376, 7
  %v2378 = vsub.s32 2, %v2377
  %v2379 = vrot.slane %v2366, %v2378
  %v2380 = vlaneseq
  %v2381 = vshrl.u32 %v2380, 7
  %v2382 = vsub.s32 3, %v2381
  %v2383 = vrot.slane %v2366, %v2382
  %v2384 = vlaneseq
  %v2385 = vshrl.u32 %v2384, 7
  %v2386 = vsub.s32 4, %v2385
  %v2387 = vrot.slane %v2366, %v2386
  %v2388 = vlaneseq
  %v2389 = vshrl.u32 %v2388, 7
  %v2390 = vsub.s32 5, %v2389
  %v2391 = vrot.slane %v2366, %v2390
  %v2392 = vlaneseq
  %v2393 = vshrl.u32 %v2392, 7
  %v2394 = vsub.s32 6, %v2393
  %v2395 = vrot.slane %v2366, %v2394
  %v2595 = vunpack.c.l.b16 %v2174
  %v2596 = vunpack.c.h.b16 %v2174
  %v2597 = vunpack.c.l.b16 %v2175
  %v2598 = vunpack.c.h.b16 %v2175
  %v2599 = vunpack.c.l.b16 %v2176
  %v2600 = vunpack.c.h.b16 %v2176
  %v2601 = vunpack.c.l.b16 %v2177
  %v2602 = vunpack.c.l.b16 %v2178
  %v2603 = vunpack.c.h.b16 %v2178
  %v2604 = vunpack.c.l.b16 %v2179
  %v2605 = vunpack.c.h.b16 %v2179
  %v2606 = vunpack.c.l.b16 %v2180
  %v2607 = vunpack.c.h.b16 %v2180
  %v2608 = vunpack.c.l.b16 %v2181
  %v2609 = vunpack.c.l.b16 %v2182
  %v2610 = vunpack.c.h.b16 %v2182
  %v2611 = vunpack.c.l.b16 %v2183
  %v2612 = vunpack.c.h.b16 %v2183
  %v2613 = vunpack.c.l.b16 %v2184
  %v2614 = vunpack.c.h.b16 %v2184
  %v2615 = vunpack.c.l.b16 %v2185
  %v2616 = vunpack.c.l.b16 %v2186
  %v2617 = vunpack.c.h.b16 %v2186
  %v2618 = vunpack.c.l.b16 %v2187
  %v2619 = vunpack.c.h.b16 %v2187
  %v2620 = vunpack.c.l.b16 %v2188
  %v2621 = vunpack.c.h.b16 %v2188
  %v2622 = vunpack.c.l.b16 %v2189
  %v2623 = vunpack.c.l.b16 %v2190
  %v2624 = vunpack.c.h.b16 %v2190
  %v2625 = vunpack.c.l.b16 %v2191
  %v2626 = vunpack.c.h.b16 %v2191
  %v2627 = vunpack.c.l.b16 %v2192
  %v2628 = vunpack.c.h.b16 %v2192
  %v2629 = vunpack.c.l.b16 %v2193
  %v2630 = vunpack.c.l.b16 %v2194
  %v2631 = vunpack.c.h.b16 %v2194
  %v2632 = vunpack.c.l.b16 %v2195
  %v2633 = vunpack.c.h.b16 %v2195
  %v2634 = vunpack.c.l.b16 %v2196
  %v2635 = vunpack.c.h.b16 %v2196
  %v2636 = vunpack.c.l.b16 %v2197
  %v2637 = vunpack.c.l.b16 %v2198
  %v2638 = vunpack.c.h.b16 %v2198
  %v2639 = vunpack.c.l.b16 %v2199
  %v2640 = vunpack.c.h.b16 %v2199
  %v2641 = vunpack.c.l.b16 %v2200
  %v2642 = vunpack.c.h.b16 %v2200
  %v2643 = vunpack.c.l.b16 %v2201
  %v2644 = vunpack.c.l.b16 %v2202
  %v2645 = vunpack.c.h.b16 %v2202
  %v2646 = vunpack.c.l.b16 %v2203
  %v2647 = vunpack.c.h.b16 %v2203
  %v2648 = vunpack.c.l.b16 %v2204
  %v2649 = vunpack.c.h.b16 %v2204
  %v2650 = vunpack.c.l.b16 %v2205
  %v2651 = vunpack.c.l.b16 %v2206
  %v2652 = vunpack.c.h.b16 %v2206
  %v2653 = vunpack.c.l.b16 %v2207
  %v2654 = vunpack.c.h.b16 %v2207
  %v2655 = vunpack.c.l.b16 %v2208
  %v2656 = vunpack.c.h.b16 %v2208
  %v2657 = vunpack.c.l.b16 %v2209
  %v2658 = vunpack.c.l.b16 %v2210
  %v2659 = vunpack.c.h.b16 %v2210
  %v2660 = vunpack.c.l.b16 %v2211
  %v2661 = vunpack.c.h.b16 %v2211
  %v2662 = vunpack.c.l.b16 %v2212
  %v2663 = vunpack.c.h.b16 %v2212
  %v2664 = vunpack.c.l.b16 %v2213
  %v2665 = vunpack.c.l.b16 %v2214
  %v2666 = vunpack.c.h.b16 %v2214
  %v2667 = vunpack.c.l.b16 %v2215
  %v2668 = vunpack.c.h.b16 %v2215
  %v2669 = vunpack.c.l.b16 %v2216
  %v2670 = vunpack.c.h.b16 %v2216
  %v2671 = vunpack.c.l.b16 %v2217
  %v2672 = vunpack.c.l.b16 %v2218
  %v2673 = vunpack.c.h.b16 %v2218
  %v2674 = vunpack.c.l.b16 %v2219
  %v2675 = vunpack.c.h.b16 %v2219
  %v2676 = vunpack.c.l.b16 %v2220
  %v2677 = vunpack.c.h.b16 %v2220
  %v2678 = vunpack.c.l.b16 %v2221
  %v2679 = vunpack.c.l.b16 %v2222
  %v2680 = vunpack.c.h.b16 %v2222
  %v2681 = vunpack.c.l.b16 %v2223
  %v2682 = vunpack.c.h.b16 %v2223
  %v2683 = vunpack.c.l.b16 %v2224
  %v2684 = vunpack.c.h.b16 %v2224
  %v2685 = vunpack.c.l.b16 %v2225
  %v2686 = vunpack.c.l.b16 %v2226
  %v2687 = vunpack.c.h.b16 %v2226
  %v2688 = vunpack.c.l.b16 %v2227
  %v2689 = vunpack.c.h.b16 %v2227
  %v2690 = vunpack.c.l.b16 %v2228
  %v2691 = vunpack.c.h.b16 %v2228
  %v2692 = vunpack.c.l.b16 %v2229
  %v2693 = vunpack.c.l.b16 %v2230
  %v2694 = vunpack.c.h.b16 %v2230
  %v2695 = vunpack.c.l.b16 %v2231
  %v2696 = vunpack.c.h.b16 %v2231
  %v2697 = vunpack.c.l.b16 %v2232
  %v2698 = vunpack.c.h.b16 %v2232
  %v2699 = vunpack.c.l.b16 %v2233
  %v2700 = vunpack.c.l.b16 %v2234
  %v2701 = vunpack.c.h.b16 %v2234
  %v2702 = vunpack.c.l.b16 %v2235
  %v2703 = vunpack.c.h.b16 %v2235
  %v2704 = vunpack.c.l.b16 %v2236
  %v2705 = vunpack.c.h.b16 %v2236
  %v2706 = vunpack.c.l.b16 %v2237
  %v2707 = vunpack.c.l.b16 %v2238
  %v2708 = vunpack.c.h.b16 %v2238
  %v2709 = vunpack.c.l.b16 %v2239
  %v2710 = vunpack.c.h.b16 %v2239
  %v2711 = vunpack.c.l.b16 %v2240
  %v2712 = vunpack.c.h.b16 %v2240
  %v2713 = vunpack.c.l.b16 %v2241
  %v2714 = vunpack.c.l.b16 %v2242
  %v2715 = vunpack.c.h.b16 %v2242
  %v2716 = vunpack.c.l.b16 %v2243
  %v2717 = vunpack.c.h.b16 %v2243
  %v2718 = vunpack.c.l.b16 %v2244
  %v2719 = vunpack.c.h.b16 %v2244
  %v2720 = vunpack.c.l.b16 %v2245
  %v2721 = vunpack.c.l.b16 %v2246
  %v2722 = vunpack.c.h.b16 %v2246
  %v2723 = vunpack.c.l.b16 %v2247
  %v2724 = vunpack.c.h.b16 %v2247
  %v2725 = vunpack.c.l.b16 %v2248
  %v2726 = vunpack.c.h.b16 %v2248
  %v2727 = vunpack.c.l.b16 %v2249
  %v2728 = vunpack.c.l.b16 %v2250
  %v2729 = vunpack.c.h.b16 %v2250
  %v2730 = vunpack.c.l.b16 %v2251
  %v2731 = vunpack.c.h.b16 %v2251
  %v2732 = vunpack.c.l.b16 %v2252
  %v2733 = vunpack.c.h.b16 %v2252
  %v2734 = vunpack.c.l.b16 %v2253
  %v2735 = vunpack.c.l.b16 %v2254
  %v2736 = vunpack.c.h.b16 %v2254
  %v2737 = vunpack.c.l.b16 %v2255
  %v2738 = vunpack.c.h.b16 %v2255
  %v2739 = vunpack.c.l.b16 %v2256
  %v2740 = vunpack.c.h.b16 %v2256
  %v2741 = vunpack.c.l.b16 %v2257
  %v2742 = vunpack.c.l.b16 %v2258
  %v2743 = vunpack.c.h.b16 %v2258
  %v2744 = vunpack.c.l.b16 %v2259
  %v2745 = vunpack.c.h.b16 %v2259
  %v2746 = vunpack.c.l.b16 %v2260
  %v2747 = vunpack.c.h.b16 %v2260
  %v2748 = vunpack.c.l.b16 %v2261
  %v2749 = vunpack.c.l.b16 %v2262
  %v2750 = vunpack.c.h.b16 %v2262
  %v2751 = vunpack.c.l.b16 %v2263
  %v2752 = vunpack.c.h.b16 %v2263
  %v2753 = vunpack.c.l.b16 %v2264
  %v2754 = vunpack.c.h.b16 %v2264
  %v2755 = vunpack.c.l.b16 %v2265
  %v2756 = vunpack.c.l.b16 %v2266
  %v2757 = vunpack.c.h.b16 %v2266
  %v2758 = vunpack.c.l.b16 %v2267
  %v2759 = vunpack.c.h.b16 %v2267
  %v2760 = vunpack.c.l.b16 %v2268
  %v2761 = vunpack.c.h.b16 %v2268
  %v2762 = vunpack.c.l.b16 %v2269
  %v2763 = vunpack.c.l.b16 %v2270
  %v2764 = vunpack.c.h.b16 %v2270
  %v2765 = vunpack.c.l.b16 %v2271
  %v2766 = vunpack.c.h.b16 %v2271
  %v2767 = vunpack.c.l.b16 %v2272
  %v2768 = vunpack.c.h.b16 %v2272
  %v2769 = vunpack.c.l.b16 %v2273
  %v2770 = vunpack.c.l.b16 %v2274
  %v2771 = vunpack.c.h.b16 %v2274
  %v2772 = vunpack.c.l.b16 %v2275
  %v2773 = vunpack.c.h.b16 %v2275
  %v2774 = vunpack.c.l.b16 %v2276
  %v2775 = vunpack.c.h.b16 %v2276
  %v2776 = vunpack.c.l.b16 %v2277
  %v2777 = vunpack.c.l.b16 %v2278
  %v2778 = vunpack.c.h.b16 %v2278
  %v2779 = vunpack.c.l.b16 %v2279
  %v2780 = vunpack.c.h.b16 %v2279
  %v2781 = vunpack.c.l.b16 %v2280
  %v2782 = vunpack.c.h.b16 %v2280
  %v2783 = vunpack.c.l.b16 %v2281
  %v2784 = vunpack.c.l.b16 %v2282
  %v2785 = vunpack.c.h.b16 %v2282
  %v2786 = vunpack.c.l.b16 %v2283
  %v2787 = vunpack.c.h.b16 %v2283
  %v2788 = vunpack.c.l.b16 %v2284
  %v2789 = vunpack.c.h.b16 %v2284
  %v2790 = vunpack.c.l.b16 %v2285
  %v2791 = vunpack.c.l.b16 %v2286
  %v2792 = vunpack.c.h.b16 %v2286
  %v2793 = vunpack.c.l.b16 %v2287
  %v2794 = vunpack.c.h.b16 %v2287
  %v2795 = vunpack.c.l.b16 %v2288
  %v2796 = vunpack.c.h.b16 %v2288
  %v2797 = vunpack.c.l.b16 %v2289
  %v2798 = vunpack.c.l.b16 %v2290
  %v2799 = vunpack.c.h.b16 %v2290
  %v2800 = vunpack.c.l.b16 %v2291
  %v2801 = vunpack.c.h.b16 %v2291
  %v2802 = vunpack.c.l.b16 %v2292
  %v2803 = vunpack.c.h.b16 %v2292
  %v2804 = vunpack.c.l.b16 %v2293
  %v2805 = vunpack.c.l.b16 %v2294
  %v2806 = vunpack.c.h.b16 %v2294
  %v2807 = vunpack.c.l.b16 %v2295
  %v2808 = vunpack.c.h.b16 %v2295
  %v2809 = vunpack.c.l.b16 %v2296
  %v2810 = vunpack.c.h.b16 %v2296
  %v2811 = vunpack.c.l.b16 %v2297
  %v2812 = vunpack.c.l.b16 %v2298
  %v2813 = vunpack.c.h.b16 %v2298
  %v2814 = vunpack.c.l.b16 %v2299
  %v2815 = vunpack.c.h.b16 %v2299
  %v2816 = vunpack.c.l.b16 %v2300
  %v2817 = vunpack.c.h.b16 %v2300
  %v2818 = vunpack.c.l.b16 %v2301
  %v2819 = vunpack.c.l.b16 %v2302
  %v2820 = vunpack.c.h.b16 %v2302
  %v2821 = vunpack.c.l.b16 %v2303
  %v2822 = vunpack.c.h.b16 %v2303
  %v2823 = vunpack.c.l.b16 %v2304
  %v2824 = vunpack.c.h.b16 %v2304
  %v2825 = vunpack.c.l.b16 %v2305
  %v2826 = vunpack.c.l.b16 %v2306
  %v2827 = vunpack.c.h.b16 %v2306
  %v2828 = vunpack.c.l.b16 %v2307
  %v2829 = vunpack.c.h.b16 %v2307
  %v2830 = vunpack.c.l.b16 %v2308
  %v2831 = vunpack.c.h.b16 %v2308
  %v2832 = vunpack.c.l.b16 %v2309
  %v2833 = vunpack.c.l.b16 %v2310
  %v2834 = vunpack.c.h.b16 %v2310
  %v2835 = vunpack.c.l.b16 %v2311
  %v2836 = vunpack.c.h.b16 %v2311
  %v2837 = vunpack.c.l.b16 %v2312
  %v2838 = vunpack.c.h.b16 %v2312
  %v2839 = vunpack.c.l.b16 %v2313
  %v2840 = vunpack.c.l.b16 %v2314
  %v2841 = vunpack.c.h.b16 %v2314
  %v2842 = vunpack.c.l.b16 %v2315
  %v2843 = vunpack.c.h.b16 %v2315
  %v2844 = vunpack.c.l.b16 %v2316
  %v2845 = vunpack.c.h.b16 %v2316
  %v2846 = vunpack.c.l.b16 %v2317
  %v2847 = vunpack.c.l.b16 %v2318
  %v2848 = vunpack.c.h.b16 %v2318
  %v2849 = vunpack.c.l.b16 %v2319
  %v2850 = vunpack.c.h.b16 %v2319
  %v2851 = vunpack.c.l.b16 %v2320
  %v2852 = vunpack.c.h.b16 %v2320
  %v2853 = vunpack.c.l.b16 %v2321
  %v2854 = vunpack.c.l.b16 %v2322
  %v2855 = vunpack.c.h.b16 %v2322
  %v2856 = vunpack.c.l.b16 %v2323
  %v2857 = vunpack.c.h.b16 %v2323
  %v2858 = vunpack.c.l.b16 %v2324
  %v2859 = vunpack.c.h.b16 %v2324
  %v2860 = vunpack.c.l.b16 %v2325
  %v2861 = vunpack.c.l.b16 %v2326
  %v2862 = vunpack.c.h.b16 %v2326
  %v2863 = vunpack.c.l.b16 %v2327
  %v2864 = vunpack.c.h.b16 %v2327
  %v2865 = vunpack.c.l.b16 %v2328
  %v2866 = vunpack.c.h.b16 %v2328
  %v2867 = vunpack.c.l.b16 %v2329
  %v2868 = vunpack.c.l.b16 %v2330
  %v2869 = vunpack.c.h.b16 %v2330
  %v2870 = vunpack.c.l.b16 %v2331
  %v2871 = vunpack.c.h.b16 %v2331
  %v2872 = vunpack.c.l.b16 %v2332
  %v2873 = vunpack.c.h.b16 %v2332
  %v2874 = vunpack.c.l.b16 %v2333
  %v2875 = vunpack.c.l.b16 %v2334
  %v2876 = vunpack.c.h.b16 %v2334
  %v2877 = vunpack.c.l.b16 %v2335
  %v2878 = vunpack.c.h.b16 %v2335
  %v2879 = vunpack.c.l.b16 %v2336
  %v2880 = vunpack.c.h.b16 %v2336
  %v2881 = vunpack.c.l.b16 %v2337
  %v2882 = vunpack.c.l.b16 %v2338
  %v2883 = vunpack.c.h.b16 %v2338
  %v2884 = vunpack.c.l.b16 %v2339
  %v2885 = vunpack.c.h.b16 %v2339
  %v2886 = vunpack.c.l.b16 %v2340
  %v2887 = vunpack.c.h.b16 %v2340
  %v2888 = vunpack.c.l.b16 %v2341
  %v2889 = vunpack.c.l.b16 %v2342
  %v2890 = vunpack.c.h.b16 %v2342
  %v2891 = vunpack.c.l.b16 %v2343
  %v2892 = vunpack.c.h.b16 %v2343
  %v2893 = vunpack.c.l.b16 %v2344
  %v2894 = vunpack.c.h.b16 %v2344
  %v2895 = vunpack.c.l.b16 %v2345
  %v2896 = vunpack.c.l.b16 %v2346
  %v2897 = vunpack.c.h.b16 %v2346
  %v2898 = vunpack.c.l.b16 %v2347
  %v2899 = vunpack.c.h.b16 %v2347
  %v2900 = vunpack.c.l.b16 %v2348
  %v2901 = vunpack.c.h.b16 %v2348
  %v2902 = vunpack.c.l.b16 %v2349
  %v2903 = vunpack.c.l.b16 %v2350
  %v2904 = vunpack.c.h.b16 %v2350
  %v2905 = vunpack.c.l.b16 %v2351
  %v2906 = vunpack.c.h.b16 %v2351
  %v2907 = vunpack.c.l.b16 %v2352
  %v2908 = vunpack.c.h.b16 %v2352
  %v2909 = vunpack.c.l.b16 %v2353
  %v2910 = vunpack.c.l.b16 %v2354
  %v2911 = vunpack.c.h.b16 %v2354
  %v2912 = vunpack.c.l.b16 %v2355
  %v2913 = vunpack.c.h.b16 %v2355
  %v2914 = vunpack.c.l.b16 %v2356
  %v2915 = vunpack.c.h.b16 %v2356
  %v2916 = vunpack.c.l.b16 %v2357
  %v2917 = vunpack.c.l.b16 %v2358
  %v2918 = vunpack.c.h.b16 %v2358
  %v2919 = vunpack.c.l.b16 %v2359
  %v2920 = vunpack.c.h.b16 %v2359
  %v2921 = vunpack.c.l.b16 %v2360
  %v2922 = vunpack.c.h.b16 %v2360
  %v2923 = vunpack.c.l.b16 %v2361
  %v2924 = vunpack.c.l.b16 %v2362
  %v2925 = vunpack.c.h.b16 %v2362
  %v2926 = vunpack.c.l.b16 %v2363
  %v2927 = vunpack.c.h.b16 %v2363
  %v2928 = vunpack.c.l.b16 %v2364
  %v2929 = vunpack.c.h.b16 %v2364
  %v2930 = vunpack.c.l.b16 %v2365
  %v2931 = vpack.c.b16 %v2602, %v2595
  %v2932 = vpack.c.b16 %v2603, %v2596
  %v2933 = vpack.c.b16 %v2604, %v2597
  %v2934 = vpack.c.b16 %v2605, %v2598
  %v2935 = vpack.c.b16 %v2606, %v2599
  %v2936 = vpack.c.b16 %v2607, %v2600
  %v2937 = vpack.c.b16 %v2608, %v2601
  %v2938 = vpack.c.b16 %v2616, %v2609
  %v2939 = vpack.c.b16 %v2617, %v2610
  %v2940 = vpack.c.b16 %v2618, %v2611
  %v2941 = vpack.c.b16 %v2619, %v2612
  %v2942 = vpack.c.b16 %v2620, %v2613
  %v2943 = vpack.c.b16 %v2621, %v2614
  %v2944 = vpack.c.b16 %v2622, %v2615
  %v2945 = vpack.c.b16 %v2630, %v2623
  %v2946 = vpack.c.b16 %v2631, %v2624
  %v2947 = vpack.c.b16 %v2632, %v2625
  %v2948 = vpack.c.b16 %v2633, %v2626
  %v2949 = vpack.c.b16 %v2634, %v2627
  %v2950 = vpack.c.b16 %v2635, %v2628
  %v2951 = vpack.c.b16 %v2636, %v2629
  %v2952 = vpack.c.b16 %v2644, %v2637
  %v2953 = vpack.c.b16 %v2645, %v2638
  %v2954 = vpack.c.b16 %v2646, %v2639
  %v2955 = vpack.c.b16 %v2647, %v2640
  %v2956 = vpack.c.b16 %v2648, %v2641
  %v2957 = vpack.c.b16 %v2649, %v2642
  %v2958 = vpack.c.b16 %v2650, %v2643
  %v2959 = vpack.c.b16 %v2658, %v2651
  %v2960 = vpack.c.b16 %v2659, %v2652
  %v2961 = vpack.c.b16 %v2660, %v2653
  %v2962 = vpack.c.b16 %v2661, %v2654
  %v2963 = vpack.c.b16 %v2662, %v2655
  %v2964 = vpack.c.b16 %v2663, %v2656
  %v2965 = vpack.c.b16 %v2664, %v2657
  %v2966 = vpack.c.b16 %v2672, %v2665
  %v2967 = vpack.c.b16 %v2673, %v2666
  %v2968 = vpack.c.b16 %v2674, %v2667
  %v2969 = vpack.c.b16 %v2675, %v2668
  %v2970 = vpack.c.b16 %v2676, %v2669
  %v2971 = vpack.c.b16 %v2677, %v2670
  %v2972 = vpack.c.b16 %v2678, %v2671
  %v2973 = vpack.c.b16 %v2686, %v2679
  %v2974 = vpack.c.b16 %v2687, %v2680
  %v2975 = vpack.c.b16 %v2688, %v2681
  %v2976 = vpack.c.b16 %v2689, %v2682
  %v2977 = vpack.c.b16 %v2690, %v2683
  %v2978 = vpack.c.b16 %v2691, %v2684
  %v2979 = vpack.c.b16 %v2692, %v2685
  %v2980 = vpack.c.b16 %v2700, %v2693
  %v2981 = vpack.c.b16 %v2701, %v2694
  %v2982 = vpack.c.b16 %v2702, %v2695
  %v2983 = vpack.c.b16 %v2703, %v2696
  %v2984 = vpack.c.b16 %v2704, %v2697
  %v2985 = vpack.c.b16 %v2705, %v2698
  %v2986 = vpack.c.b16 %v2706, %v2699
  %v2987 = vpack.c.b16 %v2714, %v2707
  %v2988 = vpack.c.b16 %v2715, %v2708
  %v2989 = vpack.c.b16 %v2716, %v2709
  %v2990 = vpack.c.b16 %v2717, %v2710
  %v2991 = vpack.c.b16 %v2718, %v2711
  %v2992 = vpack.c.b16 %v2719, %v2712
  %v2993 = vpack.c.b16 %v2720, %v2713
  %v2994 = vpack.c.b16 %v2728, %v2721
  %v2995 = vpack.c.b16 %v2729, %v2722
  %v2996 = vpack.c.b16 %v2730, %v2723
  %v2997 = vpack.c.b16 %v2731, %v2724
  %v2998 = vpack.c.b16 %v2732, %v2725
  %v2999 = vpack.c.b16 %v2733, %v2726
  %v3000 = vpack.c.b16 %v2734, %v2727
  %v3001 = vpack.c.b16 %v2742, %v2735
  %v3002 = vpack.c.b16 %v2743, %v2736
  %v3003 = vpack.c.b16 %v2744, %v2737
  %v3004 = vpack.c.b16 %v2745, %v2738
  %v3005 = vpack.c.b16 %v2746, %v2739
  %v3006 = vpack.c.b16 %v2747, %v2740
  %v3007 = vpack.c.b16 %v2748, %v2741
  %v3008 = vpack.c.b16 %v2756, %v2749
  %v3009 = vpack.c.b16 %v2757, %v2750
  %v3010 = vpack.c.b16 %v2758, %v2751
  %v3011 = vpack.c.b16 %v2759, %v2752
  %v3012 = vpack.c.b16 %v2760, %v2753
  %v3013 = vpack.c.b16 %v2761, %v2754
  %v3014 = vpack.c.b16 %v2762, %v2755
  %v3015 = vpack.c.b16 %v2770, %v2763
  %v3016 = vpack.c.b16 %v2771, %v2764
  %v3017 = vpack.c.b16 %v2772, %v2765
  %v3018 = vpack.c.b16 %v2773, %v2766
  %v3019 = vpack.c.b16 %v2774, %v2767
  %v3020 = vpack.c.b16 %v2775, %v2768
  %v3021 = vpack.c.b16 %v2776, %v2769
  %v3022 = vpack.c.b16 %v2784, %v2777
  %v3023 = vpack.c.b16 %v2785, %v2778
  %v3024 = vpack.c.b16 %v2786, %v2779
  %v3025 = vpack.c.b16 %v2787, %v2780
  %v3026 = vpack.c.b16 %v2788, %v2781
  %v3027 = vpack.c.b16 %v2789, %v2782
  %v3028 = vpack.c.b16 %v2790, %v2783
  %v3029 = vpack.c.b16 %v2798, %v2791
  %v3030 = vpack.c.b16 %v2799, %v2792
  %v3031 = vpack.c.b16 %v2800, %v2793
  %v3032 = vpack.c.b16 %v2801, %v2794
  %v3033 = vpack.c.b16 %v2802, %v2795
  %v3034 = vpack.c.b16 %v2803, %v2796
  %v3035 = vpack.c.b16 %v2804, %v2797
  %v3036 = vpack.c.b16 %v2812, %v2805
  %v3037 = vpack.c.b16 %v2813, %v2806
  %v3038 = vpack.c.b16 %v2814, %v2807
  %v3039 = vpack.c.b16 %v2815, %v2808
  %v3040 = vpack.c.b16 %v2816, %v2809
  %v3041 = vpack.c.b16 %v2817, %v2810
  %v3042 = vpack.c.b16 %v2818, %v2811
  %v3043 = vpack.c.b16 %v2826, %v2819
  %v3044 = vpack.c.b16 %v2827, %v2820
  %v3045 = vpack.c.b16 %v2828, %v2821
  %v3046 = vpack.c.b16 %v2829, %v2822
  %v3047 = vpack.c.b16 %v2830, %v2823
  %v3048 = vpack.c.b16 %v2831, %v2824
  %v3049 = vpack.c.b16 %v2832, %v2825
  %v3050 = vpack.c.b16 %v2840, %v2833
  %v3051 = vpack.c.b16 %v2841, %v2834
  %v3052 = vpack.c.b16 %v2842, %v2835
  %v3053 = vpack.c.b16 %v2843, %v2836
  %v3054 = vpack.c.b16 %v2844, %v2837
  %v3055 = vpack.c.b16 %v2845, %v2838
  %v3056 = vpack.c.b16 %v2846, %v2839
  %v3057 = vpack.c.b16 %v2854, %v2847
  %v3058 = vpack.c.b16 %v2855, %v2848
  %v3059 = vpack.c.b16 %v2856, %v2849
  %v3060 = vpack.c.b16 %v2857, %v2850
  %v3061 = vpack.c.b16 %v2858, %v2851
  %v3062 = vpack.c.b16 %v2859, %v2852
  %v3063 = vpack.c.b16 %v2860, %v2853
  %v3064 = vpack.c.b16 %v2868, %v2861
  %v3065 = vpack.c.b16 %v2869, %v2862
  %v3066 = vpack.c.b16 %v2870, %v2863
  %v3067 = vpack.c.b16 %v2871, %v2864
  %v3068 = vpack.c.b16 %v2872, %v2865
  %v3069 = vpack.c.b16 %v2873, %v2866
  %v3070 = vpack.c.b16 %v2874, %v2867
  %v3071 = vpack.c.b16 %v2882, %v2875
  %v3072 = vpack.c.b16 %v2883, %v2876
  %v3073 = vpack.c.b16 %v2884, %v2877
  %v3074 = vpack.c.b16 %v2885, %v2878
  %v3075 = vpack.c.b16 %v2886, %v2879
  %v3076 = vpack.c.b16 %v2887, %v2880
  %v3077 = vpack.c.b16 %v2888, %v2881
  %v3078 = vpack.c.b16 %v2896, %v2889
  %v3079 = vpack.c.b16 %v2897, %v2890
  %v3080 = vpack.c.b16 %v2898, %v2891
  %v3081 = vpack.c.b16 %v2899, %v2892
  %v3082 = vpack.c.b16 %v2900, %v2893
  %v3083 = vpack.c.b16 %v2901, %v2894
  %v3084 = vpack.c.b16 %v2902, %v2895
  %v3085 = vpack.c.b16 %v2910, %v2903
  %v3086 = vpack.c.b16 %v2911, %v2904
  %v3087 = vpack.c.b16 %v2912, %v2905
  %v3088 = vpack.c.b16 %v2913, %v2906
  %v3089 = vpack.c.b16 %v2914, %v2907
  %v3090 = vpack.c.b16 %v2915, %v2908
  %v3091 = vpack.c.b16 %v2916, %v2909
  %v3092 = vpack.c.b16 %v2924, %v2917
  %v3093 = vpack.c.b16 %v2925, %v2918
  %v3094 = vpack.c.b16 %v2926, %v2919
  %v3095 = vpack.c.b16 %v2927, %v2920
  %v3096 = vpack.c.b16 %v2928, %v2921
  %v3097 = vpack.c.b16 %v2929, %v2922
  %v3098 = vpack.c.b16 %v2930, %v2923
  %3267 = vmatprep.subr.bf16.mxu0 %v2932
  %3268 = vmatpush1.bf16.msra.mxu0 %v2931
  %3269 = vmatprep.subr.bf16.mxu0 %v2939
  %3270 = vmatpush1.bf16.msra.mxu0 %v2938
  %3271 = vmatprep.subr.bf16.mxu0 %v2946
  %3272 = vmatpush1.bf16.msra.mxu0 %v2945
  %3273 = vmatprep.subr.bf16.mxu0 %v2953
  %3274 = vmatpush1.bf16.msra.mxu0 %v2952
  %3275 = vmatprep.subr.bf16.mxu0 %v2960
  %3276 = vmatpush1.bf16.msra.mxu0 %v2959
  %3277 = vmatprep.subr.bf16.mxu0 %v2967
  %3278 = vmatpush1.bf16.msra.mxu0 %v2966
  %3279 = vmatprep.subr.bf16.mxu0 %v2974
  %3280 = vmatpush1.bf16.msra.mxu0 %v2973
  %3281 = vmatprep.subr.bf16.mxu0 %v2981
  %3282 = vmatpush1.bf16.msra.mxu0 %v2980
  %3283 = vmatprep.subr.bf16.mxu0 %v2988
  %3284 = vmatpush1.bf16.msra.mxu0 %v2987
  %3285 = vmatprep.subr.bf16.mxu0 %v2995
  %3286 = vmatpush1.bf16.msra.mxu0 %v2994
  %3287 = vmatprep.subr.bf16.mxu0 %v3002
  %3288 = vmatpush1.bf16.msra.mxu0 %v3001
  %3289 = vmatprep.subr.bf16.mxu0 %v3009
  %3290 = vmatpush1.bf16.msra.mxu0 %v3008
  %3291 = vmatprep.subr.bf16.mxu0 %v3016
  %3292 = vmatpush1.bf16.msra.mxu0 %v3015
  %3293 = vmatprep.subr.bf16.mxu0 %v3023
  %3294 = vmatpush1.bf16.msra.mxu0 %v3022
  %3295 = vmatprep.subr.bf16.mxu0 %v3030
  %3296 = vmatpush1.bf16.msra.mxu0 %v3029
  %3297 = vmatprep.subr.bf16.mxu0 %v3037
  %3298 = vmatpush1.bf16.msra.mxu0 %v3036
  %3299 = vmatprep.mubr.bf16.mxu0 %v2172
  %3300 = vmatmul.mubr.bf16.gmra.mrb[0].mxu0 %v2171
  %v3301 = vpop.f32.mrb[0].mxu0
  %v3302 = vadd.f32 %v2371, %v3301
  %v3303 = vpop.f32.mrb[0].mxu0
  %v3304 = vadd.f32 %v2375, %v3303
  %v3305 = vpop.f32.mrb[0].mxu0
  %v3306 = vadd.f32 %v2371, %v3305
  %v3307 = vpop.f32.mrb[0].mxu0
  %v3308 = vadd.f32 %v2375, %v3307
  %3309 = vdwg.mxu0
  %3310 = vmatprep.subr.bf16.mxu0 %v3044
  %3311 = vmatpush1.bf16.msra.mxu0 %v3043
  %3312 = vmatprep.subr.bf16.mxu0 %v3051
  %3313 = vmatpush1.bf16.msra.mxu0 %v3050
  %3314 = vmatprep.subr.bf16.mxu0 %v3058
  %3315 = vmatpush1.bf16.msra.mxu0 %v3057
  %3316 = vmatprep.subr.bf16.mxu0 %v3065
  %3317 = vmatpush1.bf16.msra.mxu0 %v3064
  %3318 = vmatprep.subr.bf16.mxu0 %v3072
  %3319 = vmatpush1.bf16.msra.mxu0 %v3071
  %3320 = vmatprep.subr.bf16.mxu0 %v3079
  %3321 = vmatpush1.bf16.msra.mxu0 %v3078
  %3322 = vmatprep.subr.bf16.mxu0 %v3086
  %3323 = vmatpush1.bf16.msra.mxu0 %v3085
  %3324 = vmatprep.subr.bf16.mxu0 %v3093
  %3325 = vmatpush1.bf16.msra.mxu0 %v3092
  %3326 = vmatprep.subr.bf16.mxu0 0
  %3327 = vmatpush1.bf16.msra.mxu0 0
  %3328 = vmatprep.subr.bf16.mxu0 0
  %3329 = vmatpush1.bf16.msra.mxu0 0
  %3330 = vmatprep.subr.bf16.mxu0 0
  %3331 = vmatpush1.bf16.msra.mxu0 0
  %3332 = vmatprep.subr.bf16.mxu0 0
  %3333 = vmatpush1.bf16.msra.mxu0 0
  %3334 = vmatprep.subr.bf16.mxu0 0
  %3335 = vmatpush1.bf16.msra.mxu0 0
  %3336 = vmatprep.subr.bf16.mxu0 0
  %3337 = vmatpush1.bf16.msra.mxu0 0
  %3338 = vmatprep.subr.bf16.mxu0 0
  %3339 = vmatpush1.bf16.msra.mxu0 0
  %3340 = vmatprep.subr.bf16.mxu0 0
  %3341 = vmatpush1.bf16.msra.mxu0 0
  %3342 = vmatprep.mubr.bf16.mxu0 0
  %3343 = vmatmul.mubr.bf16.gmra.mrb[0].mxu0 %v2173
  %v3344 = vpop.f32.mrb[0].mxu0
  %v3345 = vadd.f32 %v3302, %v3344
  %v3346 = vpop.f32.mrb[0].mxu0
  %v3347 = vadd.f32 %v3304, %v3346
  %v3348 = vpop.f32.mrb[0].mxu0
  %v3349 = vadd.f32 %v3306, %v3348
  %v3350 = vpop.f32.mrb[0].mxu0
  %v3351 = vadd.f32 %v3308, %v3350
  %3352 = vdwg.mxu0
  %3353 = vmatprep.subr.bf16.mxu0 %v2934
  %3354 = vmatpush1.bf16.msra.mxu0 %v2933
  %3355 = vmatprep.subr.bf16.mxu0 %v2941
  %3356 = vmatpush1.bf16.msra.mxu0 %v2940
  %3357 = vmatprep.subr.bf16.mxu0 %v2948
  %3358 = vmatpush1.bf16.msra.mxu0 %v2947
  %3359 = vmatprep.subr.bf16.mxu0 %v2955
  %3360 = vmatpush1.bf16.msra.mxu0 %v2954
  %3361 = vmatprep.subr.bf16.mxu0 %v2962
  %3362 = vmatpush1.bf16.msra.mxu0 %v2961
  %3363 = vmatprep.subr.bf16.mxu0 %v2969
  %3364 = vmatpush1.bf16.msra.mxu0 %v2968
  %3365 = vmatprep.subr.bf16.mxu0 %v2976
  %3366 = vmatpush1.bf16.msra.mxu0 %v2975
  %3367 = vmatprep.subr.bf16.mxu0 %v2983
  %3368 = vmatpush1.bf16.msra.mxu0 %v2982
  %3369 = vmatprep.subr.bf16.mxu0 %v2990
  %3370 = vmatpush1.bf16.msra.mxu0 %v2989
  %3371 = vmatprep.subr.bf16.mxu0 %v2997
  %3372 = vmatpush1.bf16.msra.mxu0 %v2996
  %3373 = vmatprep.subr.bf16.mxu0 %v3004
  %3374 = vmatpush1.bf16.msra.mxu0 %v3003
  %3375 = vmatprep.subr.bf16.mxu0 %v3011
  %3376 = vmatpush1.bf16.msra.mxu0 %v3010
  %3377 = vmatprep.subr.bf16.mxu0 %v3018
  %3378 = vmatpush1.bf16.msra.mxu0 %v3017
  %3379 = vmatprep.subr.bf16.mxu0 %v3025
  %3380 = vmatpush1.bf16.msra.mxu0 %v3024
  %3381 = vmatprep.subr.bf16.mxu0 %v3032
  %3382 = vmatpush1.bf16.msra.mxu0 %v3031
  %3383 = vmatprep.subr.bf16.mxu0 %v3039
  %3384 = vmatpush1.bf16.msra.mxu0 %v3038
  %3385 = vmatprep.mubr.bf16.mxu0 %v2172
  %3386 = vmatmul.mubr.bf16.gmra.mrb[0].mxu0 %v2171
  %v3387 = vpop.f32.mrb[0].mxu0
  %v3388 = vadd.f32 %v2379, %v3387
  %v3389 = vpop.f32.mrb[0].mxu0
  %v3390 = vadd.f32 %v2383, %v3389
  %v3391 = vpop.f32.mrb[0].mxu0
  %v3392 = vadd.f32 %v2379, %v3391
  %v3393 = vpop.f32.mrb[0].mxu0
  %v3394 = vadd.f32 %v2383, %v3393
  %3395 = vdwg.mxu0
  %3396 = vmatprep.subr.bf16.mxu0 %v3046
  %3397 = vmatpush1.bf16.msra.mxu0 %v3045
  %3398 = vmatprep.subr.bf16.mxu0 %v3053
  %3399 = vmatpush1.bf16.msra.mxu0 %v3052
  %3400 = vmatprep.subr.bf16.mxu0 %v3060
  %3401 = vmatpush1.bf16.msra.mxu0 %v3059
  %3402 = vmatprep.subr.bf16.mxu0 %v3067
  %3403 = vmatpush1.bf16.msra.mxu0 %v3066
  %3404 = vmatprep.subr.bf16.mxu0 %v3074
  %3405 = vmatpush1.bf16.msra.mxu0 %v3073
  %3406 = vmatprep.subr.bf16.mxu0 %v3081
  %3407 = vmatpush1.bf16.msra.mxu0 %v3080
  %3408 = vmatprep.subr.bf16.mxu0 %v3088
  %3409 = vmatpush1.bf16.msra.mxu0 %v3087
  %3410 = vmatprep.subr.bf16.mxu0 %v3095
  %3411 = vmatpush1.bf16.msra.mxu0 %v3094
  %3412 = vmatprep.subr.bf16.mxu0 0
  %3413 = vmatpush1.bf16.msra.mxu0 0
  %3414 = vmatprep.subr.bf16.mxu0 0
  %3415 = vmatpush1.bf16.msra.mxu0 0
  %3416 = vmatprep.subr.bf16.mxu0 0
  %3417 = vmatpush1.bf16.msra.mxu0 0
  %3418 = vmatprep.subr.bf16.mxu0 0
  %3419 = vmatpush1.bf16.msra.mxu0 0
  %3420 = vmatprep.subr.bf16.mxu0 0
  %3421 = vmatpush1.bf16.msra.mxu0 0
  %3422 = vmatprep.subr.bf16.mxu0 0
  %3423 = vmatpush1.bf16.msra.mxu0 0
  %3424 = vmatprep.subr.bf16.mxu0 0
  %3425 = vmatpush1.bf16.msra.mxu0 0
  %3426 = vmatprep.subr.bf16.mxu0 0
  %3427 = vmatpush1.bf16.msra.mxu0 0
  %3428 = vmatprep.mubr.bf16.mxu0 0
  %3429 = vmatmul.mubr.bf16.gmra.mrb[0].mxu0 %v2173
  %v3430 = vpop.f32.mrb[0].mxu0
  %v3431 = vadd.f32 %v3388, %v3430
  %v3432 = vpop.f32.mrb[0].mxu0
  %v3433 = vadd.f32 %v3390, %v3432
  %v3434 = vpop.f32.mrb[0].mxu0
  %v3435 = vadd.f32 %v3392, %v3434
  %v3436 = vpop.f32.mrb[0].mxu0
  %v3437 = vadd.f32 %v3394, %v3436
  %3438 = vdwg.mxu0
  %3439 = vmatprep.subr.bf16.mxu0 %v2936
  %3440 = vmatpush1.bf16.msra.mxu0 %v2935
  %3441 = vmatprep.subr.bf16.mxu0 %v2943
  %3442 = vmatpush1.bf16.msra.mxu0 %v2942
  %3443 = vmatprep.subr.bf16.mxu0 %v2950
  %3444 = vmatpush1.bf16.msra.mxu0 %v2949
  %3445 = vmatprep.subr.bf16.mxu0 %v2957
  %3446 = vmatpush1.bf16.msra.mxu0 %v2956
  %3447 = vmatprep.subr.bf16.mxu0 %v2964
  %3448 = vmatpush1.bf16.msra.mxu0 %v2963
  %3449 = vmatprep.subr.bf16.mxu0 %v2971
  %3450 = vmatpush1.bf16.msra.mxu0 %v2970
  %3451 = vmatprep.subr.bf16.mxu0 %v2978
  %3452 = vmatpush1.bf16.msra.mxu0 %v2977
  %3453 = vmatprep.subr.bf16.mxu0 %v2985
  %3454 = vmatpush1.bf16.msra.mxu0 %v2984
  %3455 = vmatprep.subr.bf16.mxu0 %v2992
  %3456 = vmatpush1.bf16.msra.mxu0 %v2991
  %3457 = vmatprep.subr.bf16.mxu0 %v2999
  %3458 = vmatpush1.bf16.msra.mxu0 %v2998
  %3459 = vmatprep.subr.bf16.mxu0 %v3006
  %3460 = vmatpush1.bf16.msra.mxu0 %v3005
  %3461 = vmatprep.subr.bf16.mxu0 %v3013
  %3462 = vmatpush1.bf16.msra.mxu0 %v3012
  %3463 = vmatprep.subr.bf16.mxu0 %v3020
  %3464 = vmatpush1.bf16.msra.mxu0 %v3019
  %3465 = vmatprep.subr.bf16.mxu0 %v3027
  %3466 = vmatpush1.bf16.msra.mxu0 %v3026
  %3467 = vmatprep.subr.bf16.mxu0 %v3034
  %3468 = vmatpush1.bf16.msra.mxu0 %v3033
  %3469 = vmatprep.subr.bf16.mxu0 %v3041
  %3470 = vmatpush1.bf16.msra.mxu0 %v3040
  %3471 = vmatprep.mubr.bf16.mxu0 %v2172
  %3472 = vmatmul.mubr.bf16.gmra.mrb[0].mxu0 %v2171
  %v3473 = vpop.f32.mrb[0].mxu0
  %v3474 = vadd.f32 %v2387, %v3473
  %v3475 = vpop.f32.mrb[0].mxu0
  %v3476 = vadd.f32 %v2391, %v3475
  %v3477 = vpop.f32.mrb[0].mxu0
  %v3478 = vadd.f32 %v2387, %v3477
  %v3479 = vpop.f32.mrb[0].mxu0
  %v3480 = vadd.f32 %v2391, %v3479
  %3481 = vdwg.mxu0
  %3482 = vmatprep.subr.bf16.mxu0 %v3048
  %3483 = vmatpush1.bf16.msra.mxu0 %v3047
  %3484 = vmatprep.subr.bf16.mxu0 %v3055
  %3485 = vmatpush1.bf16.msra.mxu0 %v3054
  %3486 = vmatprep.subr.bf16.mxu0 %v3062
  %3487 = vmatpush1.bf16.msra.mxu0 %v3061
  %3488 = vmatprep.subr.bf16.mxu0 %v3069
  %3489 = vmatpush1.bf16.msra.mxu0 %v3068
  %3490 = vmatprep.subr.bf16.mxu0 %v3076
  %3491 = vmatpush1.bf16.msra.mxu0 %v3075
  %3492 = vmatprep.subr.bf16.mxu0 %v3083
  %3493 = vmatpush1.bf16.msra.mxu0 %v3082
  %3494 = vmatprep.subr.bf16.mxu0 %v3090
  %3495 = vmatpush1.bf16.msra.mxu0 %v3089
  %3496 = vmatprep.subr.bf16.mxu0 %v3097
  %3497 = vmatpush1.bf16.msra.mxu0 %v3096
  %3498 = vmatprep.subr.bf16.mxu0 0
  %3499 = vmatpush1.bf16.msra.mxu0 0
  %3500 = vmatprep.subr.bf16.mxu0 0
  %3501 = vmatpush1.bf16.msra.mxu0 0
  %3502 = vmatprep.subr.bf16.mxu0 0
  %3503 = vmatpush1.bf16.msra.mxu0 0
  %3504 = vmatprep.subr.bf16.mxu0 0
  %3505 = vmatpush1.bf16.msra.mxu0 0
  %3506 = vmatprep.subr.bf16.mxu0 0
  %3507 = vmatpush1.bf16.msra.mxu0 0
  %3508 = vmatprep.subr.bf16.mxu0 0
  %3509 = vmatpush1.bf16.msra.mxu0 0
  %3510 = vmatprep.subr.bf16.mxu0 0
  %3511 = vmatpush1.bf16.msra.mxu0 0
  %3512 = vmatprep.subr.bf16.mxu0 0
  %3513 = vmatpush1.bf16.msra.mxu0 0
  %3514 = vmatprep.mubr.bf16.mxu0 0
  %3515 = vmatmul.mubr.bf16.gmra.mrb[0].mxu0 %v2173
  %v3516 = vpop.f32.mrb[0].mxu0
  %v3517 = vadd.f32 %v3474, %v3516
  %v3518 = vpop.f32.mrb[0].mxu0
  %v3519 = vadd.f32 %v3476, %v3518
  %v3520 = vpop.f32.mrb[0].mxu0
  %v3521 = vadd.f32 %v3478, %v3520
  %v3522 = vpop.f32.mrb[0].mxu0
  %v3523 = vadd.f32 %v3480, %v3522
  %3524 = vdwg.mxu0
  %3525 = vmatprep.subr.bf16.mxu0 0
  %3526 = vmatpush1.bf16.msra.mxu0 %v2937
  %3527 = vmatprep.subr.bf16.mxu0 0
  %3528 = vmatpush1.bf16.msra.mxu0 %v2944
  %3529 = vmatprep.subr.bf16.mxu0 0
  %3530 = vmatpush1.bf16.msra.mxu0 %v2951
  %3531 = vmatprep.subr.bf16.mxu0 0
  %3532 = vmatpush1.bf16.msra.mxu0 %v2958
  %3533 = vmatprep.subr.bf16.mxu0 0
  %3534 = vmatpush1.bf16.msra.mxu0 %v2965
  %3535 = vmatprep.subr.bf16.mxu0 0
  %3536 = vmatpush1.bf16.msra.mxu0 %v2972
  %3537 = vmatprep.subr.bf16.mxu0 0
  %3538 = vmatpush1.bf16.msra.mxu0 %v2979
  %3539 = vmatprep.subr.bf16.mxu0 0
  %3540 = vmatpush1.bf16.msra.mxu0 %v2986
  %3541 = vmatprep.subr.bf16.mxu0 0
  %3542 = vmatpush1.bf16.msra.mxu0 %v2993
  %3543 = vmatprep.subr.bf16.mxu0 0
  %3544 = vmatpush1.bf16.msra.mxu0 %v3000
  %3545 = vmatprep.subr.bf16.mxu0 0
  %3546 = vmatpush1.bf16.msra.mxu0 %v3007
  %3547 = vmatprep.subr.bf16.mxu0 0
  %3548 = vmatpush1.bf16.msra.mxu0 %v3014
  %3549 = vmatprep.subr.bf16.mxu0 0
  %3550 = vmatpush1.bf16.msra.mxu0 %v3021
  %3551 = vmatprep.subr.bf16.mxu0 0
  %3552 = vmatpush1.bf16.msra.mxu0 %v3028
  %3553 = vmatprep.subr.bf16.mxu0 0
  %3554 = vmatpush1.bf16.msra.mxu0 %v3035
  %3555 = vmatprep.subr.bf16.mxu0 0
  %3556 = vmatpush1.bf16.msra.mxu0 %v3042
  %3557 = vmatprep.mubr.bf16.mxu0 %v2172
  %3558 = vmatmul.mubr.bf16.gmra.mrb[0].mxu0 %v2171
  %v3559 = vpop.f32.mrb[0].mxu0
  %v3560 = vadd.f32 %v2395, %v3559
  %v3561 = vpop.f32.mrb[0].mxu0
  %v3562 = vpop.f32.mrb[0].mxu0
  %v3563 = vadd.f32 %v2395, %v3562
  %v3564 = vpop.f32.mrb[0].mxu0
  %3565 = vdwg.mxu0
  %3566 = vmatprep.subr.bf16.mxu0 0
  %3567 = vmatpush1.bf16.msra.mxu0 %v3049
  %3568 = vmatprep.subr.bf16.mxu0 0
  %3569 = vmatpush1.bf16.msra.mxu0 %v3056
  %3570 = vmatprep.subr.bf16.mxu0 0
  %3571 = vmatpush1.bf16.msra.mxu0 %v3063
  %3572 = vmatprep.subr.bf16.mxu0 0
  %3573 = vmatpush1.bf16.msra.mxu0 %v3070
  %3574 = vmatprep.subr.bf16.mxu0 0
  %3575 = vmatpush1.bf16.msra.mxu0 %v3077
  %3576 = vmatprep.subr.bf16.mxu0 0
  %3577 = vmatpush1.bf16.msra.mxu0 %v3084
  %3578 = vmatprep.subr.bf16.mxu0 0
  %3579 = vmatpush1.bf16.msra.mxu0 %v3091
  %3580 = vmatprep.subr.bf16.mxu0 0
  %3581 = vmatpush1.bf16.msra.mxu0 %v3098
  %3582 = vmatprep.subr.bf16.mxu0 0
  %3583 = vmatpush1.bf16.msra.mxu0 0
  %3584 = vmatprep.subr.bf16.mxu0 0
  %3585 = vmatpush1.bf16.msra.mxu0 0
  %3586 = vmatprep.subr.bf16.mxu0 0
  %3587 = vmatpush1.bf16.msra.mxu0 0
  %3588 = vmatprep.subr.bf16.mxu0 0
  %3589 = vmatpush1.bf16.msra.mxu0 0
  %3590 = vmatprep.subr.bf16.mxu0 0
  %3591 = vmatpush1.bf16.msra.mxu0 0
  %3592 = vmatprep.subr.bf16.mxu0 0
  %3593 = vmatpush1.bf16.msra.mxu0 0
  %3594 = vmatprep.subr.bf16.mxu0 0
  %3595 = vmatpush1.bf16.msra.mxu0 0
  %3596 = vmatprep.subr.bf16.mxu0 0
  %3597 = vmatpush1.bf16.msra.mxu0 0
  %3598 = vmatprep.mubr.bf16.mxu0 0
  %3599 = vmatmul.mubr.bf16.gmra.mrb[0].mxu0 %v2173
  %v3600 = vpop.f32.mrb[0].mxu0
  %v3601 = vadd.f32 %v3560, %v3600
  %v3602 = vpop.f32.mrb[0].mxu0
  %v3603 = vpop.f32.mrb[0].mxu0
  %v3604 = vadd.f32 %v3563, %v3603
  %v3605 = vpop.f32.mrb[0].mxu0
  %3606 = vdwg.mxu0
  %v3607 = vsub.f32 0.0, %v3345
  %v3608 = vsub.f32 0.0, %v3347
  %v3609 = vsub.f32 0.0, %v3431
  %v3610 = vsub.f32 0.0, %v3433
  %v3611 = vsub.f32 0.0, %v3517
  %v3612 = vsub.f32 0.0, %v3519
  %v3613 = vsub.f32 0.0, %v3601
  %v3614 = vsub.f32 0.0, %v3349
  %v3615 = vsub.f32 0.0, %v3351
  %v3616 = vsub.f32 0.0, %v3435
  %v3617 = vsub.f32 0.0, %v3437
  %v3618 = vsub.f32 0.0, %v3521
  %v3619 = vsub.f32 0.0, %v3523
  %v3620 = vsub.f32 0.0, %v3604
  %v3621 = vmul.f32 %v3607, 1.442695
  %v3622 = vpow.pop %v3621
  %v3623 = vmul.f32 %v3608, 1.442695
  %v3624 = vpow.pop %v3623
  %v3625 = vmul.f32 %v3609, 1.442695
  %v3626 = vpow.pop %v3625
  %v3627 = vmul.f32 %v3610, 1.442695
  %v3628 = vpow.pop %v3627
  %v3629 = vmul.f32 %v3611, 1.442695
  %v3630 = vpow.pop %v3629
  %v3631 = vmul.f32 %v3612, 1.442695
  %v3632 = vpow.pop %v3631
  %v3633 = vmul.f32 %v3613, 1.442695
  %v3634 = vpow.pop %v3633
  %v3635 = vmul.f32 %v3614, 1.442695
  %v3636 = vpow.pop %v3635
  %v3637 = vmul.f32 %v3615, 1.442695
  %v3638 = vpow.pop %v3637
  %v3639 = vmul.f32 %v3616, 1.442695
  %v3640 = vpow.pop %v3639
  %v3641 = vmul.f32 %v3617, 1.442695
  %v3642 = vpow.pop %v3641
  %v3643 = vmul.f32 %v3618, 1.442695
  %v3644 = vpow.pop %v3643
  %v3645 = vmul.f32 %v3619, 1.442695
  %v3646 = vpow.pop %v3645
  %v3647 = vmul.f32 %v3620, 1.442695
  %v3648 = vpow.pop %v3647
  %v3649 = vadd.f32 %v3622, 1.0
  %v3650 = vadd.f32 %v3624, 1.0
  %v3651 = vadd.f32 %v3626, 1.0
  %v3652 = vadd.f32 %v3628, 1.0
  %v3653 = vadd.f32 %v3630, 1.0
  %v3654 = vadd.f32 %v3632, 1.0
  %v3655 = vadd.f32 %v3634, 1.0
  %v3656 = vadd.f32 %v3636, 1.0
  %v3657 = vadd.f32 %v3638, 1.0
  %v3658 = vadd.f32 %v3640, 1.0
  %v3659 = vadd.f32 %v3642, 1.0
  %v3660 = vadd.f32 %v3644, 1.0
  %v3661 = vadd.f32 %v3646, 1.0
  %v3662 = vadd.f32 %v3648, 1.0
  %v3663 = vrcp.pop %v3649
  %v3664 = vrcp.pop %v3650
  %v3665 = vrcp.pop %v3651
  %v3666 = vrcp.pop %v3652
  %v3667 = vrcp.pop %v3653
  %v3668 = vrcp.pop %v3654
  %v3669 = vrcp.pop %v3655
  %v3670 = vrcp.pop %v3656
  %v3671 = vrcp.pop %v3657
  %v3672 = vrcp.pop %v3658
  %v3673 = vrcp.pop %v3659
  %v3674 = vrcp.pop %v3660
  %v3675 = vrcp.pop %v3661
  %v3676 = vrcp.pop %v3662
  %3677 = vst [vmem:[%s14] sm:$0xff] %v3663
  %3678 = vst [vmem:[%s14 + $0x8] sm:$0xff] %v3664
  %3679 = vst [vmem:[%s14 + $0x10] sm:$0xff] %v3665
  %3680 = vst [vmem:[%s14 + $0x18] sm:$0xff] %v3666
  %3681 = vst [vmem:[%s14 + $0x20] sm:$0xff] %v3667
  %3682 = vst [vmem:[%s14 + $0x28] sm:$0xff] %v3668
  %3683 = vst.msk [vmem:[%s14 + $0x30] sm:$0xff] %vm1068, %v3669
  %3684 = vst [vmem:[%s14 + $0x38] sm:$0xff] %v3670
  %3685 = vst [vmem:[%s14 + $0x40] sm:$0xff] %v3671
  %3686 = vst [vmem:[%s14 + $0x48] sm:$0xff] %v3672
  %3687 = vst [vmem:[%s14 + $0x50] sm:$0xff] %v3673
  %3688 = vst [vmem:[%s14 + $0x58] sm:$0xff] %v3674
  %3689 = vst [vmem:[%s14 + $0x60] sm:$0xff] %v3675
  %3690 = vst.msk [vmem:[%s14 + $0x68] sm:$0xff] %vm1068, %v3676
  %3693 = vrot.lane.b32.xlu0 %v1839, 32
  %v3694 = vpop.permute.xlu0 %3693
  %3695 = vrot.lane.b32.xlu0 %v1840, 32
  %v3696 = vpop.permute.xlu0 %3695
  %vm3699 = vcmask 261120
  %v3700 = vsel %vm3699, %v1807, %v3694
  %v3701 = vsel %vm3699, %v1810, %v3696
  %vm3702 = vcmask 392192
  %v3703 = vsel %vm3702, %v3700, 0.0
  %v3704 = vsel %vm3702, %v3701, 0.0
  %3705 = vst [vmem:[%s15] sm:$0xff] %v3703
  %3706 = vst [vmem:[%s15 + $0x8] sm:$0xff] %v3704
  // Predicated region
  $region58: #{vae_forward.1} parent=0 // pred_check
    _
  $region59: #{vae_forward.1} parent=0 // pred_check_branch
    %3708 = sbr.rel (0) target = $region61
  $region60: #{vae_forward.1} parent=0 // pred_region
    _
  $region61: #{vae_forward.1} parent=0 // pred_fallthru
    _
  // Predicated region
  $region62: #{vae_forward.1} parent=0 // pred_check
    _
  $region63: #{vae_forward.1} parent=0 // pred_check_branch
    %3710 = sbr.rel (0) target = $region65
  $region64: #{vae_forward.1} parent=0 // pred_region
    _
  $region65: #{vae_forward.1} parent=0 // pred_fallthru
    _
  // Predicated region
  $region66: #{vae_forward.1} parent=0 // pred_check
    _
  $region67: #{vae_forward.1} parent=0 // pred_check_branch
    %3712 = sbr.rel (0) target = $region69
  $region68: #{vae_forward.1} parent=0 // pred_region
    _
  $region69: #{vae_forward.1} parent=0 // pred_fallthru
    _
  // Predicated region
  $region70: #{vae_forward.1} parent=0 // pred_check
    _
  $region71: #{vae_forward.1} parent=0 // pred_check_branch
    %3714 = sbr.rel (0) target = $region73
  $region72: #{vae_forward.1} parent=0 // pred_region
    _
  $region73: #{vae_forward.1} parent=0 // pred_fallthru
    _

</llo_original>
